<compile_context>
chip_gen: v7x
topology: tpu7x:2x2x1
jax: 0.10.0
libtpu: 0.0.40
codegen_flags: <defaults>
</compile_context>

<pallas_src>
import math
import jax
import jax.numpy as jnp
from jax.experimental import pallas as pl
from jax.experimental.pallas import tpu as pltpu

# ------------------------- synthetic config (mirrors LongLRM.__init__) -------------------------
PATCH_SIZE = 4
MERGE_LAYERS = []                                   # no token merging
PATCH_SIZE_OUT = PATCH_SIZE * 2 ** len(MERGE_LAYERS)
DIM = 32                                            # config.model.dim (int)
NUM_LAYERS = 2
NUM_HEADS = 4
NUM_GLOBAL_TOKENS = 2
SH_DEGREE = 0
SH_DIM = (SH_DEGREE + 1) ** 2
GAUSS_CH = 3 + SH_DIM * 3 + 3 + 4 + 1               # xyz, feature, scale, rotation, opacity = 14
SCALE_BIAS = -2.3
SCALE_MAX = -1.0
OPACITY_BIAS = -2.0
MAX_DIST = 500.0
INPUT_DIM = 9                                       # rgb(3) + cross(ray_o, ray_d)(3) + ray_d(3)
LN_EPS = 1e-5

ROW_TILE = 1024                                     # max rows per grid step for row-tiled kernels
VMEM_LIMIT_BYTES = 32 * 1024 * 1024                 # explicit scoped-VMEM budget (safe on all chips)
PARAM_DTYPE = jnp.bfloat16                          # matmul weights
ACT_DTYPE = jnp.bfloat16                            # activation storage


def _round8_up(n):
    return ((n + 7) // 8) * 8


def _row_tiling(m, tile=ROW_TILE):
    """Row tile that is a multiple of 8 (or the whole M) and, whenever possible, yields
    >=2 grid steps so both of v7x's TensorCores get work."""
    if m <= 8:
        return m, 1
    tm = min(tile, _round8_up((m + 1) // 2))
    return tm, pl.cdiv(m, tm)


def _cparams(n_parallel_axes):
    return pltpu.CompilerParams(
        dimension_semantics=("parallel",) * n_parallel_axes,
        vmem_limit_bytes=VMEM_LIMIT_BYTES)


def _ln_f32(x, gamma, beta):
    """LayerNorm in f32 (elementwise math stays f32 on all chips)."""
    mu = jnp.mean(x, axis=-1, keepdims=True)
    var = jnp.mean(jnp.square(x - mu), axis=-1, keepdims=True)
    return (x - mu) * jax.lax.rsqrt(var + LN_EPS) * gamma + beta


# ----------------------------------- Pallas kernels -----------------------------------
def linear_pallas(x, w, b):
    """Row-tiled y = x @ w + b.  x:(M,K) bf16, w:(K,N) bf16, b:(N,) f32 -> (M,N) bf16."""
    M, K = x.shape
    N = w.shape[1]
    TM, gm = _row_tiling(M)

    def kern(x_ref, w_ref, b_ref, o_ref):
        y = jnp.dot(x_ref[...], w_ref[...], preferred_element_type=jnp.float32)
        o_ref[...] = (y + b_ref[...]).astype(o_ref.dtype)

    return pl.pallas_call(
        kern,
        out_shape=jax.ShapeDtypeStruct((M, N), ACT_DTYPE),
        grid=(gm,),
        in_specs=[pl.BlockSpec((TM, K), lambda i: (i, 0)),
                  pl.BlockSpec((K, N), lambda i: (0, 0)),
                  pl.BlockSpec((1, N), lambda i: (0, 0))],
        out_specs=pl.BlockSpec((TM, N), lambda i: (i, 0)),
        compiler_params=_cparams(1),
    )(x, w, b.reshape(1, N))


def transformer_block_pallas(x, blk, num_heads):
    """One fused pre-LN transformer block (per-batch grid):
       LN1 + QKV -> per-head softmax attention -> out-proj + residual ->
       LN2 + FC1 + GELU + FC2 + residual.   x: (B, L, D) bf16."""
    B, L, D = x.shape
    dh = D // num_heads
    Hd = blk["fc1_w"].shape[1]
    scale = 1.0 / math.sqrt(dh)

    def kern(x_ref, g1_ref, b1_ref, wqkv_ref, bqkv_ref, wp_ref, bp_ref,
             g2_ref, b2_ref, w1_ref, bb1_ref, w2_ref, bb2_ref, o_ref):
        xb = x_ref[0].astype(jnp.float32)                               # (L, D)
        h = _ln_f32(xb, g1_ref[...], b1_ref[...])
        qkv = jnp.dot(h.astype(ACT_DTYPE), wqkv_ref[...],
                      preferred_element_type=jnp.float32) + bqkv_ref[...]   # (L, 3D) f32

        acc = jnp.zeros((L, D), jnp.float32)
        for hd in range(num_heads):
            q = qkv[:, hd * dh:(hd + 1) * dh]
            k = qkv[:, D + hd * dh:D + (hd + 1) * dh]
            v = qkv[:, 2 * D + hd * dh:2 * D + (hd + 1) * dh]
            s = jax.lax.dot_general(q, k, (((1,), (1,)), ((), ())),
                                    preferred_element_type=jnp.float32) * scale
            s = s - jnp.max(s, axis=-1, keepdims=True)
            p = jnp.exp(s)                                              # unnormalized
            o_h = jnp.dot(p, v, preferred_element_type=jnp.float32)
            o_h = o_h / jnp.sum(p, axis=-1, keepdims=True)              # exact, on (L,dh)
            acc = acc + jnp.dot(o_h.astype(ACT_DTYPE),
                                wp_ref[hd * dh:(hd + 1) * dh, :],
                                preferred_element_type=jnp.float32)
        x1 = xb + acc + bp_ref[...]

        h2 = _ln_f32(x1, g2_ref[...], b2_ref[...])
        h1 = jax.nn.gelu(jnp.dot(h2.astype(ACT_DTYPE), w1_ref[...],
                                 preferred_element_type=jnp.float32) + bb1_ref[...])
        y = jnp.dot(h1.astype(ACT_DTYPE), w2_ref[...],
                    preferred_element_type=jnp.float32) + bb2_ref[...]
        o_ref[0] = (x1 + y).astype(o_ref.dtype)

    cost = pl.CostEstimate(
        flops=int(B * (2 * L * D * 3 * D + 4 * L * L * D + 2 * L * D * D
                       + 2 * L * D * Hd + 2 * L * Hd * D)),
        transcendentals=int(B * (num_heads * L * L + L * Hd)),
        bytes_accessed=int(2 * (2 * B * L * D + D * 3 * D + D * D + 2 * D * Hd)
                           + 4 * (6 * D + 3 * D + Hd)))

    vec = lambda a: a.reshape(1, -1)
    return pl.pallas_call(
        kern,
        out_shape=jax.ShapeDtypeStruct((B, L, D), ACT_DTYPE),
        grid=(B,),
        in_specs=[pl.BlockSpec((1, L, D), lambda b: (b, 0, 0)),
                  pl.BlockSpec((1, D), lambda b: (0, 0)),
                  pl.BlockSpec((1, D), lambda b: (0, 0)),
                  pl.BlockSpec((D, 3 * D), lambda b: (0, 0)),
                  pl.BlockSpec((1, 3 * D), lambda b: (0, 0)),
                  pl.BlockSpec((D, D), lambda b: (0, 0)),
                  pl.BlockSpec((1, D), lambda b: (0, 0)),
                  pl.BlockSpec((1, D), lambda b: (0, 0)),
                  pl.BlockSpec((1, D), lambda b: (0, 0)),
                  pl.BlockSpec((D, Hd), lambda b: (0, 0)),
                  pl.BlockSpec((1, Hd), lambda b: (0, 0)),
                  pl.BlockSpec((Hd, D), lambda b: (0, 0)),
                  pl.BlockSpec((1, D), lambda b: (0, 0))],
        out_specs=pl.BlockSpec((1, L, D), lambda b: (b, 0, 0)),
        compiler_params=_cparams(1),
        cost_estimate=cost,
    )(x,
      vec(blk["ln1_g"]), vec(blk["ln1_b"]),
      blk["qkv_w"], vec(blk["qkv_b"]),
      blk["proj_w"], vec(blk["proj_b"]),
      vec(blk["ln2_g"]), vec(blk["ln2_b"]),
      blk["fc1_w"], vec(blk["fc1_b"]),
      blk["fc2_w"], vec(blk["fc2_b"]))


def decoder_gaussian_pallas(x, gamma, beta, w_pad, rd48, ro48,
                            mean_mat, expand_mat, scatter_mat,
                            add_bias, clamp_max, xyz_mask):
    """Fused tokenDecoder (LN + bias-free linear) + gaussian-head epilogue.

    Works on the packed (tokens, pad128(ps^2*GAUSS_CH)) layout (lane-dense stores):
      non-xyz channels: min(g + add_bias, clamp_max)    (scale bias/clamp, opacity bias)
      xyz channels    : sigmoid(mean(xyz)) * MAX_DIST * ray_d + ray_o
    Rays arrive packed as (M, 3*P) and are expanded/scattered to the channel layout
    inside the kernel with tiny constant matmuls (no zero-padded ray DMAs)."""
    M, D = x.shape
    OUTP = w_pad.shape[1]
    P = mean_mat.shape[1]
    C3P = rd48.shape[1]
    TM, gm = _row_tiling(M)

    def kern(x_ref, g_ref, be_ref, w_ref, rd_ref, ro_ref, mm_ref, ex_ref,
             sc_ref, ab_ref, cm_ref, mk_ref, o_ref):
        h = _ln_f32(x_ref[...].astype(jnp.float32), g_ref[...], be_ref[...])
        gs = jnp.dot(h.astype(ACT_DTYPE), w_ref[...],
                     preferred_element_type=jnp.float32)                       # (TM, OUTP)
        other = jnp.minimum(gs + ab_ref[...], cm_ref[...])
        dist = jax.nn.sigmoid(
            jnp.dot(gs, mm_ref[...], preferred_element_type=jnp.float32)) * MAX_DIST  # (TM, P)
        dist48 = jnp.dot(dist, ex_ref[...], preferred_element_type=jnp.float32)       # (TM, 3P)
        xyz48 = dist48 * rd_ref[...] + ro_ref[...]
        xyz_full = jnp.dot(xyz48, sc_ref[...], preferred_element_type=jnp.float32)    # (TM, OUTP)
        m = mk_ref[...]
        o_ref[...] = (m * xyz_full + (1.0 - m) * other).astype(o_ref.dtype)

    cost = pl.CostEstimate(
        flops=int(2 * M * D * OUTP + 2 * M * OUTP * P + 2 * M * P * C3P
                  + 2 * M * C3P * OUTP + 8 * M * OUTP),
        transcendentals=int(M * P),
        bytes_accessed=int(2 * M * D + 2 * D * OUTP
                           + 4 * (2 * M * C3P + M * OUTP)
                           + 4 * (2 * OUTP * P + P * C3P + C3P * OUTP + 3 * OUTP)))

    return pl.pallas_call(
        kern,
        out_shape=jax.ShapeDtypeStruct((M, OUTP), jnp.float32),
        grid=(gm,),
        in_specs=[pl.BlockSpec((TM, D), lambda i: (i, 0)),
                  pl.BlockSpec((1, D), lambda i: (0, 0)),
                  pl.BlockSpec((1, D), lambda i: (0, 0)),
                  pl.BlockSpec((D, OUTP), lambda i: (0, 0)),
                  pl.BlockSpec((TM, C3P), lambda i: (i, 0)),
                  pl.BlockSpec((TM, C3P), lambda i: (i, 0)),
                  pl.BlockSpec((OUTP, P), lambda i: (0, 0)),
                  pl.BlockSpec((P, C3P), lambda i: (0, 0)),
                  pl.BlockSpec((C3P, OUTP), lambda i: (0, 0)),
                  pl.BlockSpec((1, OUTP), lambda i: (0, 0)),
                  pl.BlockSpec((1, OUTP), lambda i: (0, 0)),
                  pl.BlockSpec((1, OUTP), lambda i: (0, 0))],
        out_specs=pl.BlockSpec((TM, OUTP), lambda i: (i, 0)),
        compiler_params=_cparams(1),
        cost_estimate=cost,
    )(x, gamma.reshape(1, D), beta.reshape(1, D), w_pad, rd48, ro48,
      mean_mat, expand_mat, scatter_mat,
      add_bias.reshape(1, OUTP), clamp_max.reshape(1, OUTP), xyz_mask.reshape(1, OUTP))


# ----------------------------------- model: JAX glue + Pallas -----------------------------------
def longlrm_forward(params, input_images, input_intr, input_c2ws):
    """
    input_images: (B, V, 3, H, W)
    input_intr  : (B, V, 4)  (fx, fy, cx, cy)
    input_c2ws  : (B, V, 4, 4)
    Returns gaussian dict (test_c2ws is None path).
    """
    B, V, _, H, W = input_images.shape
    dtype = jnp.float32

    # --- ray / Pluecker embedding (plain JAX glue) ---
    ray_o = jnp.broadcast_to(input_c2ws[:, :, :3, 3][:, :, None, :], (B, V, H * W, 3))
    xg, yg = jnp.meshgrid(jnp.arange(W), jnp.arange(H), indexing="xy")           # (H, W)
    x = (xg.astype(dtype) + 0.5).reshape(1, 1, -1)
    y = (yg.astype(dtype) + 0.5).reshape(1, 1, -1)
    x = (x - input_intr[:, :, 2:3]) / input_intr[:, :, 0:1]
    y = (y - input_intr[:, :, 3:4]) / input_intr[:, :, 1:2]
    ray_d = jnp.stack([x, y, jnp.ones_like(x)], axis=-1)
    ray_d = ray_d / jnp.linalg.norm(ray_d, axis=-1, keepdims=True)
    ray_d = ray_d @ jnp.swapaxes(input_c2ws[:, :, :3, :3], -1, -2)               # (B, V, HW, 3)

    img_flat = input_images.reshape(B, V, 3, -1).transpose(0, 1, 3, 2)           # (B, V, HW, 3)
    cam = jnp.concatenate([img_flat, jnp.cross(ray_o, ray_d), ray_d], axis=-1)   # (B, V, HW, 9)

    # rearrange 'b v (hh ph ww pw) d -> b (v hh ww) (ph pw d)'
    ps = PATCH_SIZE
    hh, ww = H // ps, W // ps
    ntok = V * hh * ww
    cam = cam.reshape(B, V, hh, ps, ww, ps, INPUT_DIM)
    cam = cam.transpose(0, 1, 2, 4, 3, 5, 6).reshape(B * ntok, ps * ps * INPUT_DIM)

    # --- tokenizer (row-tiled Pallas linear, bf16) ---
    image_tokens = linear_pallas(cam.astype(ACT_DTYPE),
                                 params["tok_w"], params["tok_b"]).reshape(B, ntok, DIM)
    global_tokens = jnp.broadcast_to(params["global_token"].astype(ACT_DTYPE),
                                     (B, NUM_GLOBAL_TOKENS, DIM))
    tokens = jnp.concatenate([global_tokens, image_tokens], axis=1)              # (B, L, D) bf16

    # --- processor (one fused Pallas call per transformer block, no merge layers) ---
    for blk in params["blocks"]:
        tokens = transformer_block_pallas(tokens, blk, NUM_HEADS)

    # --- token decoder + gaussian head, fused in one Pallas kernel ---
    ps_o = PATCH_SIZE_OUT
    P = ps_o * ps_o
    OUT = GAUSS_CH * P
    OUTP = ((OUT + 127) // 128) * 128          # lane-dense padded output width (224 -> 256)
    pad = OUTP - OUT
    image_tokens = tokens[:, NUM_GLOBAL_TOKENS:]
    Mdec = B * ntok

    # rays in token-major pixel order, packed (pixel, xyz) = 3*P lanes per token
    # TODO(synk): with merge layers (ps_o != ps) hh/ww and this ray packing must be re-derived.
    def to_token_order(r):                      # (B, V, HW, 3) -> (Mdec, 3*P)
        r = r.reshape(B, V, hh, ps_o, ww, ps_o, 3)
        return r.transpose(0, 1, 2, 4, 3, 5, 6).reshape(Mdec, P * 3)

    rd48 = to_token_order(ray_d)
    ro48 = to_token_order(ray_o)

    # per-channel bias / clamp / mask vectors, padded to OUTP
    ch = jnp.arange(GAUSS_CH)
    is_xyz = ch < 3
    is_scale = (ch >= 3 + 3 * SH_DIM) & (ch < 6 + 3 * SH_DIM)
    is_op = ch == 10 + 3 * SH_DIM
    add_bias = jnp.pad(jnp.tile(jnp.where(is_scale, SCALE_BIAS, 0.0)
                                + jnp.where(is_op, OPACITY_BIAS, 0.0), P), (0, pad))
    clamp_max = jnp.pad(jnp.tile(jnp.where(is_scale, SCALE_MAX, 1e30), P), (0, pad),
                        constant_values=1e30)
    xyz_mask = jnp.pad(jnp.tile(is_xyz.astype(jnp.float32), P), (0, pad))

    # constant xyz mean / expand / scatter matrices (tiny)
    idx = jnp.arange(OUTP)
    pix_idx = idx // GAUSS_CH
    ch_idx = idx % GAUSS_CH
    valid = idx < OUT
    col_p = jnp.arange(P)
    mean_mat = (valid[:, None] & (pix_idx[:, None] == col_p[None, :])
                & (ch_idx[:, None] < 3)).astype(jnp.float32) / 3.0               # (OUTP, P)
    idx48 = jnp.arange(3 * P)
    expand_mat = (col_p[:, None] == idx48[None, :] // 3).astype(jnp.float32)     # (P, 3P)
    scatter_mat = ((pix_idx[None, :] == idx48[:, None] // 3)
                   & (ch_idx[None, :] == idx48[:, None] % 3)
                   & valid[None, :]).astype(jnp.float32)                         # (3P, OUTP)

    dec_w = jnp.pad(params["dec_w"], ((0, 0), (0, pad)))                         # (D, OUTP) bf16

    g_packed = decoder_gaussian_pallas(
        image_tokens.reshape(Mdec, DIM), params["dec_ln_g"], params["dec_ln_b"],
        dec_w, rd48, ro48, mean_mat, expand_mat, scatter_mat,
        add_bias, clamp_max, xyz_mask)[:, :OUT]                                  # (Mdec, OUT) f32

    # rearrange 'b (v hh ww) (ph pw d) -> b (v hh ph ww pw) d' and split channels
    g = g_packed.reshape(B, V, hh, ww, ps_o, ps_o, GAUSS_CH)
    g = g.transpose(0, 1, 2, 4, 3, 5, 6).reshape(B, V * H * W, GAUSS_CH)

    xyz = g[..., 0:3]
    feature = g[..., 3:3 + 3 * SH_DIM].reshape(B, V * H * W, SH_DIM, 3)
    scale = g[..., 3 + 3 * SH_DIM:6 + 3 * SH_DIM]
    rotation = g[..., 6 + 3 * SH_DIM:10 + 3 * SH_DIM]
    opacity = g[..., 10 + 3 * SH_DIM:11 + 3 * SH_DIM]

    return {"xyz": xyz, "feature": feature, "scale": scale,
            "rotation": rotation, "opacity": opacity}


# ----------------------------------- deterministic parameter init -----------------------------------
def init_params(key):
    ks = jax.random.split(key, 3 + NUM_LAYERS)

    def lin(k, fan_in, fan_out):
        w = (jax.random.normal(k, (fan_in, fan_out), jnp.float32) * 0.02).astype(PARAM_DTYPE)
        return w, jnp.zeros((fan_out,), jnp.float32)

    params = {}
    params["global_token"] = jax.random.normal(ks[0], (1, NUM_GLOBAL_TOKENS, DIM), jnp.float32)
    params["tok_w"], params["tok_b"] = lin(ks[1], INPUT_DIM * PATCH_SIZE ** 2, DIM)

    blocks = []
    for i in range(NUM_LAYERS):
        kb = jax.random.split(ks[2 + i], 4)
        blk = {"ln1_g": jnp.ones((DIM,), jnp.float32), "ln1_b": jnp.zeros((DIM,), jnp.float32),
               "ln2_g": jnp.ones((DIM,), jnp.float32), "ln2_b": jnp.zeros((DIM,), jnp.float32)}
        blk["qkv_w"], blk["qkv_b"] = lin(kb[0], DIM, 3 * DIM)
        blk["proj_w"], blk["proj_b"] = lin(kb[1], DIM, DIM)
        blk["fc1_w"], blk["fc1_b"] = lin(kb[2], DIM, 4 * DIM)
        blk["fc2_w"], blk["fc2_b"] = lin(kb[3], 4 * DIM, DIM)
        blocks.append(blk)
    params["blocks"] = blocks

    params["dec_ln_g"] = jnp.ones((DIM,), jnp.float32)
    params["dec_ln_b"] = jnp.zeros((DIM,), jnp.float32)
    out_ch = GAUSS_CH * PATCH_SIZE_OUT ** 2
    params["dec_w"], _ = lin(ks[2 + NUM_LAYERS], DIM, out_ch)   # tokenDecoder linear: bias=False
    return params


# ----------------------------------- main -----------------------------------
if __name__ == "__main__":
    key = jax.random.PRNGKey(0)
    kp, ki, kc = jax.random.split(key, 3)
    params = init_params(kp)

    B, V, H, W = 2, 2, 16, 16
    input_images = jax.random.uniform(ki, (B, V, 3, H, W), jnp.float32)
    fx = jnp.full((B, V), float(W), jnp.float32)
    fy = jnp.full((B, V), float(H), jnp.float32)
    cx = jnp.full((B, V), W / 2.0, jnp.float32)
    cy = jnp.full((B, V), H / 2.0, jnp.float32)
    input_intr = jnp.stack([fx, fy, cx, cy], axis=-1)            # (B, V, 4)
    trans = jax.random.normal(kc, (B, V, 3), jnp.float32)
    input_c2ws = jnp.broadcast_to(jnp.eye(4, dtype=jnp.float32), (B, V, 4, 4))
    input_c2ws = input_c2ws.at[:, :, :3, 3].set(trans)           # identity rotation + translation

    fwd = jax.jit(longlrm_forward)
    gaussians = fwd(params, input_images, input_intr, input_c2ws)
    gaussians = jax.block_until_ready(gaussians)

    N = V * H * W
    assert gaussians["xyz"].shape == (B, N, 3)
    assert gaussians["feature"].shape == (B, N, SH_DIM, 3)
    assert gaussians["scale"].shape == (B, N, 3)
    assert gaussians["rotation"].shape == (B, N, 4)
    assert gaussians["opacity"].shape == (B, N, 1)
    assert bool(jnp.all(gaussians["scale"] <= SCALE_MAX))
    assert all(bool(jnp.all(jnp.isfinite(v))) for v in jax.tree_util.tree_leaves(gaussians))
    print("KERNEL_OK")
</pallas_src>

<mosaic_0001>
module attributes {stable_mosaic.version = 11 : i64} {
  func.func @kern(%arg0: i32, %arg1: memref<32x144xbf16, #tpu.memory_space<vmem>>, %arg2: memref<144x32xbf16, #tpu.memory_space<vmem>>, %arg3: memref<1x32xf32, #tpu.memory_space<vmem>>, %arg4: memref<32x32xbf16, #tpu.memory_space<vmem>>) attributes {dimension_semantics = [#tpu.dimension_semantics<parallel>], iteration_bounds = array<i64: 2>, scalar_prefetch = 0 : i64, scratch_operands = 0 : i64, tpu.core_type = #tpu.core_type<tc>, window_params = [{transform_indices = @transform_0, window_bounds = array<i64: 32, 144>}, {pipeline_mode = #tpu.pipeline_mode<synchronous>, transform_indices = @transform_1, window_bounds = array<i64: 144, 32>}, {pipeline_mode = #tpu.pipeline_mode<synchronous>, transform_indices = @transform_2, window_bounds = array<i64: 1, 32>}, {transform_indices = @transform_3, window_bounds = array<i64: 32, 32>}]} {
    %c0 = arith.constant 0 : index
    %c0_0 = arith.constant 0 : index
    %0 = vector.load %arg1[%c0, %c0_0] : memref<32x144xbf16, #tpu.memory_space<vmem>>, vector<32x144xbf16>
    %c0_1 = arith.constant 0 : index
    %c0_2 = arith.constant 0 : index
    %1 = vector.load %arg2[%c0_1, %c0_2] : memref<144x32xbf16, #tpu.memory_space<vmem>>, vector<144x32xbf16>
    %cst = arith.constant dense<0.000000e+00> : vector<32x32xf32>
    %2 = tpu.matmul %0, %1, %cst {dimension_numbers = #tpu.dot_dimension_numbers<[1], [0], [0], [1], [0, 0, 1, 1], [], []>} : vector<32x144xbf16>, vector<144x32xbf16>, vector<32x32xf32> -> vector<32x32xf32>
    %c0_3 = arith.constant 0 : index
    %c0_4 = arith.constant 0 : index
    %3 = vector.load %arg3[%c0_3, %c0_4] : memref<1x32xf32, #tpu.memory_space<vmem>>, vector<1x32xf32>
    %4 = vector.broadcast %3 : vector<1x32xf32> to vector<32x32xf32>
    %5 = arith.addf %2, %4 : vector<32x32xf32>
    %6 = arith.truncf %5 : vector<32x32xf32> to vector<32x32xbf16>
    %c0_5 = arith.constant 0 : index
    %c0_6 = arith.constant 0 : index
    %7 = vector.load %arg4[%c0_5, %c0_6] : memref<32x32xbf16, #tpu.memory_space<vmem>>, vector<32x32xbf16>
    tpu.vector_store %arg4[%c0_5, %c0_6], %6 {strides = array<i32>} : memref<32x32xbf16, #tpu.memory_space<vmem>>, vector<32x32xbf16>,
    return
  }
  func.func @transform_0(%arg0: i32) -> (i32, i32) {
    %c0_i32 = arith.constant 0 : i32
    %c0_i32_0 = arith.constant 0 : i32
    return %arg0, %c0_i32 : i32, i32
  }
  func.func @transform_1(%arg0: i32) -> (i32, i32) {
    %c0_i32 = arith.constant 0 : i32
    %c0_i32_0 = arith.constant 0 : i32
    %c0_i32_1 = arith.constant 0 : i32
    return %c0_i32, %c0_i32_0 : i32, i32
  }
  func.func @transform_2(%arg0: i32) -> (i32, i32) {
    %c0_i32 = arith.constant 0 : i32
    %c0_i32_0 = arith.constant 0 : i32
    %c0_i32_1 = arith.constant 0 : i32
    return %c0_i32, %c0_i32_0 : i32, i32
  }
  func.func @transform_3(%arg0: i32) -> (i32, i32) {
    %c0_i32 = arith.constant 0 : i32
    %c0_i32_0 = arith.constant 0 : i32
    return %arg0, %c0_i32 : i32, i32
  }
}

module attributes {stable_mosaic.version = 11 : i64} {
  func.func @kern(%arg0: i32, %arg1: memref<1x34x32xbf16, #tpu.memory_space<vmem>>, %arg2: memref<1x32xf32, #tpu.memory_space<vmem>>, %arg3: memref<1x32xf32, #tpu.memory_space<vmem>>, %arg4: memref<32x96xbf16, #tpu.memory_space<vmem>>, %arg5: memref<1x96xf32, #tpu.memory_space<vmem>>, %arg6: memref<32x32xbf16, #tpu.memory_space<vmem>>, %arg7: memref<1x32xf32, #tpu.memory_space<vmem>>, %arg8: memref<1x32xf32, #tpu.memory_space<vmem>>, %arg9: memref<1x32xf32, #tpu.memory_space<vmem>>, %arg10: memref<32x128xbf16, #tpu.memory_space<vmem>>, %arg11: memref<1x128xf32, #tpu.memory_space<vmem>>, %arg12: memref<128x32xbf16, #tpu.memory_space<vmem>>, %arg13: memref<1x32xf32, #tpu.memory_space<vmem>>, %arg14: memref<1x34x32xbf16, #tpu.memory_space<vmem>>) attributes {dimension_semantics = [#tpu.dimension_semantics<parallel>], iteration_bounds = array<i64: 2>, scalar_prefetch = 0 : i64, scratch_operands = 0 : i64, tpu.core_type = #tpu.core_type<tc>, window_params = [{transform_indices = @transform_0, window_bounds = array<i64: 1, 34, 32>}, {pipeline_mode = #tpu.pipeline_mode<synchronous>, transform_indices = @transform_1, window_bounds = array<i64: 1, 32>}, {pipeline_mode = #tpu.pipeline_mode<synchronous>, transform_indices = @transform_2, window_bounds = array<i64: 1, 32>}, {pipeline_mode = #tpu.pipeline_mode<synchronous>, transform_indices = @transform_3, window_bounds = array<i64: 32, 96>}, {pipeline_mode = #tpu.pipeline_mode<synchronous>, transform_indices = @transform_4, window_bounds = array<i64: 1, 96>}, {pipeline_mode = #tpu.pipeline_mode<synchronous>, transform_indices = @transform_5, window_bounds = array<i64: 32, 32>}, {pipeline_mode = #tpu.pipeline_mode<synchronous>, transform_indices = @transform_6, window_bounds = array<i64: 1, 32>}, {pipeline_mode = #tpu.pipeline_mode<synchronous>, transform_indices = @transform_7, window_bounds = array<i64: 1, 32>}, {pipeline_mode = #tpu.pipeline_mode<synchronous>, transform_indices = @transform_8, window_bounds = array<i64: 1, 32>}, {pipeline_mode = #tpu.pipeline_mode<synchronous>, transform_indices = @transform_9, window_bounds = array<i64: 32, 128>}, {pipeline_mode = #tpu.pipeline_mode<synchronous>, transform_indices = @transform_10, window_bounds = array<i64: 1, 128>}, {pipeline_mode = #tpu.pipeline_mode<synchronous>, transform_indices = @transform_11, window_bounds = array<i64: 128, 32>}, {pipeline_mode = #tpu.pipeline_mode<synchronous>, transform_indices = @transform_12, window_bounds = array<i64: 1, 32>}, {transform_indices = @transform_13, window_bounds = array<i64: 1, 34, 32>}]} {
    %c0 = arith.constant 0 : index
    %c0_0 = arith.constant 0 : index
    %c0_1 = arith.constant 0 : index
    %0 = vector.load %arg1[%c0, %c0_0, %c0_1] : memref<1x34x32xbf16, #tpu.memory_space<vmem>>, vector<1x34x32xbf16>
    %1 = vector.shape_cast %0 : vector<1x34x32xbf16> to vector<34x32xbf16>
    %2 = arith.extf %1 : vector<34x32xbf16> to vector<34x32xf32>
    %c0_2 = arith.constant 0 : index
    %c0_3 = arith.constant 0 : index
    %3 = vector.load %arg2[%c0_2, %c0_3] : memref<1x32xf32, #tpu.memory_space<vmem>>, vector<1x32xf32>
    %c0_4 = arith.constant 0 : index
    %c0_5 = arith.constant 0 : index
    %4 = vector.load %arg3[%c0_4, %c0_5] : memref<1x32xf32, #tpu.memory_space<vmem>>, vector<1x32xf32>
    %cst = arith.constant dense<0.000000e+00> : vector<34xf32>
    %5 = vector.multi_reduction <add>, %2, %cst [1] : vector<34x32xf32> to vector<34xf32>
    %6 = vector.shape_cast %5 : vector<34xf32> to vector<34x1xf32>
    %cst_6 = arith.constant 3.200000e+01 : f32
    %7 = vector.broadcast %cst_6 : f32 to vector<34x1xf32>
    %8 = arith.divf %6, %7 : vector<34x1xf32>
    %9 = vector.broadcast %8 : vector<34x1xf32> to vector<34x32xf32>
    %10 = arith.subf %2, %9 : vector<34x32xf32>
    %11 = arith.mulf %10, %10 : vector<34x32xf32>
    %cst_7 = arith.constant dense<0.000000e+00> : vector<34xf32>
    %12 = vector.multi_reduction <add>, %11, %cst_7 [1] : vector<34x32xf32> to vector<34xf32>
    %13 = vector.shape_cast %12 : vector<34xf32> to vector<34x1xf32>
    %cst_8 = arith.constant 3.200000e+01 : f32
    %14 = vector.broadcast %cst_8 : f32 to vector<34x1xf32>
    %15 = arith.divf %13, %14 : vector<34x1xf32>
    %16 = vector.broadcast %8 : vector<34x1xf32> to vector<34x32xf32>
    %17 = arith.subf %2, %16 : vector<34x32xf32>
    %cst_9 = arith.constant 9.99999974E-6 : f32
    %18 = vector.broadcast %cst_9 : f32 to vector<34x1xf32>
    %19 = arith.addf %15, %18 : vector<34x1xf32>
    %20 = math.rsqrt %19 : vector<34x1xf32>
    %21 = vector.broadcast %20 : vector<34x1xf32> to vector<34x32xf32>
    %22 = arith.mulf %17, %21 : vector<34x32xf32>
    %23 = vector.broadcast %3 : vector<1x32xf32> to vector<34x32xf32>
    %24 = arith.mulf %22, %23 : vector<34x32xf32>
    %25 = vector.broadcast %4 : vector<1x32xf32> to vector<34x32xf32>
    %26 = arith.addf %24, %25 : vector<34x32xf32>
    %27 = arith.truncf %26 : vector<34x32xf32> to vector<34x32xbf16>
    %c0_10 = arith.constant 0 : index
    %c0_11 = arith.constant 0 : index
    %28 = vector.load %arg4[%c0_10, %c0_11] : memref<32x96xbf16, #tpu.memory_space<vmem>>, vector<32x96xbf16>
    %cst_12 = arith.constant dense<0.000000e+00> : vector<34x96xf32>
    %29 = tpu.matmul %27, %28, %cst_12 {dimension_numbers = #tpu.dot_dimension_numbers<[1], [0], [0], [1], [0, 0, 1, 1], [], []>} : vector<34x32xbf16>, vector<32x96xbf16>, vector<34x96xf32> -> vector<34x96xf32>
    %c0_13 = arith.constant 0 : index
    %c0_14 = arith.constant 0 : index
    %30 = vector.load %arg5[%c0_13, %c0_14] : memref<1x96xf32, #tpu.memory_space<vmem>>, vector<1x96xf32>
    %31 = vector.broadcast %30 : vector<1x96xf32> to vector<34x96xf32>
    %32 = arith.addf %29, %31 : vector<34x96xf32>
    %cst_15 = arith.constant 0.000000e+00 : f32
    %33 = vector.broadcast %cst_15 : f32 to vector<34x32xf32>
    %34 = vector.extract_strided_slice %32 {offsets = [0, 0], sizes = [34, 8], strides = [1, 1]} : vector<34x96xf32> to vector<34x8xf32>
    %35 = vector.extract_strided_slice %32 {offsets = [0, 32], sizes = [34, 8], strides = [1, 1]} : vector<34x96xf32> to vector<34x8xf32>
    %36 = vector.extract_strided_slice %32 {offsets = [0, 64], sizes = [34, 8], strides = [1, 1]} : vector<34x96xf32> to vector<34x8xf32>
    %cst_16 = arith.constant dense<0.000000e+00> : vector<34x34xf32>
    %37 = tpu.matmul %34, %35, %cst_16 {dimension_numbers = #tpu.dot_dimension_numbers<[1], [1], [0], [0], [0, 0, 1, 0], [], []>} : vector<34x8xf32>, vector<34x8xf32>, vector<34x34xf32> -> vector<34x34xf32>
    %cst_17 = arith.constant 0.353553385 : f32
    %38 = vector.broadcast %cst_17 : f32 to vector<34x34xf32>
    %39 = arith.mulf %37, %38 : vector<34x34xf32>
    %cst_18 = arith.constant dense<0xFF800000> : vector<34xf32>
    %40 = vector.multi_reduction <maximumf>, %39, %cst_18 [1] : vector<34x34xf32> to vector<34xf32>
    %41 = vector.shape_cast %40 : vector<34xf32> to vector<34x1xf32>
    %42 = vector.broadcast %41 : vector<34x1xf32> to vector<34x34xf32>
    %43 = arith.subf %39, %42 : vector<34x34xf32>
    %44 = math.exp %43 : vector<34x34xf32>
    %cst_19 = arith.constant dense<0.000000e+00> : vector<34x8xf32>
    %45 = tpu.matmul %44, %36, %cst_19 {dimension_numbers = #tpu.dot_dimension_numbers<[1], [0], [0], [1], [0, 0, 1, 1], [], []>} : vector<34x34xf32>, vector<34x8xf32>, vector<34x8xf32> -> vector<34x8xf32>
    %cst_20 = arith.constant dense<0.000000e+00> : vector<34xf32>
    %46 = vector.multi_reduction <add>, %44, %cst_20 [1] : vector<34x34xf32> to vector<34xf32>
    %47 = vector.shape_cast %46 : vector<34xf32> to vector<34x1xf32>
    %48 = vector.broadcast %47 : vector<34x1xf32> to vector<34x8xf32>
    %49 = arith.divf %45, %48 : vector<34x8xf32>
    %50 = arith.truncf %49 : vector<34x8xf32> to vector<34x8xbf16>
    %c0_21 = arith.constant 0 : index
    %c0_22 = arith.constant 0 : index
    %51 = vector.load %arg6[%c0_21, %c0_22] : memref<32x32xbf16, #tpu.memory_space<vmem>>, vector<8x32xbf16>
    %cst_23 = arith.constant dense<0.000000e+00> : vector<34x32xf32>
    %52 = tpu.matmul %50, %51, %cst_23 {dimension_numbers = #tpu.dot_dimension_numbers<[1], [0], [0], [1], [0, 0, 1, 1], [], []>} : vector<34x8xbf16>, vector<8x32xbf16>, vector<34x32xf32> -> vector<34x32xf32>
    %53 = arith.addf %33, %52 : vector<34x32xf32>
    %54 = vector.extract_strided_slice %32 {offsets = [0, 8], sizes = [34, 8], strides = [1, 1]} : vector<34x96xf32> to vector<34x8xf32>
    %55 = vector.extract_strided_slice %32 {offsets = [0, 40], sizes = [34, 8], strides = [1, 1]} : vector<34x96xf32> to vector<34x8xf32>
    %56 = vector.extract_strided_slice %32 {offsets = [0, 72], sizes = [34, 8], strides = [1, 1]} : vector<34x96xf32> to vector<34x8xf32>
    %cst_24 = arith.constant dense<0.000000e+00> : vector<34x34xf32>
    %57 = tpu.matmul %54, %55, %cst_24 {dimension_numbers = #tpu.dot_dimension_numbers<[1], [1], [0], [0], [0, 0, 1, 0], [], []>} : vector<34x8xf32>, vector<34x8xf32>, vector<34x34xf32> -> vector<34x34xf32>
    %cst_25 = arith.constant 0.353553385 : f32
    %58 = vector.broadcast %cst_25 : f32 to vector<34x34xf32>
    %59 = arith.mulf %57, %58 : vector<34x34xf32>
    %cst_26 = arith.constant dense<0xFF800000> : vector<34xf32>
    %60 = vector.multi_reduction <maximumf>, %59, %cst_26 [1] : vector<34x34xf32> to vector<34xf32>
    %61 = vector.shape_cast %60 : vector<34xf32> to vector<34x1xf32>
    %62 = vector.broadcast %61 : vector<34x1xf32> to vector<34x34xf32>
    %63 = arith.subf %59, %62 : vector<34x34xf32>
    %64 = math.exp %63 : vector<34x34xf32>
    %cst_27 = arith.constant dense<0.000000e+00> : vector<34x8xf32>
    %65 = tpu.matmul %64, %56, %cst_27 {dimension_numbers = #tpu.dot_dimension_numbers<[1], [0], [0], [1], [0, 0, 1, 1], [], []>} : vector<34x34xf32>, vector<34x8xf32>, vector<34x8xf32> -> vector<34x8xf32>
    %cst_28 = arith.constant dense<0.000000e+00> : vector<34xf32>
    %66 = vector.multi_reduction <add>, %64, %cst_28 [1] : vector<34x34xf32> to vector<34xf32>
    %67 = vector.shape_cast %66 : vector<34xf32> to vector<34x1xf32>
    %68 = vector.broadcast %67 : vector<34x1xf32> to vector<34x8xf32>
    %69 = arith.divf %65, %68 : vector<34x8xf32>
    %70 = arith.truncf %69 : vector<34x8xf32> to vector<34x8xbf16>
    %c8 = arith.constant 8 : index
    %c0_29 = arith.constant 0 : index
    %71 = vector.load %arg6[%c8, %c0_29] : memref<32x32xbf16, #tpu.memory_space<vmem>>, vector<8x32xbf16>
    %cst_30 = arith.constant dense<0.000000e+00> : vector<34x32xf32>
    %72 = tpu.matmul %70, %71, %cst_30 {dimension_numbers = #tpu.dot_dimension_numbers<[1], [0], [0], [1], [0, 0, 1, 1], [], []>} : vector<34x8xbf16>, vector<8x32xbf16>, vector<34x32xf32> -> vector<34x32xf32>
    %73 = arith.addf %53, %72 : vector<34x32xf32>
    %74 = vector.extract_strided_slice %32 {offsets = [0, 16], sizes = [34, 8], strides = [1, 1]} : vector<34x96xf32> to vector<34x8xf32>
    %75 = vector.extract_strided_slice %32 {offsets = [0, 48], sizes = [34, 8], strides = [1, 1]} : vector<34x96xf32> to vector<34x8xf32>
    %76 = vector.extract_strided_slice %32 {offsets = [0, 80], sizes = [34, 8], strides = [1, 1]} : vector<34x96xf32> to vector<34x8xf32>
    %cst_31 = arith.constant dense<0.000000e+00> : vector<34x34xf32>
    %77 = tpu.matmul %74, %75, %cst_31 {dimension_numbers = #tpu.dot_dimension_numbers<[1], [1], [0], [0], [0, 0, 1, 0], [], []>} : vector<34x8xf32>, vector<34x8xf32>, vector<34x34xf32> -> vector<34x34xf32>
    %cst_32 = arith.constant 0.353553385 : f32
    %78 = vector.broadcast %cst_32 : f32 to vector<34x34xf32>
    %79 = arith.mulf %77, %78 : vector<34x34xf32>
    %cst_33 = arith.constant dense<0xFF800000> : vector<34xf32>
    %80 = vector.multi_reduction <maximumf>, %79, %cst_33 [1] : vector<34x34xf32> to vector<34xf32>
    %81 = vector.shape_cast %80 : vector<34xf32> to vector<34x1xf32>
    %82 = vector.broadcast %81 : vector<34x1xf32> to vector<34x34xf32>
    %83 = arith.subf %79, %82 : vector<34x34xf32>
    %84 = math.exp %83 : vector<34x34xf32>
    %cst_34 = arith.constant dense<0.000000e+00> : vector<34x8xf32>
    %85 = tpu.matmul %84, %76, %cst_34 {dimension_numbers = #tpu.dot_dimension_numbers<[1], [0], [0], [1], [0, 0, 1, 1], [], []>} : vector<34x34xf32>, vector<34x8xf32>, vector<34x8xf32> -> vector<34x8xf32>
    %cst_35 = arith.constant dense<0.000000e+00> : vector<34xf32>
    %86 = vector.multi_reduction <add>, %84, %cst_35 [1] : vector<34x34xf32> to vector<34xf32>
    %87 = vector.shape_cast %86 : vector<34xf32> to vector<34x1xf32>
    %88 = vector.broadcast %87 : vector<34x1xf32> to vector<34x8xf32>
    %89 = arith.divf %85, %88 : vector<34x8xf32>
    %90 = arith.truncf %89 : vector<34x8xf32> to vector<34x8xbf16>
    %c16 = arith.constant 16 : index
    %c0_36 = arith.constant 0 : index
    %91 = vector.load %arg6[%c16, %c0_36] : memref<32x32xbf16, #tpu.memory_space<vmem>>, vector<8x32xbf16>
    %cst_37 = arith.constant dense<0.000000e+00> : vector<34x32xf32>
    %92 = tpu.matmul %90, %91, %cst_37 {dimension_numbers = #tpu.dot_dimension_numbers<[1], [0], [0], [1], [0, 0, 1, 1], [], []>} : vector<34x8xbf16>, vector<8x32xbf16>, vector<34x32xf32> -> vector<34x32xf32>
    %93 = arith.addf %73, %92 : vector<34x32xf32>
    %94 = vector.extract_strided_slice %32 {offsets = [0, 24], sizes = [34, 8], strides = [1, 1]} : vector<34x96xf32> to vector<34x8xf32>
    %95 = vector.extract_strided_slice %32 {offsets = [0, 56], sizes = [34, 8], strides = [1, 1]} : vector<34x96xf32> to vector<34x8xf32>
    %96 = vector.extract_strided_slice %32 {offsets = [0, 88], sizes = [34, 8], strides = [1, 1]} : vector<34x96xf32> to vector<34x8xf32>
    %cst_38 = arith.constant dense<0.000000e+00> : vector<34x34xf32>
    %97 = tpu.matmul %94, %95, %cst_38 {dimension_numbers = #tpu.dot_dimension_numbers<[1], [1], [0], [0], [0, 0, 1, 0], [], []>} : vector<34x8xf32>, vector<34x8xf32>, vector<34x34xf32> -> vector<34x34xf32>
    %cst_39 = arith.constant 0.353553385 : f32
    %98 = vector.broadcast %cst_39 : f32 to vector<34x34xf32>
    %99 = arith.mulf %97, %98 : vector<34x34xf32>
    %cst_40 = arith.constant dense<0xFF800000> : vector<34xf32>
    %100 = vector.multi_reduction <maximumf>, %99, %cst_40 [1] : vector<34x34xf32> to vector<34xf32>
    %101 = vector.shape_cast %100 : vector<34xf32> to vector<34x1xf32>
    %102 = vector.broadcast %101 : vector<34x1xf32> to vector<34x34xf32>
    %103 = arith.subf %99, %102 : vector<34x34xf32>
    %104 = math.exp %103 : vector<34x34xf32>
    %cst_41 = arith.constant dense<0.000000e+00> : vector<34x8xf32>
    %105 = tpu.matmul %104, %96, %cst_41 {dimension_numbers = #tpu.dot_dimension_numbers<[1], [0], [0], [1], [0, 0, 1, 1], [], []>} : vector<34x34xf32>, vector<34x8xf32>, vector<34x8xf32> -> vector<34x8xf32>
    %cst_42 = arith.constant dense<0.000000e+00> : vector<34xf32>
    %106 = vector.multi_reduction <add>, %104, %cst_42 [1] : vector<34x34xf32> to vector<34xf32>
    %107 = vector.shape_cast %106 : vector<34xf32> to vector<34x1xf32>
    %108 = vector.broadcast %107 : vector<34x1xf32> to vector<34x8xf32>
    %109 = arith.divf %105, %108 : vector<34x8xf32>
    %110 = arith.truncf %109 : vector<34x8xf32> to vector<34x8xbf16>
    %c24 = arith.constant 24 : index
    %c0_43 = arith.constant 0 : index
    %111 = vector.load %arg6[%c24, %c0_43] : memref<32x32xbf16, #tpu.memory_space<vmem>>, vector<8x32xbf16>
    %cst_44 = arith.constant dense<0.000000e+00> : vector<34x32xf32>
    %112 = tpu.matmul %110, %111, %cst_44 {dimension_numbers = #tpu.dot_dimension_numbers<[1], [0], [0], [1], [0, 0, 1, 1], [], []>} : vector<34x8xbf16>, vector<8x32xbf16>, vector<34x32xf32> -> vector<34x32xf32>
    %113 = arith.addf %93, %112 : vector<34x32xf32>
    %114 = arith.addf %2, %113 : vector<34x32xf32>
    %c0_45 = arith.constant 0 : index
    %c0_46 = arith.constant 0 : index
    %115 = vector.load %arg7[%c0_45, %c0_46] : memref<1x32xf32, #tpu.memory_space<vmem>>, vector<1x32xf32>
    %116 = vector.broadcast %115 : vector<1x32xf32> to vector<34x32xf32>
    %117 = arith.addf %114, %116 : vector<34x32xf32>
    %c0_47 = arith.constant 0 : index
    %c0_48 = arith.constant 0 : index
    %118 = vector.load %arg8[%c0_47, %c0_48] : memref<1x32xf32, #tpu.memory_space<vmem>>, vector<1x32xf32>
    %c0_49 = arith.constant 0 : index
    %c0_50 = arith.constant 0 : index
    %119 = vector.load %arg9[%c0_49, %c0_50] : memref<1x32xf32, #tpu.memory_space<vmem>>, vector<1x32xf32>
    %cst_51 = arith.constant dense<0.000000e+00> : vector<34xf32>
    %120 = vector.multi_reduction <add>, %117, %cst_51 [1] : vector<34x32xf32> to vector<34xf32>
    %121 = vector.shape_cast %120 : vector<34xf32> to vector<34x1xf32>
    %cst_52 = arith.constant 3.200000e+01 : f32
    %122 = vector.broadcast %cst_52 : f32 to vector<34x1xf32>
    %123 = arith.divf %121, %122 : vector<34x1xf32>
    %124 = vector.broadcast %123 : vector<34x1xf32> to vector<34x32xf32>
    %125 = arith.subf %117, %124 : vector<34x32xf32>
    %126 = arith.mulf %125, %125 : vector<34x32xf32>
    %cst_53 = arith.constant dense<0.000000e+00> : vector<34xf32>
    %127 = vector.multi_reduction <add>, %126, %cst_53 [1] : vector<34x32xf32> to vector<34xf32>
    %128 = vector.shape_cast %127 : vector<34xf32> to vector<34x1xf32>
    %cst_54 = arith.constant 3.200000e+01 : f32
    %129 = vector.broadcast %cst_54 : f32 to vector<34x1xf32>
    %130 = arith.divf %128, %129 : vector<34x1xf32>
    %131 = vector.broadcast %123 : vector<34x1xf32> to vector<34x32xf32>
    %132 = arith.subf %117, %131 : vector<34x32xf32>
    %cst_55 = arith.constant 9.99999974E-6 : f32
    %133 = vector.broadcast %cst_55 : f32 to vector<34x1xf32>
    %134 = arith.addf %130, %133 : vector<34x1xf32>
    %135 = math.rsqrt %134 : vector<34x1xf32>
    %136 = vector.broadcast %135 : vector<34x1xf32> to vector<34x32xf32>
    %137 = arith.mulf %132, %136 : vector<34x32xf32>
    %138 = vector.broadcast %118 : vector<1x32xf32> to vector<34x32xf32>
    %139 = arith.mulf %137, %138 : vector<34x32xf32>
    %140 = vector.broadcast %119 : vector<1x32xf32> to vector<34x32xf32>
    %141 = arith.addf %139, %140 : vector<34x32xf32>
    %142 = arith.truncf %141 : vector<34x32xf32> to vector<34x32xbf16>
    %c0_56 = arith.constant 0 : index
    %c0_57 = arith.constant 0 : index
    %143 = vector.load %arg10[%c0_56, %c0_57] : memref<32x128xbf16, #tpu.memory_space<vmem>>, vector<32x128xbf16>
    %cst_58 = arith.constant dense<0.000000e+00> : vector<34x128xf32>
    %144 = tpu.matmul %142, %143, %cst_58 {dimension_numbers = #tpu.dot_dimension_numbers<[1], [0], [0], [1], [0, 0, 1, 1], [], []>} : vector<34x32xbf16>, vector<32x128xbf16>, vector<34x128xf32> -> vector<34x128xf32>
    %c0_59 = arith.constant 0 : index
    %c0_60 = arith.constant 0 : index
    %145 = vector.load %arg11[%c0_59, %c0_60] : memref<1x128xf32, #tpu.memory_space<vmem>>, vector<1x128xf32>
    %146 = vector.broadcast %145 : vector<1x128xf32> to vector<34x128xf32>
    %147 = arith.addf %144, %146 : vector<34x128xf32>
    %148 = arith.mulf %147, %147 : vector<34x128xf32>
    %149 = arith.mulf %147, %148 : vector<34x128xf32>
    %cst_61 = arith.constant 4.471500e-02 : f32
    %150 = vector.broadcast %cst_61 : f32 to vector<34x128xf32>
    %151 = arith.mulf %150, %149 : vector<34x128xf32>
    %152 = arith.addf %147, %151 : vector<34x128xf32>
    %cst_62 = arith.constant 0.797884583 : f32
    %153 = vector.broadcast %cst_62 : f32 to vector<34x128xf32>
    %154 = arith.mulf %153, %152 : vector<34x128xf32>
    %155 = math.tanh %154 : vector<34x128xf32>
    %cst_63 = arith.constant 1.000000e+00 : f32
    %156 = vector.broadcast %cst_63 : f32 to vector<34x128xf32>
    %157 = arith.addf %156, %155 : vector<34x128xf32>
    %cst_64 = arith.constant 5.000000e-01 : f32
    %158 = vector.broadcast %cst_64 : f32 to vector<34x128xf32>
    %159 = arith.mulf %158, %157 : vector<34x128xf32>
    %160 = arith.mulf %147, %159 : vector<34x128xf32>
    %161 = arith.truncf %160 : vector<34x128xf32> to vector<34x128xbf16>
    %c0_65 = arith.constant 0 : index
    %c0_66 = arith.constant 0 : index
    %162 = vector.load %arg12[%c0_65, %c0_66] : memref<128x32xbf16, #tpu.memory_space<vmem>>, vector<128x32xbf16>
    %cst_67 = arith.constant dense<0.000000e+00> : vector<34x32xf32>
    %163 = tpu.matmul %161, %162, %cst_67 {dimension_numbers = #tpu.dot_dimension_numbers<[1], [0], [0], [1], [0, 0, 1, 1], [], []>} : vector<34x128xbf16>, vector<128x32xbf16>, vector<34x32xf32> -> vector<34x32xf32>
    %c0_68 = arith.constant 0 : index
    %c0_69 = arith.constant 0 : index
    %164 = vector.load %arg13[%c0_68, %c0_69] : memref<1x32xf32, #tpu.memory_space<vmem>>, vector<1x32xf32>
    %165 = vector.broadcast %164 : vector<1x32xf32> to vector<34x32xf32>
    %166 = arith.addf %163, %165 : vector<34x32xf32>
    %167 = arith.addf %117, %166 : vector<34x32xf32>
    %168 = arith.truncf %167 : vector<34x32xf32> to vector<34x32xbf16>
    %c0_70 = arith.constant 0 : index
    %c0_71 = arith.constant 0 : index
    %c0_72 = arith.constant 0 : index
    %169 = vector.load %arg14[%c0_70, %c0_71, %c0_72] : memref<1x34x32xbf16, #tpu.memory_space<vmem>>, vector<1x34x32xbf16>
    %170 = vector.shape_cast %169 : vector<1x34x32xbf16> to vector<34x32xbf16>
    %171 = vector.shape_cast %168 : vector<34x32xbf16> to vector<1x34x32xbf16>
    tpu.vector_store %arg14[%c0_70, %c0_71, %c0_72], %171 {strides = array<i32>} : memref<1x34x32xbf16, #tpu.memory_space<vmem>>, vector<1x34x32xbf16>,
    return
  }
  func.func @transform_0(%arg0: i32) -> (i32, i32, i32) {
    %c0_i32 = arith.constant 0 : i32
    %c0_i32_0 = arith.constant 0 : i32
    %c0_i32_1 = arith.constant 0 : i32
    return %arg0, %c0_i32, %c0_i32_0 : i32, i32, i32
  }
  func.func @transform_1(%arg0: i32) -> (i32, i32) {
    %c0_i32 = arith.constant 0 : i32
    %c0_i32_0 = arith.constant 0 : i32
    %c0_i32_1 = arith.constant 0 : i32
    return %c0_i32, %c0_i32_0 : i32, i32
  }
  func.func @transform_2(%arg0: i32) -> (i32, i32) {
    %c0_i32 = arith.constant 0 : i32
    %c0_i32_0 = arith.constant 0 : i32
    %c0_i32_1 = arith.constant 0 : i32
    return %c0_i32, %c0_i32_0 : i32, i32
  }
  func.func @transform_3(%arg0: i32) -> (i32, i32) {
    %c0_i32 = arith.constant 0 : i32
    %c0_i32_0 = arith.constant 0 : i32
    %c0_i32_1 = arith.constant 0 : i32
    return %c0_i32, %c0_i32_0 : i32, i32
  }
  func.func @transform_4(%arg0: i32) -> (i32, i32) {
    %c0_i32 = arith.constant 0 : i32
    %c0_i32_0 = arith.constant 0 : i32
    %c0_i32_1 = arith.constant 0 : i32
    return %c0_i32, %c0_i32_0 : i32, i32
  }
  func.func @transform_5(%arg0: i32) -> (i32, i32) {
    %c0_i32 = arith.constant 0 : i32
    %c0_i32_0 = arith.constant 0 : i32
    %c0_i32_1 = arith.constant 0 : i32
    return %c0_i32, %c0_i32_0 : i32, i32
  }
  func.func @transform_6(%arg0: i32) -> (i32, i32) {
    %c0_i32 = arith.constant 0 : i32
    %c0_i32_0 = arith.constant 0 : i32
    %c0_i32_1 = arith.constant 0 : i32
    return %c0_i32, %c0_i32_0 : i32, i32
  }
  func.func @transform_7(%arg0: i32) -> (i32, i32) {
    %c0_i32 = arith.constant 0 : i32
    %c0_i32_0 = arith.constant 0 : i32
    %c0_i32_1 = arith.constant 0 : i32
    return %c0_i32, %c0_i32_0 : i32, i32
  }
  func.func @transform_8(%arg0: i32) -> (i32, i32) {
    %c0_i32 = arith.constant 0 : i32
    %c0_i32_0 = arith.constant 0 : i32
    %c0_i32_1 = arith.constant 0 : i32
    return %c0_i32, %c0_i32_0 : i32, i32
  }
  func.func @transform_9(%arg0: i32) -> (i32, i32) {
    %c0_i32 = arith.constant 0 : i32
    %c0_i32_0 = arith.constant 0 : i32
    %c0_i32_1 = arith.constant 0 : i32
    return %c0_i32, %c0_i32_0 : i32, i32
  }
  func.func @transform_10(%arg0: i32) -> (i32, i32) {
    %c0_i32 = arith.constant 0 : i32
    %c0_i32_0 = arith.constant 0 : i32
    %c0_i32_1 = arith.constant 0 : i32
    return %c0_i32, %c0_i32_0 : i32, i32
  }
  func.func @transform_11(%arg0: i32) -> (i32, i32) {
    %c0_i32 = arith.constant 0 : i32
    %c0_i32_0 = arith.constant 0 : i32
    %c0_i32_1 = arith.constant 0 : i32
    return %c0_i32, %c0_i32_0 : i32, i32
  }
  func.func @transform_12(%arg0: i32) -> (i32, i32) {
    %c0_i32 = arith.constant 0 : i32
    %c0_i32_0 = arith.constant 0 : i32
    %c0_i32_1 = arith.constant 0 : i32
    return %c0_i32, %c0_i32_0 : i32, i32
  }
  func.func @transform_13(%arg0: i32) -> (i32, i32, i32) {
    %c0_i32 = arith.constant 0 : i32
    %c0_i32_0 = arith.constant 0 : i32
    %c0_i32_1 = arith.constant 0 : i32
    return %arg0, %c0_i32, %c0_i32_0 : i32, i32, i32
  }
}

module attributes {stable_mosaic.version = 11 : i64} {
  func.func @kern(%arg0: i32, %arg1: memref<32x32xbf16, #tpu.memory_space<vmem>>, %arg2: memref<1x32xf32, #tpu.memory_space<vmem>>, %arg3: memref<1x32xf32, #tpu.memory_space<vmem>>, %arg4: memref<32x256xbf16, #tpu.memory_space<vmem>>, %arg5: memref<32x48xf32, #tpu.memory_space<vmem>>, %arg6: memref<32x48xf32, #tpu.memory_space<vmem>>, %arg7: memref<256x16xf32, #tpu.memory_space<vmem>>, %arg8: memref<16x48xf32, #tpu.memory_space<vmem>>, %arg9: memref<48x256xf32, #tpu.memory_space<vmem>>, %arg10: memref<1x256xf32, #tpu.memory_space<vmem>>, %arg11: memref<1x256xf32, #tpu.memory_space<vmem>>, %arg12: memref<1x256xf32, #tpu.memory_space<vmem>>, %arg13: memref<32x256xf32, #tpu.memory_space<vmem>>) attributes {dimension_semantics = [#tpu.dimension_semantics<parallel>], iteration_bounds = array<i64: 2>, scalar_prefetch = 0 : i64, scratch_operands = 0 : i64, tpu.core_type = #tpu.core_type<tc>, window_params = [{transform_indices = @transform_0, window_bounds = array<i64: 32, 32>}, {pipeline_mode = #tpu.pipeline_mode<synchronous>, transform_indices = @transform_1, window_bounds = array<i64: 1, 32>}, {pipeline_mode = #tpu.pipeline_mode<synchronous>, transform_indices = @transform_2, window_bounds = array<i64: 1, 32>}, {pipeline_mode = #tpu.pipeline_mode<synchronous>, transform_indices = @transform_3, window_bounds = array<i64: 32, 256>}, {transform_indices = @transform_4, window_bounds = array<i64: 32, 48>}, {transform_indices = @transform_5, window_bounds = array<i64: 32, 48>}, {pipeline_mode = #tpu.pipeline_mode<synchronous>, transform_indices = @transform_6, window_bounds = array<i64: 256, 16>}, {pipeline_mode = #tpu.pipeline_mode<synchronous>, transform_indices = @transform_7, window_bounds = array<i64: 16, 48>}, {pipeline_mode = #tpu.pipeline_mode<synchronous>, transform_indices = @transform_8, window_bounds = array<i64: 48, 256>}, {pipeline_mode = #tpu.pipeline_mode<synchronous>, transform_indices = @transform_9, window_bounds = array<i64: 1, 256>}, {pipeline_mode = #tpu.pipeline_mode<synchronous>, transform_indices = @transform_10, window_bounds = array<i64: 1, 256>}, {pipeline_mode = #tpu.pipeline_mode<synchronous>, transform_indices = @transform_11, window_bounds = array<i64: 1, 256>}, {transform_indices = @transform_12, window_bounds = array<i64: 32, 256>}]} {
    %c0 = arith.constant 0 : index
    %c0_0 = arith.constant 0 : index
    %0 = vector.load %arg1[%c0, %c0_0] : memref<32x32xbf16, #tpu.memory_space<vmem>>, vector<32x32xbf16>
    %1 = arith.extf %0 : vector<32x32xbf16> to vector<32x32xf32>
    %c0_1 = arith.constant 0 : index
    %c0_2 = arith.constant 0 : index
    %2 = vector.load %arg2[%c0_1, %c0_2] : memref<1x32xf32, #tpu.memory_space<vmem>>, vector<1x32xf32>
    %c0_3 = arith.constant 0 : index
    %c0_4 = arith.constant 0 : index
    %3 = vector.load %arg3[%c0_3, %c0_4] : memref<1x32xf32, #tpu.memory_space<vmem>>, vector<1x32xf32>
    %cst = arith.constant dense<0.000000e+00> : vector<32xf32>
    %4 = vector.multi_reduction <add>, %1, %cst [1] : vector<32x32xf32> to vector<32xf32>
    %5 = vector.shape_cast %4 : vector<32xf32> to vector<32x1xf32>
    %cst_5 = arith.constant 3.200000e+01 : f32
    %6 = vector.broadcast %cst_5 : f32 to vector<32x1xf32>
    %7 = arith.divf %5, %6 : vector<32x1xf32>
    %8 = vector.broadcast %7 : vector<32x1xf32> to vector<32x32xf32>
    %9 = arith.subf %1, %8 : vector<32x32xf32>
    %10 = arith.mulf %9, %9 : vector<32x32xf32>
    %cst_6 = arith.constant dense<0.000000e+00> : vector<32xf32>
    %11 = vector.multi_reduction <add>, %10, %cst_6 [1] : vector<32x32xf32> to vector<32xf32>
    %12 = vector.shape_cast %11 : vector<32xf32> to vector<32x1xf32>
    %cst_7 = arith.constant 3.200000e+01 : f32
    %13 = vector.broadcast %cst_7 : f32 to vector<32x1xf32>
    %14 = arith.divf %12, %13 : vector<32x1xf32>
    %15 = vector.broadcast %7 : vector<32x1xf32> to vector<32x32xf32>
    %16 = arith.subf %1, %15 : vector<32x32xf32>
    %cst_8 = arith.constant 9.99999974E-6 : f32
    %17 = vector.broadcast %cst_8 : f32 to vector<32x1xf32>
    %18 = arith.addf %14, %17 : vector<32x1xf32>
    %19 = math.rsqrt %18 : vector<32x1xf32>
    %20 = vector.broadcast %19 : vector<32x1xf32> to vector<32x32xf32>
    %21 = arith.mulf %16, %20 : vector<32x32xf32>
    %22 = vector.broadcast %2 : vector<1x32xf32> to vector<32x32xf32>
    %23 = arith.mulf %21, %22 : vector<32x32xf32>
    %24 = vector.broadcast %3 : vector<1x32xf32> to vector<32x32xf32>
    %25 = arith.addf %23, %24 : vector<32x32xf32>
    %26 = arith.truncf %25 : vector<32x32xf32> to vector<32x32xbf16>
    %c0_9 = arith.constant 0 : index
    %c0_10 = arith.constant 0 : index
    %27 = vector.load %arg4[%c0_9, %c0_10] : memref<32x256xbf16, #tpu.memory_space<vmem>>, vector<32x256xbf16>
    %cst_11 = arith.constant dense<0.000000e+00> : vector<32x256xf32>
    %28 = tpu.matmul %26, %27, %cst_11 {dimension_numbers = #tpu.dot_dimension_numbers<[1], [0], [0], [1], [0, 0, 1, 1], [], []>} : vector<32x32xbf16>, vector<32x256xbf16>, vector<32x256xf32> -> vector<32x256xf32>
    %c0_12 = arith.constant 0 : index
    %c0_13 = arith.constant 0 : index
    %29 = vector.load %arg10[%c0_12, %c0_13] : memref<1x256xf32, #tpu.memory_space<vmem>>, vector<1x256xf32>
    %30 = vector.shape_cast %29 : vector<1x256xf32> to vector<1x256xf32>
    %31 = vector.broadcast %30 : vector<1x256xf32> to vector<32x256xf32>
    %32 = arith.addf %28, %31 : vector<32x256xf32>
    %c0_14 = arith.constant 0 : index
    %c0_15 = arith.constant 0 : index
    %33 = vector.load %arg11[%c0_14, %c0_15] : memref<1x256xf32, #tpu.memory_space<vmem>>, vector<1x256xf32>
    %34 = vector.shape_cast %33 : vector<1x256xf32> to vector<1x256xf32>
    %35 = vector.broadcast %34 : vector<1x256xf32> to vector<32x256xf32>
    %36 = arith.minimumf %32, %35 : vector<32x256xf32>
    %c0_16 = arith.constant 0 : index
    %c0_17 = arith.constant 0 : index
    %37 = vector.load %arg7[%c0_16, %c0_17] : memref<256x16xf32, #tpu.memory_space<vmem>>, vector<256x16xf32>
    %cst_18 = arith.constant dense<0.000000e+00> : vector<32x16xf32>
    %38 = tpu.matmul %28, %37, %cst_18 {dimension_numbers = #tpu.dot_dimension_numbers<[1], [0], [0], [1], [0, 0, 1, 1], [], []>} : vector<32x256xf32>, vector<256x16xf32>, vector<32x16xf32> -> vector<32x16xf32>
    %39 = arith.negf %38 : vector<32x16xf32>
    %40 = math.exp %39 : vector<32x16xf32>
    %cst_19 = arith.constant 1.000000e+00 : f32
    %41 = vector.broadcast %cst_19 : f32 to vector<32x16xf32>
    %42 = arith.addf %41, %40 : vector<32x16xf32>
    %43 = arith.divf %41, %42 : vector<32x16xf32>
    %cst_20 = arith.constant 5.000000e+02 : f32
    %44 = vector.broadcast %cst_20 : f32 to vector<32x16xf32>
    %45 = arith.mulf %43, %44 : vector<32x16xf32>
    %c0_21 = arith.constant 0 : index
    %c0_22 = arith.constant 0 : index
    %46 = vector.load %arg8[%c0_21, %c0_22] : memref<16x48xf32, #tpu.memory_space<vmem>>, vector<16x48xf32>
    %cst_23 = arith.constant dense<0.000000e+00> : vector<32x48xf32>
    %47 = tpu.matmul %45, %46, %cst_23 {dimension_numbers = #tpu.dot_dimension_numbers<[1], [0], [0], [1], [0, 0, 1, 1], [], []>} : vector<32x16xf32>, vector<16x48xf32>, vector<32x48xf32> -> vector<32x48xf32>
    %c0_24 = arith.constant 0 : index
    %c0_25 = arith.constant 0 : index
    %48 = vector.load %arg5[%c0_24, %c0_25] : memref<32x48xf32, #tpu.memory_space<vmem>>, vector<32x48xf32>
    %49 = arith.mulf %47, %48 : vector<32x48xf32>
    %c0_26 = arith.constant 0 : index
    %c0_27 = arith.constant 0 : index
    %50 = vector.load %arg6[%c0_26, %c0_27] : memref<32x48xf32, #tpu.memory_space<vmem>>, vector<32x48xf32>
    %51 = arith.addf %49, %50 : vector<32x48xf32>
    %c0_28 = arith.constant 0 : index
    %c0_29 = arith.constant 0 : index
    %52 = vector.load %arg9[%c0_28, %c0_29] : memref<48x256xf32, #tpu.memory_space<vmem>>, vector<48x256xf32>
    %cst_30 = arith.constant dense<0.000000e+00> : vector<32x256xf32>
    %53 = tpu.matmul %51, %52, %cst_30 {dimension_numbers = #tpu.dot_dimension_numbers<[1], [0], [0], [1], [0, 0, 1, 1], [], []>} : vector<32x48xf32>, vector<48x256xf32>, vector<32x256xf32> -> vector<32x256xf32>
    %c0_31 = arith.constant 0 : index
    %c0_32 = arith.constant 0 : index
    %54 = vector.load %arg12[%c0_31, %c0_32] : memref<1x256xf32, #tpu.memory_space<vmem>>, vector<1x256xf32>
    %55 = vector.broadcast %54 : vector<1x256xf32> to vector<32x256xf32>
    %56 = arith.mulf %55, %53 : vector<32x256xf32>
    %cst_33 = arith.constant 1.000000e+00 : f32
    %57 = vector.broadcast %cst_33 : f32 to vector<1x256xf32>
    %58 = arith.subf %57, %54 : vector<1x256xf32>
    %59 = vector.broadcast %58 : vector<1x256xf32> to vector<32x256xf32>
    %60 = arith.mulf %59, %36 : vector<32x256xf32>
    %61 = arith.addf %56, %60 : vector<32x256xf32>
    %c0_34 = arith.constant 0 : index
    %c0_35 = arith.constant 0 : index
    %62 = vector.load %arg13[%c0_34, %c0_35] : memref<32x256xf32, #tpu.memory_space<vmem>>, vector<32x256xf32>
    tpu.vector_store %arg13[%c0_34, %c0_35], %61 {strides = array<i32>} : memref<32x256xf32, #tpu.memory_space<vmem>>, vector<32x256xf32>,
    return
  }
  func.func @transform_0(%arg0: i32) -> (i32, i32) {
    %c0_i32 = arith.constant 0 : i32
    %c0_i32_0 = arith.constant 0 : i32
    return %arg0, %c0_i32 : i32, i32
  }
  func.func @transform_1(%arg0: i32) -> (i32, i32) {
    %c0_i32 = arith.constant 0 : i32
    %c0_i32_0 = arith.constant 0 : i32
    %c0_i32_1 = arith.constant 0 : i32
    return %c0_i32, %c0_i32_0 : i32, i32
  }
  func.func @transform_2(%arg0: i32) -> (i32, i32) {
    %c0_i32 = arith.constant 0 : i32
    %c0_i32_0 = arith.constant 0 : i32
    %c0_i32_1 = arith.constant 0 : i32
    return %c0_i32, %c0_i32_0 : i32, i32
  }
  func.func @transform_3(%arg0: i32) -> (i32, i32) {
    %c0_i32 = arith.constant 0 : i32
    %c0_i32_0 = arith.constant 0 : i32
    %c0_i32_1 = arith.constant 0 : i32
    return %c0_i32, %c0_i32_0 : i32, i32
  }
  func.func @transform_4(%arg0: i32) -> (i32, i32) {
    %c0_i32 = arith.constant 0 : i32
    %c0_i32_0 = arith.constant 0 : i32
    return %arg0, %c0_i32 : i32, i32
  }
  func.func @transform_5(%arg0: i32) -> (i32, i32) {
    %c0_i32 = arith.constant 0 : i32
    %c0_i32_0 = arith.constant 0 : i32
    return %arg0, %c0_i32 : i32, i32
  }
  func.func @transform_6(%arg0: i32) -> (i32, i32) {
    %c0_i32 = arith.constant 0 : i32
    %c0_i32_0 = arith.constant 0 : i32
    %c0_i32_1 = arith.constant 0 : i32
    return %c0_i32, %c0_i32_0 : i32, i32
  }
  func.func @transform_7(%arg0: i32) -> (i32, i32) {
    %c0_i32 = arith.constant 0 : i32
    %c0_i32_0 = arith.constant 0 : i32
    %c0_i32_1 = arith.constant 0 : i32
    return %c0_i32, %c0_i32_0 : i32, i32
  }
  func.func @transform_8(%arg0: i32) -> (i32, i32) {
    %c0_i32 = arith.constant 0 : i32
    %c0_i32_0 = arith.constant 0 : i32
    %c0_i32_1 = arith.constant 0 : i32
    return %c0_i32, %c0_i32_0 : i32, i32
  }
  func.func @transform_9(%arg0: i32) -> (i32, i32) {
    %c0_i32 = arith.constant 0 : i32
    %c0_i32_0 = arith.constant 0 : i32
    %c0_i32_1 = arith.constant 0 : i32
    return %c0_i32, %c0_i32_0 : i32, i32
  }
  func.func @transform_10(%arg0: i32) -> (i32, i32) {
    %c0_i32 = arith.constant 0 : i32
    %c0_i32_0 = arith.constant 0 : i32
    %c0_i32_1 = arith.constant 0 : i32
    return %c0_i32, %c0_i32_0 : i32, i32
  }
  func.func @transform_11(%arg0: i32) -> (i32, i32) {
    %c0_i32 = arith.constant 0 : i32
    %c0_i32_0 = arith.constant 0 : i32
    %c0_i32_1 = arith.constant 0 : i32
    return %c0_i32, %c0_i32_0 : i32, i32
  }
  func.func @transform_12(%arg0: i32) -> (i32, i32) {
    %c0_i32 = arith.constant 0 : i32
    %c0_i32_0 = arith.constant 0 : i32
    return %arg0, %c0_i32 : i32, i32
  }
}

</mosaic_0001>

<llo_original>
// kernel: longlrm_forward.4
$region0: #{longlrm_forward.4}
  #allocation0 [shape = 'u32[]', space=smem, size = 0x4, offset = 0x4, fixed_abs, tag = 'smem constant byte address 0x4 - core index']
  #allocation1 [shape = 'u32[144,128]{1,0:T(1,128)}', space=vmem, size = 0x12000, scoped, tag = 'internal scratch']
  %s0 = inlined_call_operand.vmem [shape: bf16[64,144], index: 0, kind: input, shape index: {}]
  %s1 = inlined_call_operand.vmem [shape: bf16[144,32], index: 1, kind: input, shape index: {}]
  %s2 = inlined_call_operand.vmem [shape: f32[1,32], index: 2, kind: input, shape index: {}]
  %s3 = inlined_call_operand.vmem [shape: bf16[64,32], index: 3, kind: output, shape index: {}]
  %s4 = sld [smem:[#allocation0]]
  $region45: #{longlrm_forward.4} parent=0
    _
  %s6 = ssub.s32 1, %s4
  %s7 = scalar_select 0, %s6, %s4
  loop: start=0, step=1, limit=4
  $region2: #{longlrm_forward.4} parent=0 // loop_pre_header
    _
  $region3: #{longlrm_forward.4} parent=0 // loop_header
    %s9 = sphi 0, %s13
    %p10 = scmp.ge.s32.totalorder %s9, 4
    %s19 = sphi 0, %s21
    %s22 = sphi 0, %s19
    %s23 = sphi 0, %s22
    %s39 = sphi 0, %s23
    %s43 = sphi 0, %s43
    %s45 = sphi 0, %s43
    %s46 = sphi 0, %s45
    %s60 = sphi 0, %s46
    %s64 = sphi 0, %s64
    %s66 = sphi 0, %s64
    %s67 = sphi 0, %s66
    %s81 = sphi 0, %s67
    %s87 = sphi 0, %s89
    %s90 = sphi 0, %s87
    %s91 = sphi 0, %s90
    %s107 = sphi 0, %s91
  $region4: #{longlrm_forward.4} parent=0 // loop_header_branch
    %12 = sbr.rel (%p10) target = $region8
  $region5: #{longlrm_forward.4} parent=0 // loop_body
    %s14 = ssub.s32 %s9, 1
    %s15 = ssub.s32 %s9, 2
    %s16 = sadd.s32 %s9, 1
    %s17 = ssub.s32 %s9, %s16
    %p18 = scmp.eq.s32.totalorder %s17, 0
    %s20 = sadd.s32 %s19, 1
    %s21 = scalar_select %p18, %s19, %s20
    %p24 = pneg %p18
    %p25 = scmp.eq.s32.totalorder %s9, 1
    %p26 = por %p24, %p25
    %p27 = scmp.ne.s32.totalorder %s19, %s22
    %p28 = scmp.eq.s32.totalorder %s9, 0
    %p29 = por %p27, %p28
    %p30 = scmp.ne.s32.totalorder %s19, %s22
    %p31 = scmp.eq.s32.totalorder %s14, 1
    %p32 = por %p30, %p31
    %p33 = scmp.ne.s32.totalorder %s22, %s23
    %p34 = scmp.eq.s32.totalorder %s14, 0
    %p35 = por %p33, %p34
    %p36 = scmp.ne.s32.totalorder %s22, %s23
    %p37 = scmp.eq.s32.totalorder %s15, 1
    %p38 = por %p36, %p37
    %p40 = scmp.ne.s32.totalorder %s23, %s39
    %p41 = scmp.eq.s32.totalorder %s15, 0
    %p42 = por %p40, %p41
    %s44 = sadd.s32 %s43, 1
    %p47 = scmp.eq.s32.totalorder %s9, 1
    %p48 = scmp.ne.s32.totalorder %s43, %s45
    %p49 = scmp.eq.s32.totalorder %s9, 0
    %p50 = por %p48, %p49
    %p51 = scmp.ne.s32.totalorder %s43, %s45
    %p52 = scmp.eq.s32.totalorder %s14, 1
    %p53 = por %p51, %p52
    %p54 = scmp.ne.s32.totalorder %s45, %s46
    %p55 = scmp.eq.s32.totalorder %s14, 0
    %p56 = por %p54, %p55
    %p57 = scmp.ne.s32.totalorder %s45, %s46
    %p58 = scmp.eq.s32.totalorder %s15, 1
    %p59 = por %p57, %p58
    %p61 = scmp.ne.s32.totalorder %s46, %s60
    %p62 = scmp.eq.s32.totalorder %s15, 0
    %p63 = por %p61, %p62
    %s65 = sadd.s32 %s64, 1
    %p68 = scmp.eq.s32.totalorder %s9, 1
    %p69 = scmp.ne.s32.totalorder %s64, %s66
    %p70 = scmp.eq.s32.totalorder %s9, 0
    %p71 = por %p69, %p70
    %p72 = scmp.ne.s32.totalorder %s64, %s66
    %p73 = scmp.eq.s32.totalorder %s14, 1
    %p74 = por %p72, %p73
    %p75 = scmp.ne.s32.totalorder %s66, %s67
    %p76 = scmp.eq.s32.totalorder %s14, 0
    %p77 = por %p75, %p76
    %p78 = scmp.ne.s32.totalorder %s66, %s67
    %p79 = scmp.eq.s32.totalorder %s15, 1
    %p80 = por %p78, %p79
    %p82 = scmp.ne.s32.totalorder %s67, %s81
    %p83 = scmp.eq.s32.totalorder %s15, 0
    %p84 = por %p82, %p83
    %s85 = ssub.s32 %s9, %s16
    %p86 = scmp.eq.s32.totalorder %s85, 0
    %s88 = sadd.s32 %s87, 1
    %s89 = scalar_select %p86, %s87, %s88
    %p92 = pneg %p86
    %p93 = scmp.eq.s32.totalorder %s9, 1
    %p94 = por %p92, %p93
    %p95 = scmp.ne.s32.totalorder %s87, %s90
    %p96 = scmp.eq.s32.totalorder %s9, 0
    %p97 = por %p95, %p96
    %p98 = scmp.ne.s32.totalorder %s87, %s90
    %p99 = scmp.eq.s32.totalorder %s14, 1
    %p100 = por %p98, %p99
    %p101 = scmp.ne.s32.totalorder %s90, %s91
    %p102 = scmp.eq.s32.totalorder %s14, 0
    %p103 = por %p101, %p102
    %p104 = scmp.ne.s32.totalorder %s90, %s91
    %p105 = scmp.eq.s32.totalorder %s15, 1
    %p106 = por %p104, %p105
    %p108 = scmp.ne.s32.totalorder %s91, %s107
    %p109 = scmp.eq.s32.totalorder %s15, 0
    %p110 = por %p108, %p109
    %p111 = scmp.le.s32.totalorder 1, %s9
    %p112 = scmp.lt.s32.totalorder %s9, 3
    %p113 = pnand %p111, %p112
    %p114 = pneg %p113
    // Predicated region
    $region9: #{longlrm_forward.4} parent=5 // pred_check
      _
    $region10: #{longlrm_forward.4} parent=5 // pred_check_branch
      %116 = sbr.rel (%p113) target = $region12
    $region11: #{longlrm_forward.4} parent=5 // pred_region
      %s117 = ssub.s32 %s9, 1
      // Predicated region
      $region13: #{longlrm_forward.4} parent=11 // pred_check
        %p118 = pneg %p56
      $region14: #{longlrm_forward.4} parent=11 // pred_check_branch
        %120 = sbr.rel (%p118) target = $region16
      $region15: #{longlrm_forward.4} parent=11 // pred_region
        _
      $region16: #{longlrm_forward.4} parent=11 // pred_fallthru
        _
      // Predicated region
      $region17: #{longlrm_forward.4} parent=11 // pred_check
        %p121 = pneg %p77
      $region18: #{longlrm_forward.4} parent=11 // pred_check_branch
        %123 = sbr.rel (%p121) target = $region20
      $region19: #{longlrm_forward.4} parent=11 // pred_region
        _
      $region20: #{longlrm_forward.4} parent=11 // pred_fallthru
        _
    $region12: #{longlrm_forward.4} parent=5 // pred_fallthru
      _
    %p124 = scmp.lt.s32.totalorder %s9, 2
    // Predicated region
    $region21: #{longlrm_forward.4} parent=5 // pred_check
      %p125 = pneg %p124
    $region22: #{longlrm_forward.4} parent=5 // pred_check_branch
      %127 = sbr.rel (%p125) target = $region24
    $region23: #{longlrm_forward.4} parent=5 // pred_region
      // Predicated region
      $region25: #{longlrm_forward.4} parent=23 // pred_check
        %p128 = pneg %p29
      $region26: #{longlrm_forward.4} parent=23 // pred_check_branch
        %130 = sbr.rel (%p128) target = $region28
      $region27: #{longlrm_forward.4} parent=23 // pred_region
        %s131 = smul.u32 4, %s9
        %p132 = scmp.lt.s32.totalorder %s131, 7
        %s133 = scalar_select %p132, %s131, 7
        %s134 = smul.addr %s133, 2
        %s135 = smul.addr %s134, 4
        %s136 = scalar_lea.vmem %s0, %s135
        %s137 = smul.u32 4, %s9
      $region28: #{longlrm_forward.4} parent=23 // pred_fallthru
        _
    $region24: #{longlrm_forward.4} parent=5 // pred_fallthru
      _
    %p138 = scmp.le.s32.totalorder 1, %s9
    %p139 = scmp.lt.s32.totalorder %s9, 3
    %p140 = pnand %p138, %p139
    %p141 = pneg %p140
    // Predicated region
    $region29: #{longlrm_forward.4} parent=5 // pred_check
      _
    $region30: #{longlrm_forward.4} parent=5 // pred_check_branch
      %143 = sbr.rel (%p140) target = $region32
    $region31: #{longlrm_forward.4} parent=5 // pred_region
      %s144 = ssub.s32 %s9, 1
      %s145 = smul.u32 4, %s14
      %p146 = scmp.lt.s32.totalorder %s145, 7
      %s147 = scalar_select %p146, %s145, 7
      %s148 = smul.addr %s147, 2
      %s149 = smul.addr %s148, 4
      %s150 = scalar_lea.vmem %s0, %s149
      %p151 = pneg %p35
      %p152 = pneg %p32
      %p153 = pneg %p56
      %p154 = pneg %p53
      %p155 = pneg %p77
      %p156 = pneg %p74
      %p157 = pneg %p103
      %p158 = pneg %p100
      %s159 = smul.u32 4, %s14
      %p160 = scmp.lt.s32.totalorder %s159, 7
      %s161 = scalar_select %p160, %s159, 7
      %s162 = smul.addr %s161, 4
      %s163 = scalar_lea.vmem %s3, %s162
      %s164 = smul.u32 4, %s14
      %p165 = scmp.lt.s32.totalorder %s164, 7
      %s166 = scalar_select %p165, %s164, 7
      %s167 = smul.addr %s166, 2
      %s168 = smul.addr %s167, 4
      %s169 = scalar_lea.vmem %s0, %s168
      %s170 = smul.u32 4, %s14
      %s171 = smul.u32 4, %s14
      %p172 = scmp.lt.s32.totalorder %s171, 7
      %s173 = scalar_select %p172, %s171, 7
      %s174 = smul.addr %s173, 4
      %s175 = scalar_lea.vmem %s3, %s174
      %s176 = smul.u32 4, %s14
      %v178 = vld [vmem:[%s169] sm:$0xff]
      %v179 = vld [vmem:[%s169 + $0x8] sm:$0xff]
      %v180 = vld [vmem:[%s169 + $0x10] sm:$0xff]
      %v181 = vld [vmem:[%s169 + $0x18] sm:$0xff]
      %v182 = vld [vmem:[%s1] sm:$0xf]
      %v183 = vld [vmem:[%s1 + $0x4] sm:$0xf]
      %v184 = vld [vmem:[%s1 + $0x8] sm:$0xf]
      %v185 = vld [vmem:[%s1 + $0xc] sm:$0xf]
      %v186 = vld [vmem:[%s1 + $0x10] sm:$0xf]
      %v187 = vld [vmem:[%s1 + $0x14] sm:$0xf]
      %v188 = vld [vmem:[%s1 + $0x18] sm:$0xf]
      %v189 = vld [vmem:[%s1 + $0x1c] sm:$0xf]
      %v190 = vld [vmem:[%s1 + $0x20] sm:$0xf]
      %v191 = vld [vmem:[%s1 + $0x24] sm:$0xf]
      %v192 = vld [vmem:[%s1 + $0x28] sm:$0xf]
      %v193 = vld [vmem:[%s1 + $0x2c] sm:$0xf]
      %v194 = vld [vmem:[%s1 + $0x30] sm:$0xf]
      %v195 = vld [vmem:[%s1 + $0x34] sm:$0xf]
      %v196 = vld [vmem:[%s1 + $0x38] sm:$0xf]
      %v197 = vld [vmem:[%s1 + $0x3c] sm:$0xf]
      %v198 = vld [vmem:[%s1 + $0x40] sm:$0xf]
      %v199 = vld [vmem:[%s1 + $0x44] sm:$0xf]
      %v200 = vld [vmem:[%s2] sm:$0x1]
      %v202 = vlaneseq
      %v203 = vshrl.u32 %v202, 7
      %v204 = vsub.s32 0, %v203
      %v205 = vrot.slane %v200, %v204
      %v211 = vunpack.c.l.b16 %v178
      %v212 = vunpack.c.h.b16 %v178
      %v213 = vunpack.c.l.b16 %v179
      %v214 = vunpack.c.h.b16 %v179
      %v215 = vunpack.c.l.b16 %v180
      %v216 = vunpack.c.h.b16 %v180
      %v217 = vunpack.c.l.b16 %v181
      %v218 = vunpack.c.h.b16 %v181
      %v219 = vpack.c.b16 %v213, %v211
      %v220 = vpack.c.b16 %v214, %v212
      %v221 = vpack.c.b16 %v217, %v215
      %v222 = vpack.c.b16 %v218, %v216
      %v243 = vunpack.c.l.b16 %v182
      %v244 = vunpack.c.l.b16 %v183
      %v245 = vunpack.c.l.b16 %v184
      %v246 = vunpack.c.l.b16 %v185
      %v247 = vunpack.c.l.b16 %v186
      %v248 = vunpack.c.l.b16 %v187
      %v249 = vunpack.c.l.b16 %v188
      %v250 = vunpack.c.l.b16 %v189
      %v251 = vunpack.c.l.b16 %v190
      %v252 = vunpack.c.l.b16 %v191
      %v253 = vunpack.c.l.b16 %v192
      %v254 = vunpack.c.l.b16 %v193
      %v255 = vunpack.c.l.b16 %v194
      %v256 = vunpack.c.l.b16 %v195
      %v257 = vunpack.c.l.b16 %v196
      %v258 = vunpack.c.l.b16 %v197
      %v259 = vunpack.c.l.b16 %v198
      %v260 = vunpack.c.l.b16 %v199
      %v261 = vpack.c.b16 %v244, %v243
      %v262 = vpack.c.b16 %v246, %v245
      %v263 = vpack.c.b16 %v248, %v247
      %v264 = vpack.c.b16 %v250, %v249
      %v265 = vpack.c.b16 %v252, %v251
      %v266 = vpack.c.b16 %v254, %v253
      %v267 = vpack.c.b16 %v256, %v255
      %v268 = vpack.c.b16 %v258, %v257
      %v269 = vpack.c.b16 %v260, %v259
      %vm279 = vcmask 130048
      %v281 = vsel %vm279, %v220, 0
      %v284 = vsel %vm279, %v222, 0
      %286 = vmatprep.subr.bf16.mxu0 0
      %287 = vmatpush1.bf16.msra.mxu0 %v261
      %288 = vmatprep.subr.bf16.mxu0 0
      %289 = vmatpush1.bf16.msra.mxu0 %v262
      %290 = vmatprep.subr.bf16.mxu0 0
      %291 = vmatpush1.bf16.msra.mxu0 %v263
      %292 = vmatprep.subr.bf16.mxu0 0
      %293 = vmatpush1.bf16.msra.mxu0 %v264
      %294 = vmatprep.subr.bf16.mxu0 0
      %295 = vmatpush1.bf16.msra.mxu0 %v265
      %296 = vmatprep.subr.bf16.mxu0 0
      %297 = vmatpush1.bf16.msra.mxu0 %v266
      %298 = vmatprep.subr.bf16.mxu0 0
      %299 = vmatpush1.bf16.msra.mxu0 %v267
      %300 = vmatprep.subr.bf16.mxu0 0
      %301 = vmatpush1.bf16.msra.mxu0 %v268
      %302 = vmatprep.subr.bf16.mxu0 0
      %303 = vmatpush1.bf16.msra.mxu0 %v269
      %304 = vmatprep.subr.bf16.mxu0 0
      %305 = vmatpush1.bf16.msra.mxu0 0
      %306 = vmatprep.subr.bf16.mxu0 0
      %307 = vmatpush1.bf16.msra.mxu0 0
      %308 = vmatprep.subr.bf16.mxu0 0
      %309 = vmatpush1.bf16.msra.mxu0 0
      %310 = vmatprep.subr.bf16.mxu0 0
      %311 = vmatpush1.bf16.msra.mxu0 0
      %312 = vmatprep.subr.bf16.mxu0 0
      %313 = vmatpush1.bf16.msra.mxu0 0
      %314 = vmatprep.subr.bf16.mxu0 0
      %315 = vmatpush1.bf16.msra.mxu0 0
      %316 = vmatprep.subr.bf16.mxu0 0
      %317 = vmatpush1.bf16.msra.mxu0 0
      %318 = vmatprep.mubr.bf16.mxu0 %v281
      %319 = vmatmul.mubr.bf16.gmra.mrb[0].mxu0 %v219
      %v320 = vpop.f32.mrb[0].mxu0
      %v321 = vadd.f32 %v205, %v320
      %v322 = vpop.f32.mrb[0].mxu0
      %v323 = vpop.f32.mrb[0].mxu0
      %v324 = vadd.f32 %v205, %v323
      %v325 = vpop.f32.mrb[0].mxu0
      %326 = vmatprep.mubr.bf16.mxu0 %v284
      %327 = vmatmul.mubr.bf16.gmra.mrb[0].mxu0 %v221
      %v328 = vpop.f32.mrb[0].mxu0
      %v329 = vadd.f32 %v205, %v328
      %v330 = vpop.f32.mrb[0].mxu0
      %v331 = vpop.f32.mrb[0].mxu0
      %v332 = vadd.f32 %v205, %v331
      %v333 = vpop.f32.mrb[0].mxu0
      %334 = vdwg.mxu0
      %v335 = vpack.c.bf16 %v324, %v321
      %v336 = vpack.c.bf16 %v332, %v329
      %v339 = vunpack.c.l.b16 %v335
      %v340 = vunpack.c.h.b16 %v335
      %v341 = vunpack.c.l.b16 %v336
      %v342 = vunpack.c.h.b16 %v336
      %v343 = vpack.c.b16 %v339, %v339
      %v344 = vpack.c.b16 %v340, %v340
      %v345 = vpack.c.b16 %v341, %v341
      %v346 = vpack.c.b16 %v342, %v342
      %vm351 = vcmask 257024
      %352 = vst.msk [vmem:[%s175] sm:$0xf] %vm351, %v343
      %353 = vst.msk [vmem:[%s175 + $0x4] sm:$0xf] %vm351, %v344
      %354 = vst.msk [vmem:[%s175 + $0x8] sm:$0xf] %vm351, %v345
      %355 = vst.msk [vmem:[%s175 + $0xc] sm:$0xf] %vm351, %v346
      %s356 = smul.u32 4, %s14
      %p357 = scmp.lt.s32.totalorder %s356, 7
      %s358 = scalar_select %p357, %s356, 7
      %s359 = smul.addr %s358, 4
      %s360 = scalar_lea.vmem %s3, %s359
      // Predicated region
      $region33: #{longlrm_forward.4} parent=31 // pred_check
        %p361 = pneg %p100
      $region34: #{longlrm_forward.4} parent=31 // pred_check_branch
        %363 = sbr.rel (%p361) target = $region36
      $region35: #{longlrm_forward.4} parent=31 // pred_region
        %s364 = smul.u32 4, %s14
      $region36: #{longlrm_forward.4} parent=31 // pred_fallthru
        _
    $region32: #{longlrm_forward.4} parent=5 // pred_fallthru
      _
    %p365 = scmp.le.s32.totalorder 2, %s9
    // Predicated region
    $region37: #{longlrm_forward.4} parent=5 // pred_check
      %p366 = pneg %p365
    $region38: #{longlrm_forward.4} parent=5 // pred_check_branch
      %368 = sbr.rel (%p366) target = $region40
    $region39: #{longlrm_forward.4} parent=5 // pred_region
      %s369 = ssub.s32 %s9, 2
      // Predicated region
      $region41: #{longlrm_forward.4} parent=39 // pred_check
        %p370 = pneg %p106
      $region42: #{longlrm_forward.4} parent=39 // pred_check_branch
        %372 = sbr.rel (%p370) target = $region44
      $region43: #{longlrm_forward.4} parent=39 // pred_region
        %s373 = smul.u32 4, %s15
        %p374 = scmp.lt.s32.totalorder %s373, 7
        %s375 = scalar_select %p374, %s373, 7
        %s376 = smul.addr %s375, 4
        %s377 = scalar_lea.vmem %s3, %s376
      $region44: #{longlrm_forward.4} parent=39 // pred_fallthru
        _
    $region40: #{longlrm_forward.4} parent=5 // pred_fallthru
      _
  $region6: #{longlrm_forward.4} parent=0 // loop_footer
    %s13 = sadd.s32 1, %s9
  $region7: #{longlrm_forward.4} parent=0 // loop_footer_branch
    %8 = sbr.rel target = $region3
  $region8: #{longlrm_forward.4} parent=0 // loop_exit
    _

// kernel: longlrm_forward.5
$region0: #{longlrm_forward.5}
  #allocation0 [shape = 'u32[]', space=smem, size = 0x4, offset = 0x4, fixed_abs, tag = 'smem constant byte address 0x4 - core index']
  #allocation1 [shape = 'u32[144,128]{1,0:T(1,128)}', space=vmem, size = 0x12000, scoped, tag = 'internal scratch']
  %s0 = inlined_call_operand.vmem [shape: bf16[2,34,32], index: 0, kind: input, shape index: {}]
  %s1 = inlined_call_operand.vmem [shape: f32[1,32], index: 1, kind: input, shape index: {}]
  %s2 = inlined_call_operand.vmem [shape: f32[1,32], index: 2, kind: input, shape index: {}]
  %s3 = inlined_call_operand.vmem [shape: bf16[32,96], index: 3, kind: input, shape index: {}]
  %s4 = inlined_call_operand.vmem [shape: f32[1,96], index: 4, kind: input, shape index: {}]
  %s5 = inlined_call_operand.vmem [shape: bf16[32,32], index: 5, kind: input, shape index: {}]
  %s6 = inlined_call_operand.vmem [shape: f32[1,32], index: 6, kind: input, shape index: {}]
  %s7 = inlined_call_operand.vmem [shape: f32[1,32], index: 7, kind: input, shape index: {}]
  %s8 = inlined_call_operand.vmem [shape: f32[1,32], index: 8, kind: input, shape index: {}]
  %s9 = inlined_call_operand.vmem [shape: bf16[32,128], index: 9, kind: input, shape index: {}]
  %s10 = inlined_call_operand.vmem [shape: f32[1,128], index: 10, kind: input, shape index: {}]
  %s11 = inlined_call_operand.vmem [shape: bf16[128,32], index: 11, kind: input, shape index: {}]
  %s12 = inlined_call_operand.vmem [shape: f32[1,32], index: 12, kind: input, shape index: {}]
  %s13 = inlined_call_operand.vmem [shape: bf16[2,34,32], index: 13, kind: output, shape index: {}]
  %s14 = sld [smem:[#allocation0]]
  $region85: #{longlrm_forward.5} parent=0
    _
  %s16 = ssub.s32 1, %s14
  %s17 = scalar_select 0, %s16, %s14
  loop: start=0, step=1, limit=4
  $region2: #{longlrm_forward.5} parent=0 // loop_pre_header
    _
  $region3: #{longlrm_forward.5} parent=0 // loop_header
    %s19 = sphi 0, %s23
    %p20 = scmp.ge.s32.totalorder %s19, 4
    %s29 = sphi 0, %s31
    %s32 = sphi 0, %s29
    %s33 = sphi 0, %s32
    %s49 = sphi 0, %s33
    %s53 = sphi 0, %s53
    %s55 = sphi 0, %s53
    %s56 = sphi 0, %s55
    %s70 = sphi 0, %s56
    %s74 = sphi 0, %s74
    %s76 = sphi 0, %s74
    %s77 = sphi 0, %s76
    %s91 = sphi 0, %s77
    %s95 = sphi 0, %s95
    %s97 = sphi 0, %s95
    %s98 = sphi 0, %s97
    %s112 = sphi 0, %s98
    %s116 = sphi 0, %s116
    %s118 = sphi 0, %s116
    %s119 = sphi 0, %s118
    %s133 = sphi 0, %s119
    %s137 = sphi 0, %s137
    %s139 = sphi 0, %s137
    %s140 = sphi 0, %s139
    %s154 = sphi 0, %s140
    %s158 = sphi 0, %s158
    %s160 = sphi 0, %s158
    %s161 = sphi 0, %s160
    %s175 = sphi 0, %s161
    %s179 = sphi 0, %s179
    %s181 = sphi 0, %s179
    %s182 = sphi 0, %s181
    %s196 = sphi 0, %s182
    %s200 = sphi 0, %s200
    %s202 = sphi 0, %s200
    %s203 = sphi 0, %s202
    %s217 = sphi 0, %s203
    %s221 = sphi 0, %s221
    %s223 = sphi 0, %s221
    %s224 = sphi 0, %s223
    %s238 = sphi 0, %s224
    %s242 = sphi 0, %s242
    %s244 = sphi 0, %s242
    %s245 = sphi 0, %s244
    %s259 = sphi 0, %s245
    %s263 = sphi 0, %s263
    %s265 = sphi 0, %s263
    %s266 = sphi 0, %s265
    %s280 = sphi 0, %s266
    %s284 = sphi 0, %s284
    %s286 = sphi 0, %s284
    %s287 = sphi 0, %s286
    %s301 = sphi 0, %s287
    %s307 = sphi 0, %s309
    %s310 = sphi 0, %s307
    %s311 = sphi 0, %s310
    %s327 = sphi 0, %s311
  $region4: #{longlrm_forward.5} parent=0 // loop_header_branch
    %22 = sbr.rel (%p20) target = $region8
  $region5: #{longlrm_forward.5} parent=0 // loop_body
    %s24 = ssub.s32 %s19, 1
    %s25 = ssub.s32 %s19, 2
    %s26 = sadd.s32 %s19, 1
    %s27 = ssub.s32 %s19, %s26
    %p28 = scmp.eq.s32.totalorder %s27, 0
    %s30 = sadd.s32 %s29, 1
    %s31 = scalar_select %p28, %s29, %s30
    %p34 = pneg %p28
    %p35 = scmp.eq.s32.totalorder %s19, 1
    %p36 = por %p34, %p35
    %p37 = scmp.ne.s32.totalorder %s29, %s32
    %p38 = scmp.eq.s32.totalorder %s19, 0
    %p39 = por %p37, %p38
    %p40 = scmp.ne.s32.totalorder %s29, %s32
    %p41 = scmp.eq.s32.totalorder %s24, 1
    %p42 = por %p40, %p41
    %p43 = scmp.ne.s32.totalorder %s32, %s33
    %p44 = scmp.eq.s32.totalorder %s24, 0
    %p45 = por %p43, %p44
    %p46 = scmp.ne.s32.totalorder %s32, %s33
    %p47 = scmp.eq.s32.totalorder %s25, 1
    %p48 = por %p46, %p47
    %p50 = scmp.ne.s32.totalorder %s33, %s49
    %p51 = scmp.eq.s32.totalorder %s25, 0
    %p52 = por %p50, %p51
    %s54 = sadd.s32 %s53, 1
    %p57 = scmp.eq.s32.totalorder %s19, 1
    %p58 = scmp.ne.s32.totalorder %s53, %s55
    %p59 = scmp.eq.s32.totalorder %s19, 0
    %p60 = por %p58, %p59
    %p61 = scmp.ne.s32.totalorder %s53, %s55
    %p62 = scmp.eq.s32.totalorder %s24, 1
    %p63 = por %p61, %p62
    %p64 = scmp.ne.s32.totalorder %s55, %s56
    %p65 = scmp.eq.s32.totalorder %s24, 0
    %p66 = por %p64, %p65
    %p67 = scmp.ne.s32.totalorder %s55, %s56
    %p68 = scmp.eq.s32.totalorder %s25, 1
    %p69 = por %p67, %p68
    %p71 = scmp.ne.s32.totalorder %s56, %s70
    %p72 = scmp.eq.s32.totalorder %s25, 0
    %p73 = por %p71, %p72
    %s75 = sadd.s32 %s74, 1
    %p78 = scmp.eq.s32.totalorder %s19, 1
    %p79 = scmp.ne.s32.totalorder %s74, %s76
    %p80 = scmp.eq.s32.totalorder %s19, 0
    %p81 = por %p79, %p80
    %p82 = scmp.ne.s32.totalorder %s74, %s76
    %p83 = scmp.eq.s32.totalorder %s24, 1
    %p84 = por %p82, %p83
    %p85 = scmp.ne.s32.totalorder %s76, %s77
    %p86 = scmp.eq.s32.totalorder %s24, 0
    %p87 = por %p85, %p86
    %p88 = scmp.ne.s32.totalorder %s76, %s77
    %p89 = scmp.eq.s32.totalorder %s25, 1
    %p90 = por %p88, %p89
    %p92 = scmp.ne.s32.totalorder %s77, %s91
    %p93 = scmp.eq.s32.totalorder %s25, 0
    %p94 = por %p92, %p93
    %s96 = sadd.s32 %s95, 1
    %p99 = scmp.eq.s32.totalorder %s19, 1
    %p100 = scmp.ne.s32.totalorder %s95, %s97
    %p101 = scmp.eq.s32.totalorder %s19, 0
    %p102 = por %p100, %p101
    %p103 = scmp.ne.s32.totalorder %s95, %s97
    %p104 = scmp.eq.s32.totalorder %s24, 1
    %p105 = por %p103, %p104
    %p106 = scmp.ne.s32.totalorder %s97, %s98
    %p107 = scmp.eq.s32.totalorder %s24, 0
    %p108 = por %p106, %p107
    %p109 = scmp.ne.s32.totalorder %s97, %s98
    %p110 = scmp.eq.s32.totalorder %s25, 1
    %p111 = por %p109, %p110
    %p113 = scmp.ne.s32.totalorder %s98, %s112
    %p114 = scmp.eq.s32.totalorder %s25, 0
    %p115 = por %p113, %p114
    %s117 = sadd.s32 %s116, 1
    %p120 = scmp.eq.s32.totalorder %s19, 1
    %p121 = scmp.ne.s32.totalorder %s116, %s118
    %p122 = scmp.eq.s32.totalorder %s19, 0
    %p123 = por %p121, %p122
    %p124 = scmp.ne.s32.totalorder %s116, %s118
    %p125 = scmp.eq.s32.totalorder %s24, 1
    %p126 = por %p124, %p125
    %p127 = scmp.ne.s32.totalorder %s118, %s119
    %p128 = scmp.eq.s32.totalorder %s24, 0
    %p129 = por %p127, %p128
    %p130 = scmp.ne.s32.totalorder %s118, %s119
    %p131 = scmp.eq.s32.totalorder %s25, 1
    %p132 = por %p130, %p131
    %p134 = scmp.ne.s32.totalorder %s119, %s133
    %p135 = scmp.eq.s32.totalorder %s25, 0
    %p136 = por %p134, %p135
    %s138 = sadd.s32 %s137, 1
    %p141 = scmp.eq.s32.totalorder %s19, 1
    %p142 = scmp.ne.s32.totalorder %s137, %s139
    %p143 = scmp.eq.s32.totalorder %s19, 0
    %p144 = por %p142, %p143
    %p145 = scmp.ne.s32.totalorder %s137, %s139
    %p146 = scmp.eq.s32.totalorder %s24, 1
    %p147 = por %p145, %p146
    %p148 = scmp.ne.s32.totalorder %s139, %s140
    %p149 = scmp.eq.s32.totalorder %s24, 0
    %p150 = por %p148, %p149
    %p151 = scmp.ne.s32.totalorder %s139, %s140
    %p152 = scmp.eq.s32.totalorder %s25, 1
    %p153 = por %p151, %p152
    %p155 = scmp.ne.s32.totalorder %s140, %s154
    %p156 = scmp.eq.s32.totalorder %s25, 0
    %p157 = por %p155, %p156
    %s159 = sadd.s32 %s158, 1
    %p162 = scmp.eq.s32.totalorder %s19, 1
    %p163 = scmp.ne.s32.totalorder %s158, %s160
    %p164 = scmp.eq.s32.totalorder %s19, 0
    %p165 = por %p163, %p164
    %p166 = scmp.ne.s32.totalorder %s158, %s160
    %p167 = scmp.eq.s32.totalorder %s24, 1
    %p168 = por %p166, %p167
    %p169 = scmp.ne.s32.totalorder %s160, %s161
    %p170 = scmp.eq.s32.totalorder %s24, 0
    %p171 = por %p169, %p170
    %p172 = scmp.ne.s32.totalorder %s160, %s161
    %p173 = scmp.eq.s32.totalorder %s25, 1
    %p174 = por %p172, %p173
    %p176 = scmp.ne.s32.totalorder %s161, %s175
    %p177 = scmp.eq.s32.totalorder %s25, 0
    %p178 = por %p176, %p177
    %s180 = sadd.s32 %s179, 1
    %p183 = scmp.eq.s32.totalorder %s19, 1
    %p184 = scmp.ne.s32.totalorder %s179, %s181
    %p185 = scmp.eq.s32.totalorder %s19, 0
    %p186 = por %p184, %p185
    %p187 = scmp.ne.s32.totalorder %s179, %s181
    %p188 = scmp.eq.s32.totalorder %s24, 1
    %p189 = por %p187, %p188
    %p190 = scmp.ne.s32.totalorder %s181, %s182
    %p191 = scmp.eq.s32.totalorder %s24, 0
    %p192 = por %p190, %p191
    %p193 = scmp.ne.s32.totalorder %s181, %s182
    %p194 = scmp.eq.s32.totalorder %s25, 1
    %p195 = por %p193, %p194
    %p197 = scmp.ne.s32.totalorder %s182, %s196
    %p198 = scmp.eq.s32.totalorder %s25, 0
    %p199 = por %p197, %p198
    %s201 = sadd.s32 %s200, 1
    %p204 = scmp.eq.s32.totalorder %s19, 1
    %p205 = scmp.ne.s32.totalorder %s200, %s202
    %p206 = scmp.eq.s32.totalorder %s19, 0
    %p207 = por %p205, %p206
    %p208 = scmp.ne.s32.totalorder %s200, %s202
    %p209 = scmp.eq.s32.totalorder %s24, 1
    %p210 = por %p208, %p209
    %p211 = scmp.ne.s32.totalorder %s202, %s203
    %p212 = scmp.eq.s32.totalorder %s24, 0
    %p213 = por %p211, %p212
    %p214 = scmp.ne.s32.totalorder %s202, %s203
    %p215 = scmp.eq.s32.totalorder %s25, 1
    %p216 = por %p214, %p215
    %p218 = scmp.ne.s32.totalorder %s203, %s217
    %p219 = scmp.eq.s32.totalorder %s25, 0
    %p220 = por %p218, %p219
    %s222 = sadd.s32 %s221, 1
    %p225 = scmp.eq.s32.totalorder %s19, 1
    %p226 = scmp.ne.s32.totalorder %s221, %s223
    %p227 = scmp.eq.s32.totalorder %s19, 0
    %p228 = por %p226, %p227
    %p229 = scmp.ne.s32.totalorder %s221, %s223
    %p230 = scmp.eq.s32.totalorder %s24, 1
    %p231 = por %p229, %p230
    %p232 = scmp.ne.s32.totalorder %s223, %s224
    %p233 = scmp.eq.s32.totalorder %s24, 0
    %p234 = por %p232, %p233
    %p235 = scmp.ne.s32.totalorder %s223, %s224
    %p236 = scmp.eq.s32.totalorder %s25, 1
    %p237 = por %p235, %p236
    %p239 = scmp.ne.s32.totalorder %s224, %s238
    %p240 = scmp.eq.s32.totalorder %s25, 0
    %p241 = por %p239, %p240
    %s243 = sadd.s32 %s242, 1
    %p246 = scmp.eq.s32.totalorder %s19, 1
    %p247 = scmp.ne.s32.totalorder %s242, %s244
    %p248 = scmp.eq.s32.totalorder %s19, 0
    %p249 = por %p247, %p248
    %p250 = scmp.ne.s32.totalorder %s242, %s244
    %p251 = scmp.eq.s32.totalorder %s24, 1
    %p252 = por %p250, %p251
    %p253 = scmp.ne.s32.totalorder %s244, %s245
    %p254 = scmp.eq.s32.totalorder %s24, 0
    %p255 = por %p253, %p254
    %p256 = scmp.ne.s32.totalorder %s244, %s245
    %p257 = scmp.eq.s32.totalorder %s25, 1
    %p258 = por %p256, %p257
    %p260 = scmp.ne.s32.totalorder %s245, %s259
    %p261 = scmp.eq.s32.totalorder %s25, 0
    %p262 = por %p260, %p261
    %s264 = sadd.s32 %s263, 1
    %p267 = scmp.eq.s32.totalorder %s19, 1
    %p268 = scmp.ne.s32.totalorder %s263, %s265
    %p269 = scmp.eq.s32.totalorder %s19, 0
    %p270 = por %p268, %p269
    %p271 = scmp.ne.s32.totalorder %s263, %s265
    %p272 = scmp.eq.s32.totalorder %s24, 1
    %p273 = por %p271, %p272
    %p274 = scmp.ne.s32.totalorder %s265, %s266
    %p275 = scmp.eq.s32.totalorder %s24, 0
    %p276 = por %p274, %p275
    %p277 = scmp.ne.s32.totalorder %s265, %s266
    %p278 = scmp.eq.s32.totalorder %s25, 1
    %p279 = por %p277, %p278
    %p281 = scmp.ne.s32.totalorder %s266, %s280
    %p282 = scmp.eq.s32.totalorder %s25, 0
    %p283 = por %p281, %p282
    %s285 = sadd.s32 %s284, 1
    %p288 = scmp.eq.s32.totalorder %s19, 1
    %p289 = scmp.ne.s32.totalorder %s284, %s286
    %p290 = scmp.eq.s32.totalorder %s19, 0
    %p291 = por %p289, %p290
    %p292 = scmp.ne.s32.totalorder %s284, %s286
    %p293 = scmp.eq.s32.totalorder %s24, 1
    %p294 = por %p292, %p293
    %p295 = scmp.ne.s32.totalorder %s286, %s287
    %p296 = scmp.eq.s32.totalorder %s24, 0
    %p297 = por %p295, %p296
    %p298 = scmp.ne.s32.totalorder %s286, %s287
    %p299 = scmp.eq.s32.totalorder %s25, 1
    %p300 = por %p298, %p299
    %p302 = scmp.ne.s32.totalorder %s287, %s301
    %p303 = scmp.eq.s32.totalorder %s25, 0
    %p304 = por %p302, %p303
    %s305 = ssub.s32 %s19, %s26
    %p306 = scmp.eq.s32.totalorder %s305, 0
    %s308 = sadd.s32 %s307, 1
    %s309 = scalar_select %p306, %s307, %s308
    %p312 = pneg %p306
    %p313 = scmp.eq.s32.totalorder %s19, 1
    %p314 = por %p312, %p313
    %p315 = scmp.ne.s32.totalorder %s307, %s310
    %p316 = scmp.eq.s32.totalorder %s19, 0
    %p317 = por %p315, %p316
    %p318 = scmp.ne.s32.totalorder %s307, %s310
    %p319 = scmp.eq.s32.totalorder %s24, 1
    %p320 = por %p318, %p319
    %p321 = scmp.ne.s32.totalorder %s310, %s311
    %p322 = scmp.eq.s32.totalorder %s24, 0
    %p323 = por %p321, %p322
    %p324 = scmp.ne.s32.totalorder %s310, %s311
    %p325 = scmp.eq.s32.totalorder %s25, 1
    %p326 = por %p324, %p325
    %p328 = scmp.ne.s32.totalorder %s311, %s327
    %p329 = scmp.eq.s32.totalorder %s25, 0
    %p330 = por %p328, %p329
    %p331 = scmp.le.s32.totalorder 1, %s19
    %p332 = scmp.lt.s32.totalorder %s19, 3
    %p333 = pnand %p331, %p332
    %p334 = pneg %p333
    // Predicated region
    $region9: #{longlrm_forward.5} parent=5 // pred_check
      _
    $region10: #{longlrm_forward.5} parent=5 // pred_check_branch
      %336 = sbr.rel (%p333) target = $region12
    $region11: #{longlrm_forward.5} parent=5 // pred_region
      %s337 = ssub.s32 %s19, 1
      // Predicated region
      $region13: #{longlrm_forward.5} parent=11 // pred_check
        %p338 = pneg %p66
      $region14: #{longlrm_forward.5} parent=11 // pred_check_branch
        %340 = sbr.rel (%p338) target = $region16
      $region15: #{longlrm_forward.5} parent=11 // pred_region
        _
      $region16: #{longlrm_forward.5} parent=11 // pred_fallthru
        _
      // Predicated region
      $region17: #{longlrm_forward.5} parent=11 // pred_check
        %p341 = pneg %p87
      $region18: #{longlrm_forward.5} parent=11 // pred_check_branch
        %343 = sbr.rel (%p341) target = $region20
      $region19: #{longlrm_forward.5} parent=11 // pred_region
        _
      $region20: #{longlrm_forward.5} parent=11 // pred_fallthru
        _
      // Predicated region
      $region21: #{longlrm_forward.5} parent=11 // pred_check
        %p344 = pneg %p108
      $region22: #{longlrm_forward.5} parent=11 // pred_check_branch
        %346 = sbr.rel (%p344) target = $region24
      $region23: #{longlrm_forward.5} parent=11 // pred_region
        _
      $region24: #{longlrm_forward.5} parent=11 // pred_fallthru
        _
      // Predicated region
      $region25: #{longlrm_forward.5} parent=11 // pred_check
        %p347 = pneg %p129
      $region26: #{longlrm_forward.5} parent=11 // pred_check_branch
        %349 = sbr.rel (%p347) target = $region28
      $region27: #{longlrm_forward.5} parent=11 // pred_region
        _
      $region28: #{longlrm_forward.5} parent=11 // pred_fallthru
        _
      // Predicated region
      $region29: #{longlrm_forward.5} parent=11 // pred_check
        %p350 = pneg %p150
      $region30: #{longlrm_forward.5} parent=11 // pred_check_branch
        %352 = sbr.rel (%p350) target = $region32
      $region31: #{longlrm_forward.5} parent=11 // pred_region
        _
      $region32: #{longlrm_forward.5} parent=11 // pred_fallthru
        _
      // Predicated region
      $region33: #{longlrm_forward.5} parent=11 // pred_check
        %p353 = pneg %p171
      $region34: #{longlrm_forward.5} parent=11 // pred_check_branch
        %355 = sbr.rel (%p353) target = $region36
      $region35: #{longlrm_forward.5} parent=11 // pred_region
        _
      $region36: #{longlrm_forward.5} parent=11 // pred_fallthru
        _
      // Predicated region
      $region37: #{longlrm_forward.5} parent=11 // pred_check
        %p356 = pneg %p192
      $region38: #{longlrm_forward.5} parent=11 // pred_check_branch
        %358 = sbr.rel (%p356) target = $region40
      $region39: #{longlrm_forward.5} parent=11 // pred_region
        _
      $region40: #{longlrm_forward.5} parent=11 // pred_fallthru
        _
      // Predicated region
      $region41: #{longlrm_forward.5} parent=11 // pred_check
        %p359 = pneg %p213
      $region42: #{longlrm_forward.5} parent=11 // pred_check_branch
        %361 = sbr.rel (%p359) target = $region44
      $region43: #{longlrm_forward.5} parent=11 // pred_region
        _
      $region44: #{longlrm_forward.5} parent=11 // pred_fallthru
        _
      // Predicated region
      $region45: #{longlrm_forward.5} parent=11 // pred_check
        %p362 = pneg %p234
      $region46: #{longlrm_forward.5} parent=11 // pred_check_branch
        %364 = sbr.rel (%p362) target = $region48
      $region47: #{longlrm_forward.5} parent=11 // pred_region
        _
      $region48: #{longlrm_forward.5} parent=11 // pred_fallthru
        _
      // Predicated region
      $region49: #{longlrm_forward.5} parent=11 // pred_check
        %p365 = pneg %p255
      $region50: #{longlrm_forward.5} parent=11 // pred_check_branch
        %367 = sbr.rel (%p365) target = $region52
      $region51: #{longlrm_forward.5} parent=11 // pred_region
        _
      $region52: #{longlrm_forward.5} parent=11 // pred_fallthru
        _
      // Predicated region
      $region53: #{longlrm_forward.5} parent=11 // pred_check
        %p368 = pneg %p276
      $region54: #{longlrm_forward.5} parent=11 // pred_check_branch
        %370 = sbr.rel (%p368) target = $region56
      $region55: #{longlrm_forward.5} parent=11 // pred_region
        _
      $region56: #{longlrm_forward.5} parent=11 // pred_fallthru
        _
      // Predicated region
      $region57: #{longlrm_forward.5} parent=11 // pred_check
        %p371 = pneg %p297
      $region58: #{longlrm_forward.5} parent=11 // pred_check_branch
        %373 = sbr.rel (%p371) target = $region60
      $region59: #{longlrm_forward.5} parent=11 // pred_region
        _
      $region60: #{longlrm_forward.5} parent=11 // pred_fallthru
        _
    $region12: #{longlrm_forward.5} parent=5 // pred_fallthru
      _
    %p374 = scmp.lt.s32.totalorder %s19, 2
    // Predicated region
    $region61: #{longlrm_forward.5} parent=5 // pred_check
      %p375 = pneg %p374
    $region62: #{longlrm_forward.5} parent=5 // pred_check_branch
      %377 = sbr.rel (%p375) target = $region64
    $region63: #{longlrm_forward.5} parent=5 // pred_region
      // Predicated region
      $region65: #{longlrm_forward.5} parent=63 // pred_check
        %p378 = pneg %p39
      $region66: #{longlrm_forward.5} parent=63 // pred_check_branch
        %380 = sbr.rel (%p378) target = $region68
      $region67: #{longlrm_forward.5} parent=63 // pred_region
        %p381 = scmp.lt.s32.totalorder %s19, 1
        %s382 = scalar_select %p381, %s19, 1
        %s383 = smul.addr %s382, 5
        %s384 = smul.addr %s383, 4
        %s385 = scalar_lea.vmem %s0, %s384
      $region68: #{longlrm_forward.5} parent=63 // pred_fallthru
        _
    $region64: #{longlrm_forward.5} parent=5 // pred_fallthru
      _
    %p386 = scmp.le.s32.totalorder 1, %s19
    %p387 = scmp.lt.s32.totalorder %s19, 3
    %p388 = pnand %p386, %p387
    %p389 = pneg %p388
    // Predicated region
    $region69: #{longlrm_forward.5} parent=5 // pred_check
      _
    $region70: #{longlrm_forward.5} parent=5 // pred_check_branch
      %391 = sbr.rel (%p388) target = $region72
    $region71: #{longlrm_forward.5} parent=5 // pred_region
      %s392 = ssub.s32 %s19, 1
      %p393 = scmp.lt.s32.totalorder %s24, 1
      %s394 = scalar_select %p393, %s24, 1
      %s395 = smul.addr %s394, 5
      %s396 = smul.addr %s395, 4
      %s397 = scalar_lea.vmem %s0, %s396
      %p398 = pneg %p45
      %p399 = pneg %p42
      %p400 = pneg %p66
      %p401 = pneg %p63
      %p402 = pneg %p87
      %p403 = pneg %p84
      %p404 = pneg %p108
      %p405 = pneg %p105
      %p406 = pneg %p129
      %p407 = pneg %p126
      %p408 = pneg %p150
      %p409 = pneg %p147
      %p410 = pneg %p171
      %p411 = pneg %p168
      %p412 = pneg %p192
      %p413 = pneg %p189
      %p414 = pneg %p213
      %p415 = pneg %p210
      %p416 = pneg %p234
      %p417 = pneg %p231
      %p418 = pneg %p255
      %p419 = pneg %p252
      %p420 = pneg %p276
      %p421 = pneg %p273
      %p422 = pneg %p297
      %p423 = pneg %p294
      %p424 = pneg %p323
      %p425 = pneg %p320
      %p426 = scmp.lt.s32.totalorder %s24, 1
      %s427 = scalar_select %p426, %s24, 1
      %s428 = smul.addr %s427, 5
      %s429 = smul.addr %s428, 4
      %s430 = scalar_lea.vmem %s13, %s429
      %p431 = scmp.lt.s32.totalorder %s24, 1
      %s432 = scalar_select %p431, %s24, 1
      %s433 = smul.addr %s432, 5
      %s434 = smul.addr %s433, 4
      %s435 = scalar_lea.vmem %s0, %s434
      %p436 = scmp.lt.s32.totalorder %s24, 1
      %s437 = scalar_select %p436, %s24, 1
      %s438 = smul.addr %s437, 5
      %s439 = smul.addr %s438, 4
      %s440 = scalar_lea.vmem %s13, %s439
      %v442 = vld [vmem:[%s435] sm:$0xf]
      %v443 = vld [vmem:[%s435 + $0x4] sm:$0xf]
      %v444 = vld [vmem:[%s435 + $0x8] sm:$0xf]
      %v445 = vld [vmem:[%s435 + $0xc] sm:$0xf]
      %v446 = vld [vmem:[%s435 + $0x10] sm:$0x1]
      %v447 = vunpack.c.l.bf16 %v442
      %v448 = vunpack.c.l.bf16 %v443
      %v449 = vunpack.c.l.bf16 %v444
      %v450 = vunpack.c.l.bf16 %v445
      %v451 = vunpack.c.l.bf16 %v446
      %v452 = vld [vmem:[%s1] sm:$0x1]
      %v453 = vld [vmem:[%s2] sm:$0x1]
      %vm454 = vcmask 261120
      %v455 = vsel %vm454, %v447, 0.0
      %456 = vadd.xlane.f32.xlu0 %v455
      %v457 = vpop.xlane.xlu0 %456
      %v458 = vsel %vm454, %v448, 0.0
      %459 = vadd.xlane.f32.xlu0 %v458
      %v460 = vpop.xlane.xlu0 %459
      %v461 = vsel %vm454, %v449, 0.0
      %462 = vadd.xlane.f32.xlu0 %v461
      %v463 = vpop.xlane.xlu0 %462
      %v464 = vsel %vm454, %v450, 0.0
      %465 = vadd.xlane.f32.xlu0 %v464
      %v466 = vpop.xlane.xlu0 %465
      %vm467 = vcmask 254976
      %v468 = vsel %vm467, %v451, 0.0
      %469 = vadd.xlane.f32.xlu0 %v468
      %v470 = vpop.xlane.xlu0 %469
      %v471 = vrcp.pop 32.0
      %v472 = vmul.f32 %v457, %v471
      %v473 = vmul.f32 %v460, %v471
      %v474 = vmul.f32 %v463, %v471
      %v475 = vmul.f32 %v466, %v471
      %v476 = vmul.f32 %v470, %v471
      %v477 = vsub.f32 %v447, %v472
      %v478 = vsub.f32 %v448, %v473
      %v479 = vsub.f32 %v449, %v474
      %v480 = vsub.f32 %v450, %v475
      %v481 = vsub.f32 %v451, %v476
      %v482 = vmul.f32 %v477, %v477
      %v483 = vmul.f32 %v478, %v478
      %v484 = vmul.f32 %v479, %v479
      %v485 = vmul.f32 %v480, %v480
      %v486 = vmul.f32 %v481, %v481
      %v487 = vsel %vm454, %v482, 0.0
      %488 = vadd.xlane.f32.xlu0 %v487
      %v489 = vpop.xlane.xlu0 %488
      %v490 = vsel %vm454, %v483, 0.0
      %491 = vadd.xlane.f32.xlu0 %v490
      %v492 = vpop.xlane.xlu0 %491
      %v493 = vsel %vm454, %v484, 0.0
      %494 = vadd.xlane.f32.xlu0 %v493
      %v495 = vpop.xlane.xlu0 %494
      %v496 = vsel %vm454, %v485, 0.0
      %497 = vadd.xlane.f32.xlu0 %v496
      %v498 = vpop.xlane.xlu0 %497
      %v499 = vsel %vm467, %v486, 0.0
      %500 = vadd.xlane.f32.xlu0 %v499
      %v501 = vpop.xlane.xlu0 %500
      %v502 = vmul.f32 %v489, %v471
      %v503 = vmul.f32 %v492, %v471
      %v504 = vmul.f32 %v495, %v471
      %v505 = vmul.f32 %v498, %v471
      %v506 = vmul.f32 %v501, %v471
      %v507 = vadd.f32 %v502, 1e-05
      %v508 = vadd.f32 %v503, 1e-05
      %v509 = vadd.f32 %v504, 1e-05
      %v510 = vadd.f32 %v505, 1e-05
      %v511 = vadd.f32 %v506, 1e-05
      %v512 = vrsqrt.pop %v507
      %v513 = vrsqrt.pop %v508
      %v514 = vrsqrt.pop %v509
      %v515 = vrsqrt.pop %v510
      %v516 = vrsqrt.pop %v511
      %v517 = vmul.f32 %v477, %v512
      %v518 = vmul.f32 %v478, %v513
      %v519 = vmul.f32 %v479, %v514
      %v520 = vmul.f32 %v480, %v515
      %v521 = vmul.f32 %v481, %v516
      %v523 = vlaneseq
      %v524 = vshrl.u32 %v523, 7
      %v525 = vsub.s32 0, %v524
      %v526 = vrot.slane %v452, %v525
      %v528 = vmul.f32 %v517, %v526
      %v529 = vmul.f32 %v518, %v526
      %v530 = vmul.f32 %v519, %v526
      %v531 = vmul.f32 %v520, %v526
      %v532 = vmul.f32 %v521, %v526
      %v534 = vlaneseq
      %v535 = vshrl.u32 %v534, 7
      %v536 = vsub.s32 0, %v535
      %v537 = vrot.slane %v453, %v536
      %v539 = vadd.f32 %v528, %v537
      %v540 = vadd.f32 %v529, %v537
      %v541 = vadd.f32 %v530, %v537
      %v542 = vadd.f32 %v531, %v537
      %v543 = vadd.f32 %v532, %v537
      %v544 = vpack.c.bf16 %v540, %v539
      %v545 = vpack.c.bf16 %v542, %v541
      %v546 = vpack.c.bf16 %v543, %v543
      %v547 = vld [vmem:[%s3] sm:$0xf]
      %v548 = vld [vmem:[%s3 + $0x4] sm:$0xf]
      %v549 = vld [vmem:[%s3 + $0x8] sm:$0xf]
      %v550 = vld [vmem:[%s3 + $0xc] sm:$0xf]
      %v551 = vld [vmem:[%s4] sm:$0x1]
      %v553 = vlaneseq
      %v554 = vshrl.u32 %v553, 7
      %v555 = vsub.s32 0, %v554
      %v556 = vrot.slane %v551, %v555
      %v562 = vunpack.c.l.b16 %v547
      %v563 = vunpack.c.l.b16 %v548
      %v564 = vunpack.c.l.b16 %v549
      %v565 = vunpack.c.l.b16 %v550
      %v566 = vpack.c.b16 %v563, %v562
      %v567 = vpack.c.b16 %v565, %v564
      %v571 = vsel %vm454, %v544, 0
      %v574 = vsel %vm454, %v545, 0
      %v577 = vsel %vm454, %v546, 0
      %579 = vmatprep.subr.bf16.mxu0 0
      %580 = vmatpush1.bf16.msra.mxu0 %v566
      %581 = vmatprep.subr.bf16.mxu0 0
      %582 = vmatpush1.bf16.msra.mxu0 %v567
      %583 = vmatprep.subr.bf16.mxu0 0
      %584 = vmatpush1.bf16.msra.mxu0 0
      %585 = vmatprep.subr.bf16.mxu0 0
      %586 = vmatpush1.bf16.msra.mxu0 0
      %587 = vmatprep.subr.bf16.mxu0 0
      %588 = vmatpush1.bf16.msra.mxu0 0
      %589 = vmatprep.subr.bf16.mxu0 0
      %590 = vmatpush1.bf16.msra.mxu0 0
      %591 = vmatprep.subr.bf16.mxu0 0
      %592 = vmatpush1.bf16.msra.mxu0 0
      %593 = vmatprep.subr.bf16.mxu0 0
      %594 = vmatpush1.bf16.msra.mxu0 0
      %595 = vmatprep.subr.bf16.mxu0 0
      %596 = vmatpush1.bf16.msra.mxu0 0
      %597 = vmatprep.subr.bf16.mxu0 0
      %598 = vmatpush1.bf16.msra.mxu0 0
      %599 = vmatprep.subr.bf16.mxu0 0
      %600 = vmatpush1.bf16.msra.mxu0 0
      %601 = vmatprep.subr.bf16.mxu0 0
      %602 = vmatpush1.bf16.msra.mxu0 0
      %603 = vmatprep.subr.bf16.mxu0 0
      %604 = vmatpush1.bf16.msra.mxu0 0
      %605 = vmatprep.subr.bf16.mxu0 0
      %606 = vmatpush1.bf16.msra.mxu0 0
      %607 = vmatprep.subr.bf16.mxu0 0
      %608 = vmatpush1.bf16.msra.mxu0 0
      %609 = vmatprep.subr.bf16.mxu0 0
      %610 = vmatpush1.bf16.msra.mxu0 0
      %611 = vmatprep.mubr.bf16.mxu0 0
      %612 = vmatmul.mubr.bf16.gmra.mrb[0].mxu0 %v571
      %v613 = vpop.f32.mrb[0].mxu0
      %v614 = vadd.f32 %v556, %v613
      %v615 = vpop.f32.mrb[0].mxu0
      %v616 = vpop.f32.mrb[0].mxu0
      %v617 = vadd.f32 %v556, %v616
      %v618 = vpop.f32.mrb[0].mxu0
      %619 = vmatprep.mubr.bf16.mxu0 0
      %620 = vmatmul.mubr.bf16.gmra.mrb[0].mxu0 %v574
      %v621 = vpop.f32.mrb[0].mxu0
      %v622 = vadd.f32 %v556, %v621
      %v623 = vpop.f32.mrb[0].mxu0
      %v624 = vpop.f32.mrb[0].mxu0
      %v625 = vadd.f32 %v556, %v624
      %v626 = vpop.f32.mrb[0].mxu0
      %627 = vmatprep.mubr.bf16.mxu0 0
      %628 = vmatmul.mubr.bf16.gmra.mrb[0].mxu0 %v577
      %v629 = vpop.f32.mrb[0].mxu0
      %v630 = vadd.f32 %v556, %v629
      %v631 = vpop.f32.mrb[0].mxu0
      %v632 = vpop.f32.mrb[0].mxu0
      %v633 = vpop.f32.mrb[0].mxu0
      %634 = vdwg.mxu0
      %640 = vrot.lane.b32.xlu0 %v614, 96
      %v641 = vpop.permute.xlu0 %640
      %642 = vrot.lane.b32.xlu0 %v617, 96
      %v643 = vpop.permute.xlu0 %642
      %644 = vrot.lane.b32.xlu0 %v622, 96
      %v645 = vpop.permute.xlu0 %644
      %646 = vrot.lane.b32.xlu0 %v625, 96
      %v647 = vpop.permute.xlu0 %646
      %648 = vrot.lane.b32.xlu0 %v630, 96
      %v649 = vpop.permute.xlu0 %648
      %vm650 = vcmask 64512
      %v651 = vsel %vm650, %v614, 0
      %v653 = vsel %vm650, %v617, 0
      %v655 = vsel %vm650, %v622, 0
      %v657 = vsel %vm650, %v625, 0
      %v659 = vsel %vm650, %v630, 0
      %v661 = vsel %vm650, %v641, 0
      %v663 = vsel %vm650, %v643, 0
      %v665 = vsel %vm650, %v645, 0
      %v667 = vsel %vm650, %v647, 0
      %v669 = vsel %vm650, %v649, 0
      %671 = vmatprep.subr.mxu0 0.0
      %672 = vmatpush1.xpose.msra.mxu0 %v661
      %673 = vmatprep.subr.mxu0 0.0
      %674 = vmatpush1.xpose.msra.mxu0 %v663
      %675 = vmatprep.subr.mxu0 0.0
      %676 = vmatpush1.xpose.msra.mxu0 %v665
      %677 = vmatprep.subr.mxu0 0.0
      %678 = vmatpush1.xpose.msra.mxu0 %v667
      %679 = vmatprep.subr.mxu0 0.0
      %680 = vmatpush1.xpose.msra.mxu0 %v669
      %681 = vmatprep.subr.mxu0 0.0
      %682 = vmatpush1.xpose.msra.mxu0 0.0
      %683 = vmatprep.subr.mxu0 0.0
      %684 = vmatpush1.xpose.msra.mxu0 0.0
      %685 = vmatprep.subr.mxu0 0.0
      %686 = vmatpush1.xpose.msra.mxu0 0.0
      %687 = vmatprep.subr.mxu0 0.0
      %688 = vmatpush1.xpose.msra.mxu0 0.0
      %689 = vmatprep.subr.mxu0 0.0
      %690 = vmatpush1.xpose.msra.mxu0 0.0
      %691 = vmatprep.subr.mxu0 0.0
      %692 = vmatpush1.xpose.msra.mxu0 0.0
      %693 = vmatprep.subr.mxu0 0.0
      %694 = vmatpush1.xpose.msra.mxu0 0.0
      %695 = vmatprep.subr.mxu0 0.0
      %696 = vmatpush1.xpose.msra.mxu0 0.0
      %697 = vmatprep.subr.mxu0 0.0
      %698 = vmatpush1.xpose.msra.mxu0 0.0
      %699 = vmatprep.subr.mxu0 0.0
      %700 = vmatpush1.xpose.msra.mxu0 0.0
      %701 = vmatprep.subr.mxu0 0.0
      %702 = vmatpush1.xpose.msra.mxu0 0.0
      %703 = vmatprep.subr.mxu0 0.0
      %704 = vmatpush1.xpose.msra.mxu0 0.0
      %705 = vmatprep.subr.mxu0 0.0
      %706 = vmatpush1.xpose.msra.mxu0 0.0
      %707 = vmatprep.subr.mxu0 0.0
      %708 = vmatpush1.xpose.msra.mxu0 0.0
      %709 = vmatprep.subr.mxu0 0.0
      %710 = vmatpush1.xpose.msra.mxu0 0.0
      %711 = vmatprep.subr.mxu0 0.0
      %712 = vmatpush1.xpose.msra.mxu0 0.0
      %713 = vmatprep.subr.mxu0 0.0
      %714 = vmatpush1.xpose.msra.mxu0 0.0
      %715 = vmatprep.subr.mxu0 0.0
      %716 = vmatpush1.xpose.msra.mxu0 0.0
      %717 = vmatprep.subr.mxu0 0.0
      %718 = vmatpush1.xpose.msra.mxu0 0.0
      %719 = vmatprep.subr.mxu0 0.0
      %720 = vmatpush1.xpose.msra.mxu0 0.0
      %721 = vmatprep.subr.mxu0 0.0
      %722 = vmatpush1.xpose.msra.mxu0 0.0
      %723 = vmatprep.subr.mxu0 0.0
      %724 = vmatpush1.xpose.msra.mxu0 0.0
      %725 = vmatprep.subr.mxu0 0.0
      %726 = vmatpush1.xpose.msra.mxu0 0.0
      %727 = vmatprep.subr.mxu0 0.0
      %728 = vmatpush1.xpose.msra.mxu0 0.0
      %729 = vmatprep.subr.mxu0 0.0
      %730 = vmatpush1.xpose.msra.mxu0 0.0
      %731 = vmatprep.subr.mxu0 0.0
      %732 = vmatpush1.xpose.msra.mxu0 0.0
      %733 = vmatprep.subr.mxu0 0.0
      %734 = vmatpush1.xpose.msra.mxu0 0.0
      %735 = vmatprep.mubr.f32.mxu0 0.0
      %736 = vmatmul.mubr.f32.gmra.mrb[0].mxu0 %v651
      %v737 = vpop.f32.mrb[0].mxu0
      %v738 = vadd.f32 0.0, %v737
      %v739 = vpop.f32.mrb[0].mxu0
      %740 = vmatprep.mubr.f32.mxu0 0.0
      %741 = vmatmul.mubr.f32.gmra.mrb[0].mxu0 %v653
      %v742 = vpop.f32.mrb[0].mxu0
      %v743 = vadd.f32 0.0, %v742
      %v744 = vpop.f32.mrb[0].mxu0
      %745 = vmatprep.mubr.f32.mxu0 0.0
      %746 = vmatmul.mubr.f32.gmra.mrb[0].mxu0 %v655
      %v747 = vpop.f32.mrb[0].mxu0
      %v748 = vadd.f32 0.0, %v747
      %v749 = vpop.f32.mrb[0].mxu0
      %750 = vmatprep.mubr.f32.mxu0 0.0
      %751 = vmatmul.mubr.f32.gmra.mrb[0].mxu0 %v657
      %v752 = vpop.f32.mrb[0].mxu0
      %v753 = vadd.f32 0.0, %v752
      %v754 = vpop.f32.mrb[0].mxu0
      %755 = vmatprep.mubr.f32.mxu0 0.0
      %756 = vmatmul.mubr.f32.gmra.mrb[0].mxu0 %v659
      %v757 = vpop.f32.mrb[0].mxu0
      %v758 = vadd.f32 0.0, %v757
      %v759 = vpop.f32.mrb[0].mxu0
      %760 = vdwg.mxu0
      %v761 = vmul.f32 %v738, 0.35355338
      %v762 = vmul.f32 %v743, 0.35355338
      %v763 = vmul.f32 %v748, 0.35355338
      %v764 = vmul.f32 %v753, 0.35355338
      %v765 = vmul.f32 %v758, 0.35355338
      %vm766 = vcmask 277504
      %v767 = vsel %vm766, %v761, -inf
      %768 = vmax.xlane.f32.xlu0 %v767
      %v769 = vpop.xlane.xlu0 %768
      %v770 = vsel %vm766, %v762, -inf
      %771 = vmax.xlane.f32.xlu0 %v770
      %v772 = vpop.xlane.xlu0 %771
      %v773 = vsel %vm766, %v763, -inf
      %774 = vmax.xlane.f32.xlu0 %v773
      %v775 = vpop.xlane.xlu0 %774
      %v776 = vsel %vm766, %v764, -inf
      %777 = vmax.xlane.f32.xlu0 %v776
      %v778 = vpop.xlane.xlu0 %777
      %vm779 = vcmask 271360
      %v780 = vsel %vm779, %v765, -inf
      %781 = vmax.xlane.f32.xlu0 %v780
      %v782 = vpop.xlane.xlu0 %781
      %v783 = vsub.f32 %v761, %v769
      %v784 = vsub.f32 %v762, %v772
      %v785 = vsub.f32 %v763, %v775
      %v786 = vsub.f32 %v764, %v778
      %v787 = vsub.f32 %v765, %v782
      %v788 = vmul.f32 %v783, 1.442695
      %v789 = vpow.pop %v788
      %v790 = vmul.f32 %v784, 1.442695
      %v791 = vpow.pop %v790
      %v792 = vmul.f32 %v785, 1.442695
      %v793 = vpow.pop %v792
      %v794 = vmul.f32 %v786, 1.442695
      %v795 = vpow.pop %v794
      %v796 = vmul.f32 %v787, 1.442695
      %v797 = vpow.pop %v796
      %798 = vrot.lane.b32.xlu0 %v614, 64
      %v799 = vpop.permute.xlu0 %798
      %800 = vrot.lane.b32.xlu0 %v617, 64
      %v801 = vpop.permute.xlu0 %800
      %802 = vrot.lane.b32.xlu0 %v622, 64
      %v803 = vpop.permute.xlu0 %802
      %804 = vrot.lane.b32.xlu0 %v625, 64
      %v805 = vpop.permute.xlu0 %804
      %806 = vrot.lane.b32.xlu0 %v630, 64
      %v807 = vpop.permute.xlu0 %806
      %v813 = vsel %vm766, %v789, 0
      %v816 = vsel %vm766, %v791, 0
      %v819 = vsel %vm766, %v793, 0
      %v822 = vsel %vm766, %v795, 0
      %v825 = vsel %vm766, %v797, 0
      %vm827 = vcmask 1041408
      %v828 = vsel %vm827, %v807, 0
      %830 = vmatprep.subr.mxu0 0.0
      %831 = vmatpush1.msra.mxu0 %v799
      %832 = vmatprep.subr.mxu0 0.0
      %833 = vmatpush1.msra.mxu0 %v801
      %834 = vmatprep.subr.mxu0 0.0
      %835 = vmatpush1.msra.mxu0 %v803
      %836 = vmatprep.subr.mxu0 0.0
      %837 = vmatpush1.msra.mxu0 %v805
      %838 = vmatprep.subr.mxu0 0.0
      %839 = vmatpush1.msra.mxu0 %v828
      %840 = vmatprep.subr.mxu0 0.0
      %841 = vmatpush1.msra.mxu0 0.0
      %842 = vmatprep.subr.mxu0 0.0
      %843 = vmatpush1.msra.mxu0 0.0
      %844 = vmatprep.subr.mxu0 0.0
      %845 = vmatpush1.msra.mxu0 0.0
      %846 = vmatprep.subr.mxu0 0.0
      %847 = vmatpush1.msra.mxu0 0.0
      %848 = vmatprep.subr.mxu0 0.0
      %849 = vmatpush1.msra.mxu0 0.0
      %850 = vmatprep.subr.mxu0 0.0
      %851 = vmatpush1.msra.mxu0 0.0
      %852 = vmatprep.subr.mxu0 0.0
      %853 = vmatpush1.msra.mxu0 0.0
      %854 = vmatprep.subr.mxu0 0.0
      %855 = vmatpush1.msra.mxu0 0.0
      %856 = vmatprep.subr.mxu0 0.0
      %857 = vmatpush1.msra.mxu0 0.0
      %858 = vmatprep.subr.mxu0 0.0
      %859 = vmatpush1.msra.mxu0 0.0
      %860 = vmatprep.subr.mxu0 0.0
      %861 = vmatpush1.msra.mxu0 0.0
      %862 = vmatprep.subr.mxu0 0.0
      %863 = vmatpush1.msra.mxu0 0.0
      %864 = vmatprep.subr.mxu0 0.0
      %865 = vmatpush1.msra.mxu0 0.0
      %866 = vmatprep.subr.mxu0 0.0
      %867 = vmatpush1.msra.mxu0 0.0
      %868 = vmatprep.subr.mxu0 0.0
      %869 = vmatpush1.msra.mxu0 0.0
      %870 = vmatprep.subr.mxu0 0.0
      %871 = vmatpush1.msra.mxu0 0.0
      %872 = vmatprep.subr.mxu0 0.0
      %873 = vmatpush1.msra.mxu0 0.0
      %874 = vmatprep.subr.mxu0 0.0
      %875 = vmatpush1.msra.mxu0 0.0
      %876 = vmatprep.subr.mxu0 0.0
      %877 = vmatpush1.msra.mxu0 0.0
      %878 = vmatprep.subr.mxu0 0.0
      %879 = vmatpush1.msra.mxu0 0.0
      %880 = vmatprep.subr.mxu0 0.0
      %881 = vmatpush1.msra.mxu0 0.0
      %882 = vmatprep.subr.mxu0 0.0
      %883 = vmatpush1.msra.mxu0 0.0
      %884 = vmatprep.subr.mxu0 0.0
      %885 = vmatpush1.msra.mxu0 0.0
      %886 = vmatprep.subr.mxu0 0.0
      %887 = vmatpush1.msra.mxu0 0.0
      %888 = vmatprep.subr.mxu0 0.0
      %889 = vmatpush1.msra.mxu0 0.0
      %890 = vmatprep.subr.mxu0 0.0
      %891 = vmatpush1.msra.mxu0 0.0
      %892 = vmatprep.subr.mxu0 0.0
      %893 = vmatpush1.msra.mxu0 0.0
      %894 = vmatprep.mubr.f32.mxu0 0.0
      %895 = vmatmul.mubr.f32.gmra.mrb[0].mxu0 %v813
      %v896 = vpop.f32.mrb[0].mxu0
      %v897 = vadd.f32 0.0, %v896
      %v898 = vpop.f32.mrb[0].mxu0
      %899 = vmatprep.mubr.f32.mxu0 0.0
      %900 = vmatmul.mubr.f32.gmra.mrb[0].mxu0 %v816
      %v901 = vpop.f32.mrb[0].mxu0
      %v902 = vadd.f32 0.0, %v901
      %v903 = vpop.f32.mrb[0].mxu0
      %904 = vmatprep.mubr.f32.mxu0 0.0
      %905 = vmatmul.mubr.f32.gmra.mrb[0].mxu0 %v819
      %v906 = vpop.f32.mrb[0].mxu0
      %v907 = vadd.f32 0.0, %v906
      %v908 = vpop.f32.mrb[0].mxu0
      %909 = vmatprep.mubr.f32.mxu0 0.0
      %910 = vmatmul.mubr.f32.gmra.mrb[0].mxu0 %v822
      %v911 = vpop.f32.mrb[0].mxu0
      %v912 = vadd.f32 0.0, %v911
      %v913 = vpop.f32.mrb[0].mxu0
      %914 = vmatprep.mubr.f32.mxu0 0.0
      %915 = vmatmul.mubr.f32.gmra.mrb[0].mxu0 %v825
      %v916 = vpop.f32.mrb[0].mxu0
      %v917 = vadd.f32 0.0, %v916
      %v918 = vpop.f32.mrb[0].mxu0
      %919 = vdwg.mxu0
      %v920 = vsel %vm766, %v789, 0.0
      %921 = vadd.xlane.f32.xlu0 %v920
      %v922 = vpop.xlane.xlu0 %921
      %v923 = vsel %vm766, %v791, 0.0
      %924 = vadd.xlane.f32.xlu0 %v923
      %v925 = vpop.xlane.xlu0 %924
      %v926 = vsel %vm766, %v793, 0.0
      %927 = vadd.xlane.f32.xlu0 %v926
      %v928 = vpop.xlane.xlu0 %927
      %v929 = vsel %vm766, %v795, 0.0
      %930 = vadd.xlane.f32.xlu0 %v929
      %v931 = vpop.xlane.xlu0 %930
      %v932 = vsel %vm779, %v797, 0.0
      %933 = vadd.xlane.f32.xlu0 %v932
      %v934 = vpop.xlane.xlu0 %933
      %v935 = vrcp.pop %v922
      %v936 = vmul.f32 %v897, %v935
      %v937 = vrcp.pop %v925
      %v938 = vmul.f32 %v902, %v937
      %v939 = vrcp.pop %v928
      %v940 = vmul.f32 %v907, %v939
      %v941 = vrcp.pop %v931
      %v942 = vmul.f32 %v912, %v941
      %v943 = vrcp.pop %v934
      %v944 = vmul.f32 %v917, %v943
      %v945 = vpack.c.bf16 %v938, %v936
      %v946 = vpack.c.bf16 %v942, %v940
      %v947 = vpack.c.bf16 %v944, %v944
      %v948 = vld [vmem:[%s5] sm:$0xf]
      %949 = vrot.lane.b32.xlu0 %v614, 120
      %v950 = vpop.permute.xlu0 %949
      %951 = vrot.lane.b32.xlu0 %v617, 120
      %v952 = vpop.permute.xlu0 %951
      %953 = vrot.lane.b32.xlu0 %v622, 120
      %v954 = vpop.permute.xlu0 %953
      %955 = vrot.lane.b32.xlu0 %v625, 120
      %v956 = vpop.permute.xlu0 %955
      %957 = vrot.lane.b32.xlu0 %v630, 120
      %v958 = vpop.permute.xlu0 %957
      %959 = vrot.lane.b32.xlu0 %v614, 88
      %v960 = vpop.permute.xlu0 %959
      %961 = vrot.lane.b32.xlu0 %v617, 88
      %v962 = vpop.permute.xlu0 %961
      %963 = vrot.lane.b32.xlu0 %v622, 88
      %v964 = vpop.permute.xlu0 %963
      %965 = vrot.lane.b32.xlu0 %v625, 88
      %v966 = vpop.permute.xlu0 %965
      %967 = vrot.lane.b32.xlu0 %v630, 88
      %v968 = vpop.permute.xlu0 %967
      %v969 = vsel %vm650, %v950, 0
      %v971 = vsel %vm650, %v952, 0
      %v973 = vsel %vm650, %v954, 0
      %v975 = vsel %vm650, %v956, 0
      %v977 = vsel %vm650, %v958, 0
      %v979 = vsel %vm650, %v960, 0
      %v981 = vsel %vm650, %v962, 0
      %v983 = vsel %vm650, %v964, 0
      %v985 = vsel %vm650, %v966, 0
      %v987 = vsel %vm650, %v968, 0
      %989 = vmatprep.subr.mxu0 0.0
      %990 = vmatpush1.xpose.msra.mxu0 %v979
      %991 = vmatprep.subr.mxu0 0.0
      %992 = vmatpush1.xpose.msra.mxu0 %v981
      %993 = vmatprep.subr.mxu0 0.0
      %994 = vmatpush1.xpose.msra.mxu0 %v983
      %995 = vmatprep.subr.mxu0 0.0
      %996 = vmatpush1.xpose.msra.mxu0 %v985
      %997 = vmatprep.subr.mxu0 0.0
      %998 = vmatpush1.xpose.msra.mxu0 %v987
      %999 = vmatprep.subr.mxu0 0.0
      %1000 = vmatpush1.xpose.msra.mxu0 0.0
      %1001 = vmatprep.subr.mxu0 0.0
      %1002 = vmatpush1.xpose.msra.mxu0 0.0
      %1003 = vmatprep.subr.mxu0 0.0
      %1004 = vmatpush1.xpose.msra.mxu0 0.0
      %1005 = vmatprep.subr.mxu0 0.0
      %1006 = vmatpush1.xpose.msra.mxu0 0.0
      %1007 = vmatprep.subr.mxu0 0.0
      %1008 = vmatpush1.xpose.msra.mxu0 0.0
      %1009 = vmatprep.subr.mxu0 0.0
      %1010 = vmatpush1.xpose.msra.mxu0 0.0
      %1011 = vmatprep.subr.mxu0 0.0
      %1012 = vmatpush1.xpose.msra.mxu0 0.0
      %1013 = vmatprep.subr.mxu0 0.0
      %1014 = vmatpush1.xpose.msra.mxu0 0.0
      %1015 = vmatprep.subr.mxu0 0.0
      %1016 = vmatpush1.xpose.msra.mxu0 0.0
      %1017 = vmatprep.subr.mxu0 0.0
      %1018 = vmatpush1.xpose.msra.mxu0 0.0
      %1019 = vmatprep.subr.mxu0 0.0
      %1020 = vmatpush1.xpose.msra.mxu0 0.0
      %1021 = vmatprep.subr.mxu0 0.0
      %1022 = vmatpush1.xpose.msra.mxu0 0.0
      %1023 = vmatprep.subr.mxu0 0.0
      %1024 = vmatpush1.xpose.msra.mxu0 0.0
      %1025 = vmatprep.subr.mxu0 0.0
      %1026 = vmatpush1.xpose.msra.mxu0 0.0
      %1027 = vmatprep.subr.mxu0 0.0
      %1028 = vmatpush1.xpose.msra.mxu0 0.0
      %1029 = vmatprep.subr.mxu0 0.0
      %1030 = vmatpush1.xpose.msra.mxu0 0.0
      %1031 = vmatprep.subr.mxu0 0.0
      %1032 = vmatpush1.xpose.msra.mxu0 0.0
      %1033 = vmatprep.subr.mxu0 0.0
      %1034 = vmatpush1.xpose.msra.mxu0 0.0
      %1035 = vmatprep.subr.mxu0 0.0
      %1036 = vmatpush1.xpose.msra.mxu0 0.0
      %1037 = vmatprep.subr.mxu0 0.0
      %1038 = vmatpush1.xpose.msra.mxu0 0.0
      %1039 = vmatprep.subr.mxu0 0.0
      %1040 = vmatpush1.xpose.msra.mxu0 0.0
      %1041 = vmatprep.subr.mxu0 0.0
      %1042 = vmatpush1.xpose.msra.mxu0 0.0
      %1043 = vmatprep.subr.mxu0 0.0
      %1044 = vmatpush1.xpose.msra.mxu0 0.0
      %1045 = vmatprep.subr.mxu0 0.0
      %1046 = vmatpush1.xpose.msra.mxu0 0.0
      %1047 = vmatprep.subr.mxu0 0.0
      %1048 = vmatpush1.xpose.msra.mxu0 0.0
      %1049 = vmatprep.subr.mxu0 0.0
      %1050 = vmatpush1.xpose.msra.mxu0 0.0
      %1051 = vmatprep.subr.mxu0 0.0
      %1052 = vmatpush1.xpose.msra.mxu0 0.0
      %1053 = vmatprep.mubr.f32.mxu0 0.0
      %1054 = vmatmul.mubr.f32.gmra.mrb[0].mxu0 %v969
      %v1055 = vpop.f32.mrb[0].mxu0
      %v1056 = vadd.f32 0.0, %v1055
      %v1057 = vpop.f32.mrb[0].mxu0
      %1058 = vmatprep.mubr.f32.mxu0 0.0
      %1059 = vmatmul.mubr.f32.gmra.mrb[0].mxu0 %v971
      %v1060 = vpop.f32.mrb[0].mxu0
      %v1061 = vadd.f32 0.0, %v1060
      %v1062 = vpop.f32.mrb[0].mxu0
      %1063 = vmatprep.mubr.f32.mxu0 0.0
      %1064 = vmatmul.mubr.f32.gmra.mrb[0].mxu0 %v973
      %v1065 = vpop.f32.mrb[0].mxu0
      %v1066 = vadd.f32 0.0, %v1065
      %v1067 = vpop.f32.mrb[0].mxu0
      %1068 = vmatprep.mubr.f32.mxu0 0.0
      %1069 = vmatmul.mubr.f32.gmra.mrb[0].mxu0 %v975
      %v1070 = vpop.f32.mrb[0].mxu0
      %v1071 = vadd.f32 0.0, %v1070
      %v1072 = vpop.f32.mrb[0].mxu0
      %1073 = vmatprep.mubr.f32.mxu0 0.0
      %1074 = vmatmul.mubr.f32.gmra.mrb[0].mxu0 %v977
      %v1075 = vpop.f32.mrb[0].mxu0
      %v1076 = vadd.f32 0.0, %v1075
      %v1077 = vpop.f32.mrb[0].mxu0
      %1078 = vdwg.mxu0
      %v1079 = vmul.f32 %v1056, 0.35355338
      %v1080 = vmul.f32 %v1061, 0.35355338
      %v1081 = vmul.f32 %v1066, 0.35355338
      %v1082 = vmul.f32 %v1071, 0.35355338
      %v1083 = vmul.f32 %v1076, 0.35355338
      %v1084 = vsel %vm766, %v1079, -inf
      %1085 = vmax.xlane.f32.xlu0 %v1084
      %v1086 = vpop.xlane.xlu0 %1085
      %v1087 = vsel %vm766, %v1080, -inf
      %1088 = vmax.xlane.f32.xlu0 %v1087
      %v1089 = vpop.xlane.xlu0 %1088
      %v1090 = vsel %vm766, %v1081, -inf
      %1091 = vmax.xlane.f32.xlu0 %v1090
      %v1092 = vpop.xlane.xlu0 %1091
      %v1093 = vsel %vm766, %v1082, -inf
      %1094 = vmax.xlane.f32.xlu0 %v1093
      %v1095 = vpop.xlane.xlu0 %1094
      %v1096 = vsel %vm779, %v1083, -inf
      %1097 = vmax.xlane.f32.xlu0 %v1096
      %v1098 = vpop.xlane.xlu0 %1097
      %v1099 = vsub.f32 %v1079, %v1086
      %v1100 = vsub.f32 %v1080, %v1089
      %v1101 = vsub.f32 %v1081, %v1092
      %v1102 = vsub.f32 %v1082, %v1095
      %v1103 = vsub.f32 %v1083, %v1098
      %v1104 = vmul.f32 %v1099, 1.442695
      %v1105 = vpow.pop %v1104
      %v1106 = vmul.f32 %v1100, 1.442695
      %v1107 = vpow.pop %v1106
      %v1108 = vmul.f32 %v1101, 1.442695
      %v1109 = vpow.pop %v1108
      %v1110 = vmul.f32 %v1102, 1.442695
      %v1111 = vpow.pop %v1110
      %v1112 = vmul.f32 %v1103, 1.442695
      %v1113 = vpow.pop %v1112
      %1114 = vrot.lane.b32.xlu0 %v614, 56
      %v1115 = vpop.permute.xlu0 %1114
      %1116 = vrot.lane.b32.xlu0 %v617, 56
      %v1117 = vpop.permute.xlu0 %1116
      %1118 = vrot.lane.b32.xlu0 %v622, 56
      %v1119 = vpop.permute.xlu0 %1118
      %1120 = vrot.lane.b32.xlu0 %v625, 56
      %v1121 = vpop.permute.xlu0 %1120
      %1122 = vrot.lane.b32.xlu0 %v630, 56
      %v1123 = vpop.permute.xlu0 %1122
      %v1129 = vsel %vm766, %v1105, 0
      %v1132 = vsel %vm766, %v1107, 0
      %v1135 = vsel %vm766, %v1109, 0
      %v1138 = vsel %vm766, %v1111, 0
      %v1141 = vsel %vm766, %v1113, 0
      %v1143 = vsel %vm827, %v1123, 0
      %1145 = vmatprep.subr.mxu0 0.0
      %1146 = vmatpush1.msra.mxu0 %v1115
      %1147 = vmatprep.subr.mxu0 0.0
      %1148 = vmatpush1.msra.mxu0 %v1117
      %1149 = vmatprep.subr.mxu0 0.0
      %1150 = vmatpush1.msra.mxu0 %v1119
      %1151 = vmatprep.subr.mxu0 0.0
      %1152 = vmatpush1.msra.mxu0 %v1121
      %1153 = vmatprep.subr.mxu0 0.0
      %1154 = vmatpush1.msra.mxu0 %v1143
      %1155 = vmatprep.subr.mxu0 0.0
      %1156 = vmatpush1.msra.mxu0 0.0
      %1157 = vmatprep.subr.mxu0 0.0
      %1158 = vmatpush1.msra.mxu0 0.0
      %1159 = vmatprep.subr.mxu0 0.0
      %1160 = vmatpush1.msra.mxu0 0.0
      %1161 = vmatprep.subr.mxu0 0.0
      %1162 = vmatpush1.msra.mxu0 0.0
      %1163 = vmatprep.subr.mxu0 0.0
      %1164 = vmatpush1.msra.mxu0 0.0
      %1165 = vmatprep.subr.mxu0 0.0
      %1166 = vmatpush1.msra.mxu0 0.0
      %1167 = vmatprep.subr.mxu0 0.0
      %1168 = vmatpush1.msra.mxu0 0.0
      %1169 = vmatprep.subr.mxu0 0.0
      %1170 = vmatpush1.msra.mxu0 0.0
      %1171 = vmatprep.subr.mxu0 0.0
      %1172 = vmatpush1.msra.mxu0 0.0
      %1173 = vmatprep.subr.mxu0 0.0
      %1174 = vmatpush1.msra.mxu0 0.0
      %1175 = vmatprep.subr.mxu0 0.0
      %1176 = vmatpush1.msra.mxu0 0.0
      %1177 = vmatprep.subr.mxu0 0.0
      %1178 = vmatpush1.msra.mxu0 0.0
      %1179 = vmatprep.subr.mxu0 0.0
      %1180 = vmatpush1.msra.mxu0 0.0
      %1181 = vmatprep.subr.mxu0 0.0
      %1182 = vmatpush1.msra.mxu0 0.0
      %1183 = vmatprep.subr.mxu0 0.0
      %1184 = vmatpush1.msra.mxu0 0.0
      %1185 = vmatprep.subr.mxu0 0.0
      %1186 = vmatpush1.msra.mxu0 0.0
      %1187 = vmatprep.subr.mxu0 0.0
      %1188 = vmatpush1.msra.mxu0 0.0
      %1189 = vmatprep.subr.mxu0 0.0
      %1190 = vmatpush1.msra.mxu0 0.0
      %1191 = vmatprep.subr.mxu0 0.0
      %1192 = vmatpush1.msra.mxu0 0.0
      %1193 = vmatprep.subr.mxu0 0.0
      %1194 = vmatpush1.msra.mxu0 0.0
      %1195 = vmatprep.subr.mxu0 0.0
      %1196 = vmatpush1.msra.mxu0 0.0
      %1197 = vmatprep.subr.mxu0 0.0
      %1198 = vmatpush1.msra.mxu0 0.0
      %1199 = vmatprep.subr.mxu0 0.0
      %1200 = vmatpush1.msra.mxu0 0.0
      %1201 = vmatprep.subr.mxu0 0.0
      %1202 = vmatpush1.msra.mxu0 0.0
      %1203 = vmatprep.subr.mxu0 0.0
      %1204 = vmatpush1.msra.mxu0 0.0
      %1205 = vmatprep.subr.mxu0 0.0
      %1206 = vmatpush1.msra.mxu0 0.0
      %1207 = vmatprep.subr.mxu0 0.0
      %1208 = vmatpush1.msra.mxu0 0.0
      %1209 = vmatprep.mubr.f32.mxu0 0.0
      %1210 = vmatmul.mubr.f32.gmra.mrb[0].mxu0 %v1129
      %v1211 = vpop.f32.mrb[0].mxu0
      %v1212 = vadd.f32 0.0, %v1211
      %v1213 = vpop.f32.mrb[0].mxu0
      %1214 = vmatprep.mubr.f32.mxu0 0.0
      %1215 = vmatmul.mubr.f32.gmra.mrb[0].mxu0 %v1132
      %v1216 = vpop.f32.mrb[0].mxu0
      %v1217 = vadd.f32 0.0, %v1216
      %v1218 = vpop.f32.mrb[0].mxu0
      %1219 = vmatprep.mubr.f32.mxu0 0.0
      %1220 = vmatmul.mubr.f32.gmra.mrb[0].mxu0 %v1135
      %v1221 = vpop.f32.mrb[0].mxu0
      %v1222 = vadd.f32 0.0, %v1221
      %v1223 = vpop.f32.mrb[0].mxu0
      %1224 = vmatprep.mubr.f32.mxu0 0.0
      %1225 = vmatmul.mubr.f32.gmra.mrb[0].mxu0 %v1138
      %v1226 = vpop.f32.mrb[0].mxu0
      %v1227 = vadd.f32 0.0, %v1226
      %v1228 = vpop.f32.mrb[0].mxu0
      %1229 = vmatprep.mubr.f32.mxu0 0.0
      %1230 = vmatmul.mubr.f32.gmra.mrb[0].mxu0 %v1141
      %v1231 = vpop.f32.mrb[0].mxu0
      %v1232 = vadd.f32 0.0, %v1231
      %v1233 = vpop.f32.mrb[0].mxu0
      %1234 = vdwg.mxu0
      %v1235 = vsel %vm766, %v1105, 0.0
      %1236 = vadd.xlane.f32.xlu0 %v1235
      %v1237 = vpop.xlane.xlu0 %1236
      %v1238 = vsel %vm766, %v1107, 0.0
      %1239 = vadd.xlane.f32.xlu0 %v1238
      %v1240 = vpop.xlane.xlu0 %1239
      %v1241 = vsel %vm766, %v1109, 0.0
      %1242 = vadd.xlane.f32.xlu0 %v1241
      %v1243 = vpop.xlane.xlu0 %1242
      %v1244 = vsel %vm766, %v1111, 0.0
      %1245 = vadd.xlane.f32.xlu0 %v1244
      %v1246 = vpop.xlane.xlu0 %1245
      %v1247 = vsel %vm779, %v1113, 0.0
      %1248 = vadd.xlane.f32.xlu0 %v1247
      %v1249 = vpop.xlane.xlu0 %1248
      %v1250 = vrcp.pop %v1237
      %v1251 = vmul.f32 %v1212, %v1250
      %v1252 = vrcp.pop %v1240
      %v1253 = vmul.f32 %v1217, %v1252
      %v1254 = vrcp.pop %v1243
      %v1255 = vmul.f32 %v1222, %v1254
      %v1256 = vrcp.pop %v1246
      %v1257 = vmul.f32 %v1227, %v1256
      %v1258 = vrcp.pop %v1249
      %v1259 = vmul.f32 %v1232, %v1258
      %v1260 = vpack.c.bf16 %v1253, %v1251
      %v1261 = vpack.c.bf16 %v1257, %v1255
      %v1262 = vpack.c.bf16 %v1259, %v1259
      %v1263 = vld [vmem:[%s5 + $0x4] sm:$0xf]
      %v1265 = vsel %vm650, %v1260, 0
      %v1268 = vsel %vm650, %v1261, 0
      %v1271 = vsel %vm650, %v1262, 0
      %vm1273 = vcmask 1043456
      %v1275 = vsel %vm1273, %v1263, 0
      %1277 = vmatprep.subr.bf16.mxu0 0
      %1278 = vmatpush1.bf16.msra.mxu0 %v1275
      %1279 = vmatprep.subr.bf16.mxu0 0
      %1280 = vmatpush1.bf16.msra.mxu0 0
      %1281 = vmatprep.subr.bf16.mxu0 0
      %1282 = vmatpush1.bf16.msra.mxu0 0
      %1283 = vmatprep.subr.bf16.mxu0 0
      %1284 = vmatpush1.bf16.msra.mxu0 0
      %1285 = vmatprep.subr.bf16.mxu0 0
      %1286 = vmatpush1.bf16.msra.mxu0 0
      %1287 = vmatprep.subr.bf16.mxu0 0
      %1288 = vmatpush1.bf16.msra.mxu0 0
      %1289 = vmatprep.subr.bf16.mxu0 0
      %1290 = vmatpush1.bf16.msra.mxu0 0
      %1291 = vmatprep.subr.bf16.mxu0 0
      %1292 = vmatpush1.bf16.msra.mxu0 0
      %1293 = vmatprep.subr.bf16.mxu0 0
      %1294 = vmatpush1.bf16.msra.mxu0 0
      %1295 = vmatprep.subr.bf16.mxu0 0
      %1296 = vmatpush1.bf16.msra.mxu0 0
      %1297 = vmatprep.subr.bf16.mxu0 0
      %1298 = vmatpush1.bf16.msra.mxu0 0
      %1299 = vmatprep.subr.bf16.mxu0 0
      %1300 = vmatpush1.bf16.msra.mxu0 0
      %1301 = vmatprep.subr.bf16.mxu0 0
      %1302 = vmatpush1.bf16.msra.mxu0 0
      %1303 = vmatprep.subr.bf16.mxu0 0
      %1304 = vmatpush1.bf16.msra.mxu0 0
      %1305 = vmatprep.subr.bf16.mxu0 0
      %1306 = vmatpush1.bf16.msra.mxu0 0
      %1307 = vmatprep.subr.bf16.mxu0 0
      %1308 = vmatpush1.bf16.msra.mxu0 0
      %1309 = vmatprep.mubr.bf16.mxu0 0
      %1310 = vmatmul.mubr.bf16.gmra.mrb[0].mxu0 %v1265
      %v1311 = vpop.f32.mrb[0].mxu0
      %v1312 = vadd.f32 0.0, %v1311
      %v1313 = vpop.f32.mrb[0].mxu0
      %v1314 = vpop.f32.mrb[0].mxu0
      %v1315 = vadd.f32 0.0, %v1314
      %v1316 = vpop.f32.mrb[0].mxu0
      %1317 = vmatprep.mubr.bf16.mxu0 0
      %1318 = vmatmul.mubr.bf16.gmra.mrb[0].mxu0 %v1268
      %v1319 = vpop.f32.mrb[0].mxu0
      %v1320 = vadd.f32 0.0, %v1319
      %v1321 = vpop.f32.mrb[0].mxu0
      %v1322 = vpop.f32.mrb[0].mxu0
      %v1323 = vadd.f32 0.0, %v1322
      %v1324 = vpop.f32.mrb[0].mxu0
      %1325 = vmatprep.mubr.bf16.mxu0 0
      %1326 = vmatmul.mubr.bf16.gmra.mrb[0].mxu0 %v1271
      %v1327 = vpop.f32.mrb[0].mxu0
      %v1328 = vadd.f32 0.0, %v1327
      %v1329 = vpop.f32.mrb[0].mxu0
      %v1330 = vpop.f32.mrb[0].mxu0
      %v1331 = vpop.f32.mrb[0].mxu0
      %1332 = vdwg.mxu0
      %v1334 = vsel %vm650, %v945, 0
      %v1337 = vsel %vm650, %v946, 0
      %v1340 = vsel %vm650, %v947, 0
      %v1343 = vsel %vm1273, %v948, 0
      %1345 = vmatprep.subr.bf16.mxu0 0
      %1346 = vmatpush1.bf16.msra.mxu0 %v1343
      %1347 = vmatprep.subr.bf16.mxu0 0
      %1348 = vmatpush1.bf16.msra.mxu0 0
      %1349 = vmatprep.subr.bf16.mxu0 0
      %1350 = vmatpush1.bf16.msra.mxu0 0
      %1351 = vmatprep.subr.bf16.mxu0 0
      %1352 = vmatpush1.bf16.msra.mxu0 0
      %1353 = vmatprep.subr.bf16.mxu0 0
      %1354 = vmatpush1.bf16.msra.mxu0 0
      %1355 = vmatprep.subr.bf16.mxu0 0
      %1356 = vmatpush1.bf16.msra.mxu0 0
      %1357 = vmatprep.subr.bf16.mxu0 0
      %1358 = vmatpush1.bf16.msra.mxu0 0
      %1359 = vmatprep.subr.bf16.mxu0 0
      %1360 = vmatpush1.bf16.msra.mxu0 0
      %1361 = vmatprep.subr.bf16.mxu0 0
      %1362 = vmatpush1.bf16.msra.mxu0 0
      %1363 = vmatprep.subr.bf16.mxu0 0
      %1364 = vmatpush1.bf16.msra.mxu0 0
      %1365 = vmatprep.subr.bf16.mxu0 0
      %1366 = vmatpush1.bf16.msra.mxu0 0
      %1367 = vmatprep.subr.bf16.mxu0 0
      %1368 = vmatpush1.bf16.msra.mxu0 0
      %1369 = vmatprep.subr.bf16.mxu0 0
      %1370 = vmatpush1.bf16.msra.mxu0 0
      %1371 = vmatprep.subr.bf16.mxu0 0
      %1372 = vmatpush1.bf16.msra.mxu0 0
      %1373 = vmatprep.subr.bf16.mxu0 0
      %1374 = vmatpush1.bf16.msra.mxu0 0
      %1375 = vmatprep.subr.bf16.mxu0 0
      %1376 = vmatpush1.bf16.msra.mxu0 0
      %1377 = vmatprep.mubr.bf16.mxu0 0
      %1378 = vmatmul.mubr.bf16.gmra.mrb[0].mxu0 %v1334
      %v1379 = vpop.f32.mrb[0].mxu0
      %v1380 = vadd.f32 %v1312, %v1379
      %v1381 = vpop.f32.mrb[0].mxu0
      %v1382 = vpop.f32.mrb[0].mxu0
      %v1383 = vadd.f32 %v1315, %v1382
      %v1384 = vpop.f32.mrb[0].mxu0
      %1385 = vmatprep.mubr.bf16.mxu0 0
      %1386 = vmatmul.mubr.bf16.gmra.mrb[0].mxu0 %v1337
      %v1387 = vpop.f32.mrb[0].mxu0
      %v1388 = vadd.f32 %v1320, %v1387
      %v1389 = vpop.f32.mrb[0].mxu0
      %v1390 = vpop.f32.mrb[0].mxu0
      %v1391 = vadd.f32 %v1323, %v1390
      %v1392 = vpop.f32.mrb[0].mxu0
      %1393 = vmatprep.mubr.bf16.mxu0 0
      %1394 = vmatmul.mubr.bf16.gmra.mrb[0].mxu0 %v1340
      %v1395 = vpop.f32.mrb[0].mxu0
      %v1396 = vadd.f32 %v1328, %v1395
      %v1397 = vpop.f32.mrb[0].mxu0
      %v1398 = vpop.f32.mrb[0].mxu0
      %v1399 = vpop.f32.mrb[0].mxu0
      %1400 = vdwg.mxu0
      %1401 = vrot.lane.b32.xlu0 %v614, 112
      %v1402 = vpop.permute.xlu0 %1401
      %1403 = vrot.lane.b32.xlu0 %v617, 112
      %v1404 = vpop.permute.xlu0 %1403
      %1405 = vrot.lane.b32.xlu0 %v622, 112
      %v1406 = vpop.permute.xlu0 %1405
      %1407 = vrot.lane.b32.xlu0 %v625, 112
      %v1408 = vpop.permute.xlu0 %1407
      %1409 = vrot.lane.b32.xlu0 %v630, 112
      %v1410 = vpop.permute.xlu0 %1409
      %1411 = vrot.lane.b32.xlu0 %v614, 80
      %v1412 = vpop.permute.xlu0 %1411
      %1413 = vrot.lane.b32.xlu0 %v617, 80
      %v1414 = vpop.permute.xlu0 %1413
      %1415 = vrot.lane.b32.xlu0 %v622, 80
      %v1416 = vpop.permute.xlu0 %1415
      %1417 = vrot.lane.b32.xlu0 %v625, 80
      %v1418 = vpop.permute.xlu0 %1417
      %1419 = vrot.lane.b32.xlu0 %v630, 80
      %v1420 = vpop.permute.xlu0 %1419
      %v1421 = vsel %vm650, %v1402, 0
      %v1423 = vsel %vm650, %v1404, 0
      %v1425 = vsel %vm650, %v1406, 0
      %v1427 = vsel %vm650, %v1408, 0
      %v1429 = vsel %vm650, %v1410, 0
      %v1431 = vsel %vm650, %v1412, 0
      %v1433 = vsel %vm650, %v1414, 0
      %v1435 = vsel %vm650, %v1416, 0
      %v1437 = vsel %vm650, %v1418, 0
      %v1439 = vsel %vm650, %v1420, 0
      %1441 = vmatprep.subr.mxu0 0.0
      %1442 = vmatpush1.xpose.msra.mxu0 %v1431
      %1443 = vmatprep.subr.mxu0 0.0
      %1444 = vmatpush1.xpose.msra.mxu0 %v1433
      %1445 = vmatprep.subr.mxu0 0.0
      %1446 = vmatpush1.xpose.msra.mxu0 %v1435
      %1447 = vmatprep.subr.mxu0 0.0
      %1448 = vmatpush1.xpose.msra.mxu0 %v1437
      %1449 = vmatprep.subr.mxu0 0.0
      %1450 = vmatpush1.xpose.msra.mxu0 %v1439
      %1451 = vmatprep.subr.mxu0 0.0
      %1452 = vmatpush1.xpose.msra.mxu0 0.0
      %1453 = vmatprep.subr.mxu0 0.0
      %1454 = vmatpush1.xpose.msra.mxu0 0.0
      %1455 = vmatprep.subr.mxu0 0.0
      %1456 = vmatpush1.xpose.msra.mxu0 0.0
      %1457 = vmatprep.subr.mxu0 0.0
      %1458 = vmatpush1.xpose.msra.mxu0 0.0
      %1459 = vmatprep.subr.mxu0 0.0
      %1460 = vmatpush1.xpose.msra.mxu0 0.0
      %1461 = vmatprep.subr.mxu0 0.0
      %1462 = vmatpush1.xpose.msra.mxu0 0.0
      %1463 = vmatprep.subr.mxu0 0.0
      %1464 = vmatpush1.xpose.msra.mxu0 0.0
      %1465 = vmatprep.subr.mxu0 0.0
      %1466 = vmatpush1.xpose.msra.mxu0 0.0
      %1467 = vmatprep.subr.mxu0 0.0
      %1468 = vmatpush1.xpose.msra.mxu0 0.0
      %1469 = vmatprep.subr.mxu0 0.0
      %1470 = vmatpush1.xpose.msra.mxu0 0.0
      %1471 = vmatprep.subr.mxu0 0.0
      %1472 = vmatpush1.xpose.msra.mxu0 0.0
      %1473 = vmatprep.subr.mxu0 0.0
      %1474 = vmatpush1.xpose.msra.mxu0 0.0
      %1475 = vmatprep.subr.mxu0 0.0
      %1476 = vmatpush1.xpose.msra.mxu0 0.0
      %1477 = vmatprep.subr.mxu0 0.0
      %1478 = vmatpush1.xpose.msra.mxu0 0.0
      %1479 = vmatprep.subr.mxu0 0.0
      %1480 = vmatpush1.xpose.msra.mxu0 0.0
      %1481 = vmatprep.subr.mxu0 0.0
      %1482 = vmatpush1.xpose.msra.mxu0 0.0
      %1483 = vmatprep.subr.mxu0 0.0
      %1484 = vmatpush1.xpose.msra.mxu0 0.0
      %1485 = vmatprep.subr.mxu0 0.0
      %1486 = vmatpush1.xpose.msra.mxu0 0.0
      %1487 = vmatprep.subr.mxu0 0.0
      %1488 = vmatpush1.xpose.msra.mxu0 0.0
      %1489 = vmatprep.subr.mxu0 0.0
      %1490 = vmatpush1.xpose.msra.mxu0 0.0
      %1491 = vmatprep.subr.mxu0 0.0
      %1492 = vmatpush1.xpose.msra.mxu0 0.0
      %1493 = vmatprep.subr.mxu0 0.0
      %1494 = vmatpush1.xpose.msra.mxu0 0.0
      %1495 = vmatprep.subr.mxu0 0.0
      %1496 = vmatpush1.xpose.msra.mxu0 0.0
      %1497 = vmatprep.subr.mxu0 0.0
      %1498 = vmatpush1.xpose.msra.mxu0 0.0
      %1499 = vmatprep.subr.mxu0 0.0
      %1500 = vmatpush1.xpose.msra.mxu0 0.0
      %1501 = vmatprep.subr.mxu0 0.0
      %1502 = vmatpush1.xpose.msra.mxu0 0.0
      %1503 = vmatprep.subr.mxu0 0.0
      %1504 = vmatpush1.xpose.msra.mxu0 0.0
      %1505 = vmatprep.mubr.f32.mxu0 0.0
      %1506 = vmatmul.mubr.f32.gmra.mrb[0].mxu0 %v1421
      %v1507 = vpop.f32.mrb[0].mxu0
      %v1508 = vadd.f32 0.0, %v1507
      %v1509 = vpop.f32.mrb[0].mxu0
      %1510 = vmatprep.mubr.f32.mxu0 0.0
      %1511 = vmatmul.mubr.f32.gmra.mrb[0].mxu0 %v1423
      %v1512 = vpop.f32.mrb[0].mxu0
      %v1513 = vadd.f32 0.0, %v1512
      %v1514 = vpop.f32.mrb[0].mxu0
      %1515 = vmatprep.mubr.f32.mxu0 0.0
      %1516 = vmatmul.mubr.f32.gmra.mrb[0].mxu0 %v1425
      %v1517 = vpop.f32.mrb[0].mxu0
      %v1518 = vadd.f32 0.0, %v1517
      %v1519 = vpop.f32.mrb[0].mxu0
      %1520 = vmatprep.mubr.f32.mxu0 0.0
      %1521 = vmatmul.mubr.f32.gmra.mrb[0].mxu0 %v1427
      %v1522 = vpop.f32.mrb[0].mxu0
      %v1523 = vadd.f32 0.0, %v1522
      %v1524 = vpop.f32.mrb[0].mxu0
      %1525 = vmatprep.mubr.f32.mxu0 0.0
      %1526 = vmatmul.mubr.f32.gmra.mrb[0].mxu0 %v1429
      %v1527 = vpop.f32.mrb[0].mxu0
      %v1528 = vadd.f32 0.0, %v1527
      %v1529 = vpop.f32.mrb[0].mxu0
      %1530 = vdwg.mxu0
      %v1531 = vmul.f32 %v1508, 0.35355338
      %v1532 = vmul.f32 %v1513, 0.35355338
      %v1533 = vmul.f32 %v1518, 0.35355338
      %v1534 = vmul.f32 %v1523, 0.35355338
      %v1535 = vmul.f32 %v1528, 0.35355338
      %v1536 = vsel %vm766, %v1531, -inf
      %1537 = vmax.xlane.f32.xlu0 %v1536
      %v1538 = vpop.xlane.xlu0 %1537
      %v1539 = vsel %vm766, %v1532, -inf
      %1540 = vmax.xlane.f32.xlu0 %v1539
      %v1541 = vpop.xlane.xlu0 %1540
      %v1542 = vsel %vm766, %v1533, -inf
      %1543 = vmax.xlane.f32.xlu0 %v1542
      %v1544 = vpop.xlane.xlu0 %1543
      %v1545 = vsel %vm766, %v1534, -inf
      %1546 = vmax.xlane.f32.xlu0 %v1545
      %v1547 = vpop.xlane.xlu0 %1546
      %v1548 = vsel %vm779, %v1535, -inf
      %1549 = vmax.xlane.f32.xlu0 %v1548
      %v1550 = vpop.xlane.xlu0 %1549
      %v1551 = vsub.f32 %v1531, %v1538
      %v1552 = vsub.f32 %v1532, %v1541
      %v1553 = vsub.f32 %v1533, %v1544
      %v1554 = vsub.f32 %v1534, %v1547
      %v1555 = vsub.f32 %v1535, %v1550
      %v1556 = vmul.f32 %v1551, 1.442695
      %v1557 = vpow.pop %v1556
      %v1558 = vmul.f32 %v1552, 1.442695
      %v1559 = vpow.pop %v1558
      %v1560 = vmul.f32 %v1553, 1.442695
      %v1561 = vpow.pop %v1560
      %v1562 = vmul.f32 %v1554, 1.442695
      %v1563 = vpow.pop %v1562
      %v1564 = vmul.f32 %v1555, 1.442695
      %v1565 = vpow.pop %v1564
      %1566 = vrot.lane.b32.xlu0 %v614, 48
      %v1567 = vpop.permute.xlu0 %1566
      %1568 = vrot.lane.b32.xlu0 %v617, 48
      %v1569 = vpop.permute.xlu0 %1568
      %1570 = vrot.lane.b32.xlu0 %v622, 48
      %v1571 = vpop.permute.xlu0 %1570
      %1572 = vrot.lane.b32.xlu0 %v625, 48
      %v1573 = vpop.permute.xlu0 %1572
      %1574 = vrot.lane.b32.xlu0 %v630, 48
      %v1575 = vpop.permute.xlu0 %1574
      %v1581 = vsel %vm766, %v1557, 0
      %v1584 = vsel %vm766, %v1559, 0
      %v1587 = vsel %vm766, %v1561, 0
      %v1590 = vsel %vm766, %v1563, 0
      %v1593 = vsel %vm766, %v1565, 0
      %v1595 = vsel %vm827, %v1575, 0
      %1597 = vmatprep.subr.mxu0 0.0
      %1598 = vmatpush1.msra.mxu0 %v1567
      %1599 = vmatprep.subr.mxu0 0.0
      %1600 = vmatpush1.msra.mxu0 %v1569
      %1601 = vmatprep.subr.mxu0 0.0
      %1602 = vmatpush1.msra.mxu0 %v1571
      %1603 = vmatprep.subr.mxu0 0.0
      %1604 = vmatpush1.msra.mxu0 %v1573
      %1605 = vmatprep.subr.mxu0 0.0
      %1606 = vmatpush1.msra.mxu0 %v1595
      %1607 = vmatprep.subr.mxu0 0.0
      %1608 = vmatpush1.msra.mxu0 0.0
      %1609 = vmatprep.subr.mxu0 0.0
      %1610 = vmatpush1.msra.mxu0 0.0
      %1611 = vmatprep.subr.mxu0 0.0
      %1612 = vmatpush1.msra.mxu0 0.0
      %1613 = vmatprep.subr.mxu0 0.0
      %1614 = vmatpush1.msra.mxu0 0.0
      %1615 = vmatprep.subr.mxu0 0.0
      %1616 = vmatpush1.msra.mxu0 0.0
      %1617 = vmatprep.subr.mxu0 0.0
      %1618 = vmatpush1.msra.mxu0 0.0
      %1619 = vmatprep.subr.mxu0 0.0
      %1620 = vmatpush1.msra.mxu0 0.0
      %1621 = vmatprep.subr.mxu0 0.0
      %1622 = vmatpush1.msra.mxu0 0.0
      %1623 = vmatprep.subr.mxu0 0.0
      %1624 = vmatpush1.msra.mxu0 0.0
      %1625 = vmatprep.subr.mxu0 0.0
      %1626 = vmatpush1.msra.mxu0 0.0
      %1627 = vmatprep.subr.mxu0 0.0
      %1628 = vmatpush1.msra.mxu0 0.0
      %1629 = vmatprep.subr.mxu0 0.0
      %1630 = vmatpush1.msra.mxu0 0.0
      %1631 = vmatprep.subr.mxu0 0.0
      %1632 = vmatpush1.msra.mxu0 0.0
      %1633 = vmatprep.subr.mxu0 0.0
      %1634 = vmatpush1.msra.mxu0 0.0
      %1635 = vmatprep.subr.mxu0 0.0
      %1636 = vmatpush1.msra.mxu0 0.0
      %1637 = vmatprep.subr.mxu0 0.0
      %1638 = vmatpush1.msra.mxu0 0.0
      %1639 = vmatprep.subr.mxu0 0.0
      %1640 = vmatpush1.msra.mxu0 0.0
      %1641 = vmatprep.subr.mxu0 0.0
      %1642 = vmatpush1.msra.mxu0 0.0
      %1643 = vmatprep.subr.mxu0 0.0
      %1644 = vmatpush1.msra.mxu0 0.0
      %1645 = vmatprep.subr.mxu0 0.0
      %1646 = vmatpush1.msra.mxu0 0.0
      %1647 = vmatprep.subr.mxu0 0.0
      %1648 = vmatpush1.msra.mxu0 0.0
      %1649 = vmatprep.subr.mxu0 0.0
      %1650 = vmatpush1.msra.mxu0 0.0
      %1651 = vmatprep.subr.mxu0 0.0
      %1652 = vmatpush1.msra.mxu0 0.0
      %1653 = vmatprep.subr.mxu0 0.0
      %1654 = vmatpush1.msra.mxu0 0.0
      %1655 = vmatprep.subr.mxu0 0.0
      %1656 = vmatpush1.msra.mxu0 0.0
      %1657 = vmatprep.subr.mxu0 0.0
      %1658 = vmatpush1.msra.mxu0 0.0
      %1659 = vmatprep.subr.mxu0 0.0
      %1660 = vmatpush1.msra.mxu0 0.0
      %1661 = vmatprep.mubr.f32.mxu0 0.0
      %1662 = vmatmul.mubr.f32.gmra.mrb[0].mxu0 %v1581
      %v1663 = vpop.f32.mrb[0].mxu0
      %v1664 = vadd.f32 0.0, %v1663
      %v1665 = vpop.f32.mrb[0].mxu0
      %1666 = vmatprep.mubr.f32.mxu0 0.0
      %1667 = vmatmul.mubr.f32.gmra.mrb[0].mxu0 %v1584
      %v1668 = vpop.f32.mrb[0].mxu0
      %v1669 = vadd.f32 0.0, %v1668
      %v1670 = vpop.f32.mrb[0].mxu0
      %1671 = vmatprep.mubr.f32.mxu0 0.0
      %1672 = vmatmul.mubr.f32.gmra.mrb[0].mxu0 %v1587
      %v1673 = vpop.f32.mrb[0].mxu0
      %v1674 = vadd.f32 0.0, %v1673
      %v1675 = vpop.f32.mrb[0].mxu0
      %1676 = vmatprep.mubr.f32.mxu0 0.0
      %1677 = vmatmul.mubr.f32.gmra.mrb[0].mxu0 %v1590
      %v1678 = vpop.f32.mrb[0].mxu0
      %v1679 = vadd.f32 0.0, %v1678
      %v1680 = vpop.f32.mrb[0].mxu0
      %1681 = vmatprep.mubr.f32.mxu0 0.0
      %1682 = vmatmul.mubr.f32.gmra.mrb[0].mxu0 %v1593
      %v1683 = vpop.f32.mrb[0].mxu0
      %v1684 = vadd.f32 0.0, %v1683
      %v1685 = vpop.f32.mrb[0].mxu0
      %1686 = vdwg.mxu0
      %v1687 = vsel %vm766, %v1557, 0.0
      %1688 = vadd.xlane.f32.xlu0 %v1687
      %v1689 = vpop.xlane.xlu0 %1688
      %v1690 = vsel %vm766, %v1559, 0.0
      %1691 = vadd.xlane.f32.xlu0 %v1690
      %v1692 = vpop.xlane.xlu0 %1691
      %v1693 = vsel %vm766, %v1561, 0.0
      %1694 = vadd.xlane.f32.xlu0 %v1693
      %v1695 = vpop.xlane.xlu0 %1694
      %v1696 = vsel %vm766, %v1563, 0.0
      %1697 = vadd.xlane.f32.xlu0 %v1696
      %v1698 = vpop.xlane.xlu0 %1697
      %v1699 = vsel %vm779, %v1565, 0.0
      %1700 = vadd.xlane.f32.xlu0 %v1699
      %v1701 = vpop.xlane.xlu0 %1700
      %v1702 = vrcp.pop %v1689
      %v1703 = vmul.f32 %v1664, %v1702
      %v1704 = vrcp.pop %v1692
      %v1705 = vmul.f32 %v1669, %v1704
      %v1706 = vrcp.pop %v1695
      %v1707 = vmul.f32 %v1674, %v1706
      %v1708 = vrcp.pop %v1698
      %v1709 = vmul.f32 %v1679, %v1708
      %v1710 = vrcp.pop %v1701
      %v1711 = vmul.f32 %v1684, %v1710
      %v1712 = vpack.c.bf16 %v1705, %v1703
      %v1713 = vpack.c.bf16 %v1709, %v1707
      %v1714 = vpack.c.bf16 %v1711, %v1711
      %v1715 = vld [vmem:[%s5 + $0x8] sm:$0xf]
      %v1717 = vsel %vm650, %v1712, 0
      %v1720 = vsel %vm650, %v1713, 0
      %v1723 = vsel %vm650, %v1714, 0
      %v1726 = vsel %vm1273, %v1715, 0
      %1728 = vmatprep.subr.bf16.mxu0 0
      %1729 = vmatpush1.bf16.msra.mxu0 %v1726
      %1730 = vmatprep.subr.bf16.mxu0 0
      %1731 = vmatpush1.bf16.msra.mxu0 0
      %1732 = vmatprep.subr.bf16.mxu0 0
      %1733 = vmatpush1.bf16.msra.mxu0 0
      %1734 = vmatprep.subr.bf16.mxu0 0
      %1735 = vmatpush1.bf16.msra.mxu0 0
      %1736 = vmatprep.subr.bf16.mxu0 0
      %1737 = vmatpush1.bf16.msra.mxu0 0
      %1738 = vmatprep.subr.bf16.mxu0 0
      %1739 = vmatpush1.bf16.msra.mxu0 0
      %1740 = vmatprep.subr.bf16.mxu0 0
      %1741 = vmatpush1.bf16.msra.mxu0 0
      %1742 = vmatprep.subr.bf16.mxu0 0
      %1743 = vmatpush1.bf16.msra.mxu0 0
      %1744 = vmatprep.subr.bf16.mxu0 0
      %1745 = vmatpush1.bf16.msra.mxu0 0
      %1746 = vmatprep.subr.bf16.mxu0 0
      %1747 = vmatpush1.bf16.msra.mxu0 0
      %1748 = vmatprep.subr.bf16.mxu0 0
      %1749 = vmatpush1.bf16.msra.mxu0 0
      %1750 = vmatprep.subr.bf16.mxu0 0
      %1751 = vmatpush1.bf16.msra.mxu0 0
      %1752 = vmatprep.subr.bf16.mxu0 0
      %1753 = vmatpush1.bf16.msra.mxu0 0
      %1754 = vmatprep.subr.bf16.mxu0 0
      %1755 = vmatpush1.bf16.msra.mxu0 0
      %1756 = vmatprep.subr.bf16.mxu0 0
      %1757 = vmatpush1.bf16.msra.mxu0 0
      %1758 = vmatprep.subr.bf16.mxu0 0
      %1759 = vmatpush1.bf16.msra.mxu0 0
      %1760 = vmatprep.mubr.bf16.mxu0 0
      %1761 = vmatmul.mubr.bf16.gmra.mrb[0].mxu0 %v1717
      %v1762 = vpop.f32.mrb[0].mxu0
      %v1763 = vadd.f32 0.0, %v1762
      %v1764 = vpop.f32.mrb[0].mxu0
      %v1765 = vpop.f32.mrb[0].mxu0
      %v1766 = vadd.f32 0.0, %v1765
      %v1767 = vpop.f32.mrb[0].mxu0
      %1768 = vmatprep.mubr.bf16.mxu0 0
      %1769 = vmatmul.mubr.bf16.gmra.mrb[0].mxu0 %v1720
      %v1770 = vpop.f32.mrb[0].mxu0
      %v1771 = vadd.f32 0.0, %v1770
      %v1772 = vpop.f32.mrb[0].mxu0
      %v1773 = vpop.f32.mrb[0].mxu0
      %v1774 = vadd.f32 0.0, %v1773
      %v1775 = vpop.f32.mrb[0].mxu0
      %1776 = vmatprep.mubr.bf16.mxu0 0
      %1777 = vmatmul.mubr.bf16.gmra.mrb[0].mxu0 %v1723
      %v1778 = vpop.f32.mrb[0].mxu0
      %v1779 = vadd.f32 0.0, %v1778
      %v1780 = vpop.f32.mrb[0].mxu0
      %v1781 = vpop.f32.mrb[0].mxu0
      %v1782 = vpop.f32.mrb[0].mxu0
      %1783 = vdwg.mxu0
      %v1784 = vadd.f32 %v1380, %v1763
      %v1785 = vadd.f32 %v1383, %v1766
      %v1786 = vadd.f32 %v1388, %v1771
      %v1787 = vadd.f32 %v1391, %v1774
      %v1788 = vadd.f32 %v1396, %v1779
      %1789 = vrot.lane.b32.xlu0 %v614, 104
      %v1790 = vpop.permute.xlu0 %1789
      %1791 = vrot.lane.b32.xlu0 %v617, 104
      %v1792 = vpop.permute.xlu0 %1791
      %1793 = vrot.lane.b32.xlu0 %v622, 104
      %v1794 = vpop.permute.xlu0 %1793
      %1795 = vrot.lane.b32.xlu0 %v625, 104
      %v1796 = vpop.permute.xlu0 %1795
      %1797 = vrot.lane.b32.xlu0 %v630, 104
      %v1798 = vpop.permute.xlu0 %1797
      %1799 = vrot.lane.b32.xlu0 %v614, 72
      %v1800 = vpop.permute.xlu0 %1799
      %1801 = vrot.lane.b32.xlu0 %v617, 72
      %v1802 = vpop.permute.xlu0 %1801
      %1803 = vrot.lane.b32.xlu0 %v622, 72
      %v1804 = vpop.permute.xlu0 %1803
      %1805 = vrot.lane.b32.xlu0 %v625, 72
      %v1806 = vpop.permute.xlu0 %1805
      %1807 = vrot.lane.b32.xlu0 %v630, 72
      %v1808 = vpop.permute.xlu0 %1807
      %v1809 = vsel %vm650, %v1790, 0
      %v1811 = vsel %vm650, %v1792, 0
      %v1813 = vsel %vm650, %v1794, 0
      %v1815 = vsel %vm650, %v1796, 0
      %v1817 = vsel %vm650, %v1798, 0
      %v1819 = vsel %vm650, %v1800, 0
      %v1821 = vsel %vm650, %v1802, 0
      %v1823 = vsel %vm650, %v1804, 0
      %v1825 = vsel %vm650, %v1806, 0
      %v1827 = vsel %vm650, %v1808, 0
      %1829 = vmatprep.subr.mxu0 0.0
      %1830 = vmatpush1.xpose.msra.mxu0 %v1819
      %1831 = vmatprep.subr.mxu0 0.0
      %1832 = vmatpush1.xpose.msra.mxu0 %v1821
      %1833 = vmatprep.subr.mxu0 0.0
      %1834 = vmatpush1.xpose.msra.mxu0 %v1823
      %1835 = vmatprep.subr.mxu0 0.0
      %1836 = vmatpush1.xpose.msra.mxu0 %v1825
      %1837 = vmatprep.subr.mxu0 0.0
      %1838 = vmatpush1.xpose.msra.mxu0 %v1827
      %1839 = vmatprep.subr.mxu0 0.0
      %1840 = vmatpush1.xpose.msra.mxu0 0.0
      %1841 = vmatprep.subr.mxu0 0.0
      %1842 = vmatpush1.xpose.msra.mxu0 0.0
      %1843 = vmatprep.subr.mxu0 0.0
      %1844 = vmatpush1.xpose.msra.mxu0 0.0
      %1845 = vmatprep.subr.mxu0 0.0
      %1846 = vmatpush1.xpose.msra.mxu0 0.0
      %1847 = vmatprep.subr.mxu0 0.0
      %1848 = vmatpush1.xpose.msra.mxu0 0.0
      %1849 = vmatprep.subr.mxu0 0.0
      %1850 = vmatpush1.xpose.msra.mxu0 0.0
      %1851 = vmatprep.subr.mxu0 0.0
      %1852 = vmatpush1.xpose.msra.mxu0 0.0
      %1853 = vmatprep.subr.mxu0 0.0
      %1854 = vmatpush1.xpose.msra.mxu0 0.0
      %1855 = vmatprep.subr.mxu0 0.0
      %1856 = vmatpush1.xpose.msra.mxu0 0.0
      %1857 = vmatprep.subr.mxu0 0.0
      %1858 = vmatpush1.xpose.msra.mxu0 0.0
      %1859 = vmatprep.subr.mxu0 0.0
      %1860 = vmatpush1.xpose.msra.mxu0 0.0
      %1861 = vmatprep.subr.mxu0 0.0
      %1862 = vmatpush1.xpose.msra.mxu0 0.0
      %1863 = vmatprep.subr.mxu0 0.0
      %1864 = vmatpush1.xpose.msra.mxu0 0.0
      %1865 = vmatprep.subr.mxu0 0.0
      %1866 = vmatpush1.xpose.msra.mxu0 0.0
      %1867 = vmatprep.subr.mxu0 0.0
      %1868 = vmatpush1.xpose.msra.mxu0 0.0
      %1869 = vmatprep.subr.mxu0 0.0
      %1870 = vmatpush1.xpose.msra.mxu0 0.0
      %1871 = vmatprep.subr.mxu0 0.0
      %1872 = vmatpush1.xpose.msra.mxu0 0.0
      %1873 = vmatprep.subr.mxu0 0.0
      %1874 = vmatpush1.xpose.msra.mxu0 0.0
      %1875 = vmatprep.subr.mxu0 0.0
      %1876 = vmatpush1.xpose.msra.mxu0 0.0
      %1877 = vmatprep.subr.mxu0 0.0
      %1878 = vmatpush1.xpose.msra.mxu0 0.0
      %1879 = vmatprep.subr.mxu0 0.0
      %1880 = vmatpush1.xpose.msra.mxu0 0.0
      %1881 = vmatprep.subr.mxu0 0.0
      %1882 = vmatpush1.xpose.msra.mxu0 0.0
      %1883 = vmatprep.subr.mxu0 0.0
      %1884 = vmatpush1.xpose.msra.mxu0 0.0
      %1885 = vmatprep.subr.mxu0 0.0
      %1886 = vmatpush1.xpose.msra.mxu0 0.0
      %1887 = vmatprep.subr.mxu0 0.0
      %1888 = vmatpush1.xpose.msra.mxu0 0.0
      %1889 = vmatprep.subr.mxu0 0.0
      %1890 = vmatpush1.xpose.msra.mxu0 0.0
      %1891 = vmatprep.subr.mxu0 0.0
      %1892 = vmatpush1.xpose.msra.mxu0 0.0
      %1893 = vmatprep.mubr.f32.mxu0 0.0
      %1894 = vmatmul.mubr.f32.gmra.mrb[0].mxu0 %v1809
      %v1895 = vpop.f32.mrb[0].mxu0
      %v1896 = vadd.f32 0.0, %v1895
      %v1897 = vpop.f32.mrb[0].mxu0
      %1898 = vmatprep.mubr.f32.mxu0 0.0
      %1899 = vmatmul.mubr.f32.gmra.mrb[0].mxu0 %v1811
      %v1900 = vpop.f32.mrb[0].mxu0
      %v1901 = vadd.f32 0.0, %v1900
      %v1902 = vpop.f32.mrb[0].mxu0
      %1903 = vmatprep.mubr.f32.mxu0 0.0
      %1904 = vmatmul.mubr.f32.gmra.mrb[0].mxu0 %v1813
      %v1905 = vpop.f32.mrb[0].mxu0
      %v1906 = vadd.f32 0.0, %v1905
      %v1907 = vpop.f32.mrb[0].mxu0
      %1908 = vmatprep.mubr.f32.mxu0 0.0
      %1909 = vmatmul.mubr.f32.gmra.mrb[0].mxu0 %v1815
      %v1910 = vpop.f32.mrb[0].mxu0
      %v1911 = vadd.f32 0.0, %v1910
      %v1912 = vpop.f32.mrb[0].mxu0
      %1913 = vmatprep.mubr.f32.mxu0 0.0
      %1914 = vmatmul.mubr.f32.gmra.mrb[0].mxu0 %v1817
      %v1915 = vpop.f32.mrb[0].mxu0
      %v1916 = vadd.f32 0.0, %v1915
      %v1917 = vpop.f32.mrb[0].mxu0
      %1918 = vdwg.mxu0
      %v1919 = vmul.f32 %v1896, 0.35355338
      %v1920 = vmul.f32 %v1901, 0.35355338
      %v1921 = vmul.f32 %v1906, 0.35355338
      %v1922 = vmul.f32 %v1911, 0.35355338
      %v1923 = vmul.f32 %v1916, 0.35355338
      %v1924 = vsel %vm766, %v1919, -inf
      %1925 = vmax.xlane.f32.xlu0 %v1924
      %v1926 = vpop.xlane.xlu0 %1925
      %v1927 = vsel %vm766, %v1920, -inf
      %1928 = vmax.xlane.f32.xlu0 %v1927
      %v1929 = vpop.xlane.xlu0 %1928
      %v1930 = vsel %vm766, %v1921, -inf
      %1931 = vmax.xlane.f32.xlu0 %v1930
      %v1932 = vpop.xlane.xlu0 %1931
      %v1933 = vsel %vm766, %v1922, -inf
      %1934 = vmax.xlane.f32.xlu0 %v1933
      %v1935 = vpop.xlane.xlu0 %1934
      %v1936 = vsel %vm779, %v1923, -inf
      %1937 = vmax.xlane.f32.xlu0 %v1936
      %v1938 = vpop.xlane.xlu0 %1937
      %v1939 = vsub.f32 %v1919, %v1926
      %v1940 = vsub.f32 %v1920, %v1929
      %v1941 = vsub.f32 %v1921, %v1932
      %v1942 = vsub.f32 %v1922, %v1935
      %v1943 = vsub.f32 %v1923, %v1938
      %v1944 = vmul.f32 %v1939, 1.442695
      %v1945 = vpow.pop %v1944
      %v1946 = vmul.f32 %v1940, 1.442695
      %v1947 = vpow.pop %v1946
      %v1948 = vmul.f32 %v1941, 1.442695
      %v1949 = vpow.pop %v1948
      %v1950 = vmul.f32 %v1942, 1.442695
      %v1951 = vpow.pop %v1950
      %v1952 = vmul.f32 %v1943, 1.442695
      %v1953 = vpow.pop %v1952
      %1954 = vrot.lane.b32.xlu0 %v614, 40
      %v1955 = vpop.permute.xlu0 %1954
      %1956 = vrot.lane.b32.xlu0 %v617, 40
      %v1957 = vpop.permute.xlu0 %1956
      %1958 = vrot.lane.b32.xlu0 %v622, 40
      %v1959 = vpop.permute.xlu0 %1958
      %1960 = vrot.lane.b32.xlu0 %v625, 40
      %v1961 = vpop.permute.xlu0 %1960
      %1962 = vrot.lane.b32.xlu0 %v630, 40
      %v1963 = vpop.permute.xlu0 %1962
      %v1969 = vsel %vm766, %v1945, 0
      %v1972 = vsel %vm766, %v1947, 0
      %v1975 = vsel %vm766, %v1949, 0
      %v1978 = vsel %vm766, %v1951, 0
      %v1981 = vsel %vm766, %v1953, 0
      %v1983 = vsel %vm827, %v1963, 0
      %1985 = vmatprep.subr.mxu0 0.0
      %1986 = vmatpush1.msra.mxu0 %v1955
      %1987 = vmatprep.subr.mxu0 0.0
      %1988 = vmatpush1.msra.mxu0 %v1957
      %1989 = vmatprep.subr.mxu0 0.0
      %1990 = vmatpush1.msra.mxu0 %v1959
      %1991 = vmatprep.subr.mxu0 0.0
      %1992 = vmatpush1.msra.mxu0 %v1961
      %1993 = vmatprep.subr.mxu0 0.0
      %1994 = vmatpush1.msra.mxu0 %v1983
      %1995 = vmatprep.subr.mxu0 0.0
      %1996 = vmatpush1.msra.mxu0 0.0
      %1997 = vmatprep.subr.mxu0 0.0
      %1998 = vmatpush1.msra.mxu0 0.0
      %1999 = vmatprep.subr.mxu0 0.0
      %2000 = vmatpush1.msra.mxu0 0.0
      %2001 = vmatprep.subr.mxu0 0.0
      %2002 = vmatpush1.msra.mxu0 0.0
      %2003 = vmatprep.subr.mxu0 0.0
      %2004 = vmatpush1.msra.mxu0 0.0
      %2005 = vmatprep.subr.mxu0 0.0
      %2006 = vmatpush1.msra.mxu0 0.0
      %2007 = vmatprep.subr.mxu0 0.0
      %2008 = vmatpush1.msra.mxu0 0.0
      %2009 = vmatprep.subr.mxu0 0.0
      %2010 = vmatpush1.msra.mxu0 0.0
      %2011 = vmatprep.subr.mxu0 0.0
      %2012 = vmatpush1.msra.mxu0 0.0
      %2013 = vmatprep.subr.mxu0 0.0
      %2014 = vmatpush1.msra.mxu0 0.0
      %2015 = vmatprep.subr.mxu0 0.0
      %2016 = vmatpush1.msra.mxu0 0.0
      %2017 = vmatprep.subr.mxu0 0.0
      %2018 = vmatpush1.msra.mxu0 0.0
      %2019 = vmatprep.subr.mxu0 0.0
      %2020 = vmatpush1.msra.mxu0 0.0
      %2021 = vmatprep.subr.mxu0 0.0
      %2022 = vmatpush1.msra.mxu0 0.0
      %2023 = vmatprep.subr.mxu0 0.0
      %2024 = vmatpush1.msra.mxu0 0.0
      %2025 = vmatprep.subr.mxu0 0.0
      %2026 = vmatpush1.msra.mxu0 0.0
      %2027 = vmatprep.subr.mxu0 0.0
      %2028 = vmatpush1.msra.mxu0 0.0
      %2029 = vmatprep.subr.mxu0 0.0
      %2030 = vmatpush1.msra.mxu0 0.0
      %2031 = vmatprep.subr.mxu0 0.0
      %2032 = vmatpush1.msra.mxu0 0.0
      %2033 = vmatprep.subr.mxu0 0.0
      %2034 = vmatpush1.msra.mxu0 0.0
      %2035 = vmatprep.subr.mxu0 0.0
      %2036 = vmatpush1.msra.mxu0 0.0
      %2037 = vmatprep.subr.mxu0 0.0
      %2038 = vmatpush1.msra.mxu0 0.0
      %2039 = vmatprep.subr.mxu0 0.0
      %2040 = vmatpush1.msra.mxu0 0.0
      %2041 = vmatprep.subr.mxu0 0.0
      %2042 = vmatpush1.msra.mxu0 0.0
      %2043 = vmatprep.subr.mxu0 0.0
      %2044 = vmatpush1.msra.mxu0 0.0
      %2045 = vmatprep.subr.mxu0 0.0
      %2046 = vmatpush1.msra.mxu0 0.0
      %2047 = vmatprep.subr.mxu0 0.0
      %2048 = vmatpush1.msra.mxu0 0.0
      %2049 = vmatprep.mubr.f32.mxu0 0.0
      %2050 = vmatmul.mubr.f32.gmra.mrb[0].mxu0 %v1969
      %v2051 = vpop.f32.mrb[0].mxu0
      %v2052 = vadd.f32 0.0, %v2051
      %v2053 = vpop.f32.mrb[0].mxu0
      %2054 = vmatprep.mubr.f32.mxu0 0.0
      %2055 = vmatmul.mubr.f32.gmra.mrb[0].mxu0 %v1972
      %v2056 = vpop.f32.mrb[0].mxu0
      %v2057 = vadd.f32 0.0, %v2056
      %v2058 = vpop.f32.mrb[0].mxu0
      %2059 = vmatprep.mubr.f32.mxu0 0.0
      %2060 = vmatmul.mubr.f32.gmra.mrb[0].mxu0 %v1975
      %v2061 = vpop.f32.mrb[0].mxu0
      %v2062 = vadd.f32 0.0, %v2061
      %v2063 = vpop.f32.mrb[0].mxu0
      %2064 = vmatprep.mubr.f32.mxu0 0.0
      %2065 = vmatmul.mubr.f32.gmra.mrb[0].mxu0 %v1978
      %v2066 = vpop.f32.mrb[0].mxu0
      %v2067 = vadd.f32 0.0, %v2066
      %v2068 = vpop.f32.mrb[0].mxu0
      %2069 = vmatprep.mubr.f32.mxu0 0.0
      %2070 = vmatmul.mubr.f32.gmra.mrb[0].mxu0 %v1981
      %v2071 = vpop.f32.mrb[0].mxu0
      %v2072 = vadd.f32 0.0, %v2071
      %v2073 = vpop.f32.mrb[0].mxu0
      %2074 = vdwg.mxu0
      %v2075 = vsel %vm766, %v1945, 0.0
      %2076 = vadd.xlane.f32.xlu0 %v2075
      %v2077 = vpop.xlane.xlu0 %2076
      %v2078 = vsel %vm766, %v1947, 0.0
      %2079 = vadd.xlane.f32.xlu0 %v2078
      %v2080 = vpop.xlane.xlu0 %2079
      %v2081 = vsel %vm766, %v1949, 0.0
      %2082 = vadd.xlane.f32.xlu0 %v2081
      %v2083 = vpop.xlane.xlu0 %2082
      %v2084 = vsel %vm766, %v1951, 0.0
      %2085 = vadd.xlane.f32.xlu0 %v2084
      %v2086 = vpop.xlane.xlu0 %2085
      %v2087 = vsel %vm779, %v1953, 0.0
      %2088 = vadd.xlane.f32.xlu0 %v2087
      %v2089 = vpop.xlane.xlu0 %2088
      %v2090 = vrcp.pop %v2077
      %v2091 = vmul.f32 %v2052, %v2090
      %v2092 = vrcp.pop %v2080
      %v2093 = vmul.f32 %v2057, %v2092
      %v2094 = vrcp.pop %v2083
      %v2095 = vmul.f32 %v2062, %v2094
      %v2096 = vrcp.pop %v2086
      %v2097 = vmul.f32 %v2067, %v2096
      %v2098 = vrcp.pop %v2089
      %v2099 = vmul.f32 %v2072, %v2098
      %v2100 = vpack.c.bf16 %v2093, %v2091
      %v2101 = vpack.c.bf16 %v2097, %v2095
      %v2102 = vpack.c.bf16 %v2099, %v2099
      %v2103 = vld [vmem:[%s5 + $0xc] sm:$0xf]
      %v2105 = vsel %vm650, %v2100, 0
      %v2108 = vsel %vm650, %v2101, 0
      %v2111 = vsel %vm650, %v2102, 0
      %v2114 = vsel %vm1273, %v2103, 0
      %2116 = vmatprep.subr.bf16.mxu0 0
      %2117 = vmatpush1.bf16.msra.mxu0 %v2114
      %2118 = vmatprep.subr.bf16.mxu0 0
      %2119 = vmatpush1.bf16.msra.mxu0 0
      %2120 = vmatprep.subr.bf16.mxu0 0
      %2121 = vmatpush1.bf16.msra.mxu0 0
      %2122 = vmatprep.subr.bf16.mxu0 0
      %2123 = vmatpush1.bf16.msra.mxu0 0
      %2124 = vmatprep.subr.bf16.mxu0 0
      %2125 = vmatpush1.bf16.msra.mxu0 0
      %2126 = vmatprep.subr.bf16.mxu0 0
      %2127 = vmatpush1.bf16.msra.mxu0 0
      %2128 = vmatprep.subr.bf16.mxu0 0
      %2129 = vmatpush1.bf16.msra.mxu0 0
      %2130 = vmatprep.subr.bf16.mxu0 0
      %2131 = vmatpush1.bf16.msra.mxu0 0
      %2132 = vmatprep.subr.bf16.mxu0 0
      %2133 = vmatpush1.bf16.msra.mxu0 0
      %2134 = vmatprep.subr.bf16.mxu0 0
      %2135 = vmatpush1.bf16.msra.mxu0 0
      %2136 = vmatprep.subr.bf16.mxu0 0
      %2137 = vmatpush1.bf16.msra.mxu0 0
      %2138 = vmatprep.subr.bf16.mxu0 0
      %2139 = vmatpush1.bf16.msra.mxu0 0
      %2140 = vmatprep.subr.bf16.mxu0 0
      %2141 = vmatpush1.bf16.msra.mxu0 0
      %2142 = vmatprep.subr.bf16.mxu0 0
      %2143 = vmatpush1.bf16.msra.mxu0 0
      %2144 = vmatprep.subr.bf16.mxu0 0
      %2145 = vmatpush1.bf16.msra.mxu0 0
      %2146 = vmatprep.subr.bf16.mxu0 0
      %2147 = vmatpush1.bf16.msra.mxu0 0
      %2148 = vmatprep.mubr.bf16.mxu0 0
      %2149 = vmatmul.mubr.bf16.gmra.mrb[0].mxu0 %v2105
      %v2150 = vpop.f32.mrb[0].mxu0
      %v2151 = vadd.f32 0.0, %v2150
      %v2152 = vpop.f32.mrb[0].mxu0
      %v2153 = vpop.f32.mrb[0].mxu0
      %v2154 = vadd.f32 0.0, %v2153
      %v2155 = vpop.f32.mrb[0].mxu0
      %2156 = vmatprep.mubr.bf16.mxu0 0
      %2157 = vmatmul.mubr.bf16.gmra.mrb[0].mxu0 %v2108
      %v2158 = vpop.f32.mrb[0].mxu0
      %v2159 = vadd.f32 0.0, %v2158
      %v2160 = vpop.f32.mrb[0].mxu0
      %v2161 = vpop.f32.mrb[0].mxu0
      %v2162 = vadd.f32 0.0, %v2161
      %v2163 = vpop.f32.mrb[0].mxu0
      %2164 = vmatprep.mubr.bf16.mxu0 0
      %2165 = vmatmul.mubr.bf16.gmra.mrb[0].mxu0 %v2111
      %v2166 = vpop.f32.mrb[0].mxu0
      %v2167 = vadd.f32 0.0, %v2166
      %v2168 = vpop.f32.mrb[0].mxu0
      %v2169 = vpop.f32.mrb[0].mxu0
      %v2170 = vpop.f32.mrb[0].mxu0
      %2171 = vdwg.mxu0
      %v2172 = vadd.f32 %v1784, %v2151
      %v2173 = vadd.f32 %v1785, %v2154
      %v2174 = vadd.f32 %v1786, %v2159
      %v2175 = vadd.f32 %v1787, %v2162
      %v2176 = vadd.f32 %v1788, %v2167
      %v2177 = vadd.f32 %v447, %v2172
      %v2178 = vadd.f32 %v448, %v2173
      %v2179 = vadd.f32 %v449, %v2174
      %v2180 = vadd.f32 %v450, %v2175
      %v2181 = vadd.f32 %v451, %v2176
      %v2182 = vld [vmem:[%s6] sm:$0x1]
      %v2184 = vlaneseq
      %v2185 = vshrl.u32 %v2184, 7
      %v2186 = vsub.s32 0, %v2185
      %v2187 = vrot.slane %v2182, %v2186
      %v2189 = vadd.f32 %v2177, %v2187
      %v2190 = vadd.f32 %v2178, %v2187
      %v2191 = vadd.f32 %v2179, %v2187
      %v2192 = vadd.f32 %v2180, %v2187
      %v2193 = vadd.f32 %v2181, %v2187
      %v2194 = vld [vmem:[%s7] sm:$0x1]
      %v2195 = vld [vmem:[%s8] sm:$0x1]
      %v2196 = vsel %vm454, %v2189, 0.0
      %2197 = vadd.xlane.f32.xlu0 %v2196
      %v2198 = vpop.xlane.xlu0 %2197
      %v2199 = vsel %vm454, %v2190, 0.0
      %2200 = vadd.xlane.f32.xlu0 %v2199
      %v2201 = vpop.xlane.xlu0 %2200
      %v2202 = vsel %vm454, %v2191, 0.0
      %2203 = vadd.xlane.f32.xlu0 %v2202
      %v2204 = vpop.xlane.xlu0 %2203
      %v2205 = vsel %vm454, %v2192, 0.0
      %2206 = vadd.xlane.f32.xlu0 %v2205
      %v2207 = vpop.xlane.xlu0 %2206
      %v2208 = vsel %vm467, %v2193, 0.0
      %2209 = vadd.xlane.f32.xlu0 %v2208
      %v2210 = vpop.xlane.xlu0 %2209
      %v2211 = vmul.f32 %v2198, %v471
      %v2212 = vmul.f32 %v2201, %v471
      %v2213 = vmul.f32 %v2204, %v471
      %v2214 = vmul.f32 %v2207, %v471
      %v2215 = vmul.f32 %v2210, %v471
      %v2216 = vsub.f32 %v2189, %v2211
      %v2217 = vsub.f32 %v2190, %v2212
      %v2218 = vsub.f32 %v2191, %v2213
      %v2219 = vsub.f32 %v2192, %v2214
      %v2220 = vsub.f32 %v2193, %v2215
      %v2221 = vmul.f32 %v2216, %v2216
      %v2222 = vmul.f32 %v2217, %v2217
      %v2223 = vmul.f32 %v2218, %v2218
      %v2224 = vmul.f32 %v2219, %v2219
      %v2225 = vmul.f32 %v2220, %v2220
      %v2226 = vsel %vm454, %v2221, 0.0
      %2227 = vadd.xlane.f32.xlu0 %v2226
      %v2228 = vpop.xlane.xlu0 %2227
      %v2229 = vsel %vm454, %v2222, 0.0
      %2230 = vadd.xlane.f32.xlu0 %v2229
      %v2231 = vpop.xlane.xlu0 %2230
      %v2232 = vsel %vm454, %v2223, 0.0
      %2233 = vadd.xlane.f32.xlu0 %v2232
      %v2234 = vpop.xlane.xlu0 %2233
      %v2235 = vsel %vm454, %v2224, 0.0
      %2236 = vadd.xlane.f32.xlu0 %v2235
      %v2237 = vpop.xlane.xlu0 %2236
      %v2238 = vsel %vm467, %v2225, 0.0
      %2239 = vadd.xlane.f32.xlu0 %v2238
      %v2240 = vpop.xlane.xlu0 %2239
      %v2241 = vmul.f32 %v2228, %v471
      %v2242 = vmul.f32 %v2231, %v471
      %v2243 = vmul.f32 %v2234, %v471
      %v2244 = vmul.f32 %v2237, %v471
      %v2245 = vmul.f32 %v2240, %v471
      %v2246 = vadd.f32 %v2241, 1e-05
      %v2247 = vadd.f32 %v2242, 1e-05
      %v2248 = vadd.f32 %v2243, 1e-05
      %v2249 = vadd.f32 %v2244, 1e-05
      %v2250 = vadd.f32 %v2245, 1e-05
      %v2251 = vrsqrt.pop %v2246
      %v2252 = vrsqrt.pop %v2247
      %v2253 = vrsqrt.pop %v2248
      %v2254 = vrsqrt.pop %v2249
      %v2255 = vrsqrt.pop %v2250
      %v2256 = vmul.f32 %v2216, %v2251
      %v2257 = vmul.f32 %v2217, %v2252
      %v2258 = vmul.f32 %v2218, %v2253
      %v2259 = vmul.f32 %v2219, %v2254
      %v2260 = vmul.f32 %v2220, %v2255
      %v2262 = vlaneseq
      %v2263 = vshrl.u32 %v2262, 7
      %v2264 = vsub.s32 0, %v2263
      %v2265 = vrot.slane %v2194, %v2264
      %v2267 = vmul.f32 %v2256, %v2265
      %v2268 = vmul.f32 %v2257, %v2265
      %v2269 = vmul.f32 %v2258, %v2265
      %v2270 = vmul.f32 %v2259, %v2265
      %v2271 = vmul.f32 %v2260, %v2265
      %v2273 = vlaneseq
      %v2274 = vshrl.u32 %v2273, 7
      %v2275 = vsub.s32 0, %v2274
      %v2276 = vrot.slane %v2195, %v2275
      %v2278 = vadd.f32 %v2267, %v2276
      %v2279 = vadd.f32 %v2268, %v2276
      %v2280 = vadd.f32 %v2269, %v2276
      %v2281 = vadd.f32 %v2270, %v2276
      %v2282 = vadd.f32 %v2271, %v2276
      %v2283 = vpack.c.bf16 %v2279, %v2278
      %v2284 = vpack.c.bf16 %v2281, %v2280
      %v2285 = vpack.c.bf16 %v2282, %v2282
      %v2286 = vld [vmem:[%s9] sm:$0xf]
      %v2287 = vld [vmem:[%s9 + $0x4] sm:$0xf]
      %v2288 = vld [vmem:[%s9 + $0x8] sm:$0xf]
      %v2289 = vld [vmem:[%s9 + $0xc] sm:$0xf]
      %v2290 = vld [vmem:[%s10] sm:$0x1]
      %v2292 = vlaneseq
      %v2293 = vshrl.u32 %v2292, 7
      %v2294 = vsub.s32 0, %v2293
      %v2295 = vrot.slane %v2290, %v2294
      %v2301 = vunpack.c.l.b16 %v2286
      %v2302 = vunpack.c.l.b16 %v2287
      %v2303 = vunpack.c.l.b16 %v2288
      %v2304 = vunpack.c.l.b16 %v2289
      %v2305 = vpack.c.b16 %v2302, %v2301
      %v2306 = vpack.c.b16 %v2304, %v2303
      %v2310 = vsel %vm454, %v2283, 0
      %v2313 = vsel %vm454, %v2284, 0
      %v2316 = vsel %vm454, %v2285, 0
      %2318 = vmatprep.subr.bf16.mxu0 0
      %2319 = vmatpush1.bf16.msra.mxu0 %v2305
      %2320 = vmatprep.subr.bf16.mxu0 0
      %2321 = vmatpush1.bf16.msra.mxu0 %v2306
      %2322 = vmatprep.subr.bf16.mxu0 0
      %2323 = vmatpush1.bf16.msra.mxu0 0
      %2324 = vmatprep.subr.bf16.mxu0 0
      %2325 = vmatpush1.bf16.msra.mxu0 0
      %2326 = vmatprep.subr.bf16.mxu0 0
      %2327 = vmatpush1.bf16.msra.mxu0 0
      %2328 = vmatprep.subr.bf16.mxu0 0
      %2329 = vmatpush1.bf16.msra.mxu0 0
      %2330 = vmatprep.subr.bf16.mxu0 0
      %2331 = vmatpush1.bf16.msra.mxu0 0
      %2332 = vmatprep.subr.bf16.mxu0 0
      %2333 = vmatpush1.bf16.msra.mxu0 0
      %2334 = vmatprep.subr.bf16.mxu0 0
      %2335 = vmatpush1.bf16.msra.mxu0 0
      %2336 = vmatprep.subr.bf16.mxu0 0
      %2337 = vmatpush1.bf16.msra.mxu0 0
      %2338 = vmatprep.subr.bf16.mxu0 0
      %2339 = vmatpush1.bf16.msra.mxu0 0
      %2340 = vmatprep.subr.bf16.mxu0 0
      %2341 = vmatpush1.bf16.msra.mxu0 0
      %2342 = vmatprep.subr.bf16.mxu0 0
      %2343 = vmatpush1.bf16.msra.mxu0 0
      %2344 = vmatprep.subr.bf16.mxu0 0
      %2345 = vmatpush1.bf16.msra.mxu0 0
      %2346 = vmatprep.subr.bf16.mxu0 0
      %2347 = vmatpush1.bf16.msra.mxu0 0
      %2348 = vmatprep.subr.bf16.mxu0 0
      %2349 = vmatpush1.bf16.msra.mxu0 0
      %2350 = vmatprep.mubr.bf16.mxu0 0
      %2351 = vmatmul.mubr.bf16.gmra.mrb[0].mxu0 %v2310
      %v2352 = vpop.f32.mrb[0].mxu0
      %v2353 = vadd.f32 %v2295, %v2352
      %v2354 = vpop.f32.mrb[0].mxu0
      %v2355 = vpop.f32.mrb[0].mxu0
      %v2356 = vadd.f32 %v2295, %v2355
      %v2357 = vpop.f32.mrb[0].mxu0
      %2358 = vmatprep.mubr.bf16.mxu0 0
      %2359 = vmatmul.mubr.bf16.gmra.mrb[0].mxu0 %v2313
      %v2360 = vpop.f32.mrb[0].mxu0
      %v2361 = vadd.f32 %v2295, %v2360
      %v2362 = vpop.f32.mrb[0].mxu0
      %v2363 = vpop.f32.mrb[0].mxu0
      %v2364 = vadd.f32 %v2295, %v2363
      %v2365 = vpop.f32.mrb[0].mxu0
      %2366 = vmatprep.mubr.bf16.mxu0 0
      %2367 = vmatmul.mubr.bf16.gmra.mrb[0].mxu0 %v2316
      %v2368 = vpop.f32.mrb[0].mxu0
      %v2369 = vadd.f32 %v2295, %v2368
      %v2370 = vpop.f32.mrb[0].mxu0
      %v2371 = vpop.f32.mrb[0].mxu0
      %v2372 = vpop.f32.mrb[0].mxu0
      %2373 = vdwg.mxu0
      %v2374 = vmul.f32 %v2353, %v2353
      %v2375 = vmul.f32 %v2356, %v2356
      %v2376 = vmul.f32 %v2361, %v2361
      %v2377 = vmul.f32 %v2364, %v2364
      %v2378 = vmul.f32 %v2369, %v2369
      %v2379 = vmul.f32 %v2353, %v2374
      %v2380 = vmul.f32 %v2356, %v2375
      %v2381 = vmul.f32 %v2361, %v2376
      %v2382 = vmul.f32 %v2364, %v2377
      %v2383 = vmul.f32 %v2369, %v2378
      %v2384 = vmul.f32 %v2379, 0.044715
      %v2385 = vmul.f32 %v2380, 0.044715
      %v2386 = vmul.f32 %v2381, 0.044715
      %v2387 = vmul.f32 %v2382, 0.044715
      %v2388 = vmul.f32 %v2383, 0.044715
      %v2389 = vadd.f32 %v2353, %v2384
      %v2390 = vadd.f32 %v2356, %v2385
      %v2391 = vadd.f32 %v2361, %v2386
      %v2392 = vadd.f32 %v2364, %v2387
      %v2393 = vadd.f32 %v2369, %v2388
      %v2394 = vmul.f32 %v2389, 0.7978846
      %v2395 = vmul.f32 %v2390, 0.7978846
      %v2396 = vmul.f32 %v2391, 0.7978846
      %v2397 = vmul.f32 %v2392, 0.7978846
      %v2398 = vmul.f32 %v2393, 0.7978846
      %v2399 = vtanh.pop %v2394
      %v2400 = vtanh.pop %v2395
      %v2401 = vtanh.pop %v2396
      %v2402 = vtanh.pop %v2397
      %v2403 = vtanh.pop %v2398
      %v2404 = vadd.f32 %v2399, 1.0
      %v2405 = vadd.f32 %v2400, 1.0
      %v2406 = vadd.f32 %v2401, 1.0
      %v2407 = vadd.f32 %v2402, 1.0
      %v2408 = vadd.f32 %v2403, 1.0
      %v2409 = vmul.f32 %v2404, 0.5
      %v2410 = vmul.f32 %v2405, 0.5
      %v2411 = vmul.f32 %v2406, 0.5
      %v2412 = vmul.f32 %v2407, 0.5
      %v2413 = vmul.f32 %v2408, 0.5
      %v2414 = vmul.f32 %v2353, %v2409
      %v2415 = vmul.f32 %v2356, %v2410
      %v2416 = vmul.f32 %v2361, %v2411
      %v2417 = vmul.f32 %v2364, %v2412
      %v2418 = vmul.f32 %v2369, %v2413
      %v2419 = vpack.c.bf16 %v2415, %v2414
      %v2420 = vpack.c.bf16 %v2417, %v2416
      %v2421 = vpack.c.bf16 %v2418, %v2418
      %v2422 = vld [vmem:[%s11] sm:$0xf]
      %v2423 = vld [vmem:[%s11 + $0x4] sm:$0xf]
      %v2424 = vld [vmem:[%s11 + $0x8] sm:$0xf]
      %v2425 = vld [vmem:[%s11 + $0xc] sm:$0xf]
      %v2426 = vld [vmem:[%s11 + $0x10] sm:$0xf]
      %v2427 = vld [vmem:[%s11 + $0x14] sm:$0xf]
      %v2428 = vld [vmem:[%s11 + $0x18] sm:$0xf]
      %v2429 = vld [vmem:[%s11 + $0x1c] sm:$0xf]
      %v2430 = vld [vmem:[%s11 + $0x20] sm:$0xf]
      %v2431 = vld [vmem:[%s11 + $0x24] sm:$0xf]
      %v2432 = vld [vmem:[%s11 + $0x28] sm:$0xf]
      %v2433 = vld [vmem:[%s11 + $0x2c] sm:$0xf]
      %v2434 = vld [vmem:[%s11 + $0x30] sm:$0xf]
      %v2435 = vld [vmem:[%s11 + $0x34] sm:$0xf]
      %v2436 = vld [vmem:[%s11 + $0x38] sm:$0xf]
      %v2437 = vld [vmem:[%s11 + $0x3c] sm:$0xf]
      %v2438 = vld [vmem:[%s12] sm:$0x1]
      %v2440 = vlaneseq
      %v2441 = vshrl.u32 %v2440, 7
      %v2442 = vsub.s32 0, %v2441
      %v2443 = vrot.slane %v2438, %v2442
      %v2461 = vunpack.c.l.b16 %v2422
      %v2462 = vunpack.c.l.b16 %v2423
      %v2463 = vunpack.c.l.b16 %v2424
      %v2464 = vunpack.c.l.b16 %v2425
      %v2465 = vunpack.c.l.b16 %v2426
      %v2466 = vunpack.c.l.b16 %v2427
      %v2467 = vunpack.c.l.b16 %v2428
      %v2468 = vunpack.c.l.b16 %v2429
      %v2469 = vunpack.c.l.b16 %v2430
      %v2470 = vunpack.c.l.b16 %v2431
      %v2471 = vunpack.c.l.b16 %v2432
      %v2472 = vunpack.c.l.b16 %v2433
      %v2473 = vunpack.c.l.b16 %v2434
      %v2474 = vunpack.c.l.b16 %v2435
      %v2475 = vunpack.c.l.b16 %v2436
      %v2476 = vunpack.c.l.b16 %v2437
      %v2477 = vpack.c.b16 %v2462, %v2461
      %v2478 = vpack.c.b16 %v2464, %v2463
      %v2479 = vpack.c.b16 %v2466, %v2465
      %v2480 = vpack.c.b16 %v2468, %v2467
      %v2481 = vpack.c.b16 %v2470, %v2469
      %v2482 = vpack.c.b16 %v2472, %v2471
      %v2483 = vpack.c.b16 %v2474, %v2473
      %v2484 = vpack.c.b16 %v2476, %v2475
      %2493 = vmatprep.subr.bf16.mxu0 0
      %2494 = vmatpush1.bf16.msra.mxu0 %v2477
      %2495 = vmatprep.subr.bf16.mxu0 0
      %2496 = vmatpush1.bf16.msra.mxu0 %v2478
      %2497 = vmatprep.subr.bf16.mxu0 0
      %2498 = vmatpush1.bf16.msra.mxu0 %v2479
      %2499 = vmatprep.subr.bf16.mxu0 0
      %2500 = vmatpush1.bf16.msra.mxu0 %v2480
      %2501 = vmatprep.subr.bf16.mxu0 0
      %2502 = vmatpush1.bf16.msra.mxu0 %v2481
      %2503 = vmatprep.subr.bf16.mxu0 0
      %2504 = vmatpush1.bf16.msra.mxu0 %v2482
      %2505 = vmatprep.subr.bf16.mxu0 0
      %2506 = vmatpush1.bf16.msra.mxu0 %v2483
      %2507 = vmatprep.subr.bf16.mxu0 0
      %2508 = vmatpush1.bf16.msra.mxu0 %v2484
      %2509 = vmatprep.subr.bf16.mxu0 0
      %2510 = vmatpush1.bf16.msra.mxu0 0
      %2511 = vmatprep.subr.bf16.mxu0 0
      %2512 = vmatpush1.bf16.msra.mxu0 0
      %2513 = vmatprep.subr.bf16.mxu0 0
      %2514 = vmatpush1.bf16.msra.mxu0 0
      %2515 = vmatprep.subr.bf16.mxu0 0
      %2516 = vmatpush1.bf16.msra.mxu0 0
      %2517 = vmatprep.subr.bf16.mxu0 0
      %2518 = vmatpush1.bf16.msra.mxu0 0
      %2519 = vmatprep.subr.bf16.mxu0 0
      %2520 = vmatpush1.bf16.msra.mxu0 0
      %2521 = vmatprep.subr.bf16.mxu0 0
      %2522 = vmatpush1.bf16.msra.mxu0 0
      %2523 = vmatprep.subr.bf16.mxu0 0
      %2524 = vmatpush1.bf16.msra.mxu0 0
      %2525 = vmatprep.mubr.bf16.mxu0 0
      %2526 = vmatmul.mubr.bf16.gmra.mrb[0].mxu0 %v2419
      %v2527 = vpop.f32.mrb[0].mxu0
      %v2528 = vadd.f32 %v2443, %v2527
      %v2529 = vpop.f32.mrb[0].mxu0
      %v2530 = vpop.f32.mrb[0].mxu0
      %v2531 = vadd.f32 %v2443, %v2530
      %v2532 = vpop.f32.mrb[0].mxu0
      %2533 = vmatprep.mubr.bf16.mxu0 0
      %2534 = vmatmul.mubr.bf16.gmra.mrb[0].mxu0 %v2420
      %v2535 = vpop.f32.mrb[0].mxu0
      %v2536 = vadd.f32 %v2443, %v2535
      %v2537 = vpop.f32.mrb[0].mxu0
      %v2538 = vpop.f32.mrb[0].mxu0
      %v2539 = vadd.f32 %v2443, %v2538
      %v2540 = vpop.f32.mrb[0].mxu0
      %2541 = vmatprep.mubr.bf16.mxu0 0
      %2542 = vmatmul.mubr.bf16.gmra.mrb[0].mxu0 %v2421
      %v2543 = vpop.f32.mrb[0].mxu0
      %v2544 = vadd.f32 %v2443, %v2543
      %v2545 = vpop.f32.mrb[0].mxu0
      %v2546 = vpop.f32.mrb[0].mxu0
      %v2547 = vpop.f32.mrb[0].mxu0
      %2548 = vdwg.mxu0
      %v2549 = vadd.f32 %v2189, %v2528
      %v2550 = vadd.f32 %v2190, %v2531
      %v2551 = vadd.f32 %v2191, %v2536
      %v2552 = vadd.f32 %v2192, %v2539
      %v2553 = vadd.f32 %v2193, %v2544
      %v2554 = vpack.c.bf16 %v2550, %v2549
      %v2555 = vpack.c.bf16 %v2552, %v2551
      %v2556 = vpack.c.bf16 %v2553, %v2553
      %v2560 = vunpack.c.l.b16 %v2554
      %v2561 = vunpack.c.h.b16 %v2554
      %v2562 = vunpack.c.l.b16 %v2555
      %v2563 = vunpack.c.h.b16 %v2555
      %v2564 = vunpack.c.l.b16 %v2556
      %v2565 = vpack.c.b16 %v2560, %v2560
      %v2566 = vpack.c.b16 %v2561, %v2561
      %v2567 = vpack.c.b16 %v2562, %v2562
      %v2568 = vpack.c.b16 %v2563, %v2563
      %v2569 = vpack.c.b16 %v2564, %v2564
      %vm2575 = vcmask 257024
      %2576 = vst.msk [vmem:[%s440] sm:$0xf] %vm2575, %v2565
      %2577 = vst.msk [vmem:[%s440 + $0x4] sm:$0xf] %vm2575, %v2566
      %2578 = vst.msk [vmem:[%s440 + $0x8] sm:$0xf] %vm2575, %v2567
      %2579 = vst.msk [vmem:[%s440 + $0xc] sm:$0xf] %vm2575, %v2568
      %vm2580 = vcmask 253952
      %2581 = vst.msk [vmem:[%s440 + $0x10] sm:$0x1] %vm2580, %v2569
      %p2582 = scmp.lt.s32.totalorder %s24, 1
      %s2583 = scalar_select %p2582, %s24, 1
      %s2584 = smul.addr %s2583, 5
      %s2585 = smul.addr %s2584, 4
      %s2586 = scalar_lea.vmem %s13, %s2585
      // Predicated region
      $region73: #{longlrm_forward.5} parent=71 // pred_check
        %p2587 = pneg %p320
      $region74: #{longlrm_forward.5} parent=71 // pred_check_branch
        %2589 = sbr.rel (%p2587) target = $region76
      $region75: #{longlrm_forward.5} parent=71 // pred_region
        _
      $region76: #{longlrm_forward.5} parent=71 // pred_fallthru
        _
    $region72: #{longlrm_forward.5} parent=5 // pred_fallthru
      _
    %p2590 = scmp.le.s32.totalorder 2, %s19
    // Predicated region
    $region77: #{longlrm_forward.5} parent=5 // pred_check
      %p2591 = pneg %p2590
    $region78: #{longlrm_forward.5} parent=5 // pred_check_branch
      %2593 = sbr.rel (%p2591) target = $region80
    $region79: #{longlrm_forward.5} parent=5 // pred_region
      %s2594 = ssub.s32 %s19, 2
      // Predicated region
      $region81: #{longlrm_forward.5} parent=79 // pred_check
        %p2595 = pneg %p326
      $region82: #{longlrm_forward.5} parent=79 // pred_check_branch
        %2597 = sbr.rel (%p2595) target = $region84
      $region83: #{longlrm_forward.5} parent=79 // pred_region
        %p2598 = scmp.lt.s32.totalorder %s25, 1
        %s2599 = scalar_select %p2598, %s25, 1
        %s2600 = smul.addr %s2599, 5
        %s2601 = smul.addr %s2600, 4
        %s2602 = scalar_lea.vmem %s13, %s2601
      $region84: #{longlrm_forward.5} parent=79 // pred_fallthru
        _
    $region80: #{longlrm_forward.5} parent=5 // pred_fallthru
      _
  $region6: #{longlrm_forward.5} parent=0 // loop_footer
    %s23 = sadd.s32 1, %s19
  $region7: #{longlrm_forward.5} parent=0 // loop_footer_branch
    %18 = sbr.rel target = $region3
  $region8: #{longlrm_forward.5} parent=0 // loop_exit
    _

// kernel: tile.18
$region0: #{tile.18}
  #allocation0 [shape = 's32[1]{0}', space=sflag, size = 0x4, scoped, tag = 'scoped memory for tile.18']
  %s0 = inlined_call_operand.vmem [shape: f32[14], index: 0, kind: input, shape index: {}]
  %s1 = inlined_call_operand.vmem [shape: f32[16,14], index: 1, kind: output, shape index: {}]
  // Predicated region
  $region2: #{tile.18} parent=0 // pred_check
    _
  $region3: #{tile.18} parent=0 // pred_check_branch
    %3 = sbr.rel (0) target = $region5
  $region4: #{tile.18} parent=0 // pred_region
    _
  $region5: #{tile.18} parent=0 // pred_fallthru
    _
  %v4 = vld [vmem:[%s0] ss:$0 sm:$0xff]
  %5 = vst [vmem:[%s1] sm:$0xff] %v4
  %s6 = scalar_lea.vmem %s1, 8
  %7 = vst [vmem:[%s6] sm:$0xff] %v4

// kernel: tile.19
$region0: #{tile.19}
  %s0 = inlined_call_operand.vmem [shape: f32[16,14], index: 0, kind: input, shape index: {}]
  %s1 = inlined_call_operand.vmem [shape: f32[224], index: 1, kind: output, shape index: {}]
  $region1: #{tile.19} parent=0
    #allocation0 [shape = 'u8[4096]{0}', space=vmem, size = 0x1000, scoped, tag = 'scoped mem for output reshape']
    %v2 = vld [vmem:[%s0] sm:$0x1]
    %vm3 = vcmask 113664
    %4 = vst.msk [vmem:[#allocation0] sm:$0x1] %vm3, %v2
    %s5 = scalar_lea.vmem %s0, 9
    %v6 = vld [vmem:[%s5] sm:$0x1]
    %s7 = scalar_lea.vmem %s0, 9
    %v8 = vld [vmem:[%s7] sm:$0x1]
    %vm9 = vcmask 15360
    %v10 = vsel %vm9, %v8, %v6
    %11 = vrot.lane.b32.xlu0 %v10, 126
    %v12 = vpop.permute.xlu0 %11
    %vm13 = vcmask 97280
    %s14 = scalar_lea.vmem [#allocation0], 1
    %15 = vst.msk [vmem:[%s14] sm:$0x1] %vm13, %v12
    %vm16 = vcmask 1048560
    %17 = vst.msk [vmem:[#allocation0] sm:$0x1] %vm16, %v12
    %s18 = scalar_lea.vmem %s0, 8
    %v19 = vld [vmem:[%s18] sm:$0x1]
    %20 = vrot.lane.b32.xlu0 %v19, 112
    %v21 = vpop.permute.xlu0 %20
    %vm22 = vcmask 1032064
    %23 = vst.msk [vmem:[#allocation0] sm:$0x1] %vm22, %v21
    %s24 = scalar_lea.vmem %s0, 7
    %v25 = vld [vmem:[%s24] sm:$0x1]
    %26 = vrot.lane.b32.xlu0 %v25, 98
    %v27 = vpop.permute.xlu0 %26
    %vm28 = vcmask 917264
    %29 = vst.msk [vmem:[#allocation0] sm:$0x1] %vm28, %v27
    %s30 = scalar_lea.vmem %s0, 6
    %v31 = vld [vmem:[%s30] sm:$0x1]
    %32 = vrot.lane.b32.xlu0 %v31, 84
    %v33 = vpop.permute.xlu0 %32
    %vm34 = vcmask 802464
    %35 = vst.msk [vmem:[#allocation0] sm:$0x1] %vm34, %v33
    %s36 = scalar_lea.vmem %s0, 15
    %v37 = vld [vmem:[%s36] sm:$0x1]
    %38 = vrot.lane.b32.xlu0 %v37, 82
    %v39 = vpop.permute.xlu0 %38
    %vm40 = vcmask 786064
    %s41 = scalar_lea.vmem [#allocation0], 1
    %42 = vst.msk [vmem:[%s41] sm:$0x1] %vm40, %v39
    %s43 = scalar_lea.vmem %s0, 5
    %v44 = vld [vmem:[%s43] sm:$0x1]
    %45 = vrot.lane.b32.xlu0 %v44, 70
    %v46 = vpop.permute.xlu0 %45
    %vm47 = vcmask 687664
    %48 = vst.msk [vmem:[#allocation0] sm:$0x1] %vm47, %v46
    %s49 = scalar_lea.vmem %s0, 14
    %v50 = vld [vmem:[%s49] sm:$0x1]
    %51 = vrot.lane.b32.xlu0 %v50, 68
    %v52 = vpop.permute.xlu0 %51
    %vm53 = vcmask 671264
    %s54 = scalar_lea.vmem [#allocation0], 1
    %55 = vst.msk [vmem:[%s54] sm:$0x1] %vm53, %v52
    %s56 = scalar_lea.vmem %s0, 4
    %v57 = vld [vmem:[%s56] sm:$0x1]
    %58 = vrot.lane.b32.xlu0 %v57, 56
    %v59 = vpop.permute.xlu0 %58
    %vm60 = vcmask 572864
    %61 = vst.msk [vmem:[#allocation0] sm:$0x1] %vm60, %v59
    %s62 = scalar_lea.vmem %s0, 13
    %v63 = vld [vmem:[%s62] sm:$0x1]
    %64 = vrot.lane.b32.xlu0 %v63, 54
    %v65 = vpop.permute.xlu0 %64
    %vm66 = vcmask 556464
    %s67 = scalar_lea.vmem [#allocation0], 1
    %68 = vst.msk [vmem:[%s67] sm:$0x1] %vm66, %v65
    %s69 = scalar_lea.vmem %s0, 3
    %v70 = vld [vmem:[%s69] sm:$0x1]
    %71 = vrot.lane.b32.xlu0 %v70, 42
    %v72 = vpop.permute.xlu0 %71
    %vm73 = vcmask 458064
    %74 = vst.msk [vmem:[#allocation0] sm:$0x1] %vm73, %v72
    %s75 = scalar_lea.vmem %s0, 12
    %v76 = vld [vmem:[%s75] sm:$0x1]
    %77 = vrot.lane.b32.xlu0 %v76, 40
    %v78 = vpop.permute.xlu0 %77
    %vm79 = vcmask 441664
    %s80 = scalar_lea.vmem [#allocation0], 1
    %81 = vst.msk [vmem:[%s80] sm:$0x1] %vm79, %v78
    %s82 = scalar_lea.vmem %s0, 2
    %v83 = vld [vmem:[%s82] sm:$0x1]
    %84 = vrot.lane.b32.xlu0 %v83, 28
    %v85 = vpop.permute.xlu0 %84
    %vm86 = vcmask 343264
    %87 = vst.msk [vmem:[#allocation0] sm:$0x1] %vm86, %v85
    %s88 = scalar_lea.vmem %s0, 11
    %v89 = vld [vmem:[%s88] sm:$0x1]
    %90 = vrot.lane.b32.xlu0 %v89, 26
    %v91 = vpop.permute.xlu0 %90
    %vm92 = vcmask 326864
    %s93 = scalar_lea.vmem [#allocation0], 1
    %94 = vst.msk [vmem:[%s93] sm:$0x1] %vm92, %v91
    %s95 = scalar_lea.vmem %s0, 1
    %v96 = vld [vmem:[%s95] sm:$0x1]
    %97 = vrot.lane.b32.xlu0 %v96, 14
    %v98 = vpop.permute.xlu0 %97
    %vm99 = vcmask 228464
    %100 = vst.msk [vmem:[#allocation0] sm:$0x1] %vm99, %v98
    %s101 = scalar_lea.vmem %s0, 10
    %v102 = vld [vmem:[%s101] sm:$0x1]
    %103 = vrot.lane.b32.xlu0 %v102, 12
    %v104 = vpop.permute.xlu0 %103
    %vm105 = vcmask 212064
    %s106 = scalar_lea.vmem [#allocation0], 1
    %107 = vst.msk [vmem:[%s106] sm:$0x1] %vm105, %v104
    %s109 = sshllo.u32 0, 2
    %v111 = vld [vmem:[#allocation0] sm:%s109]
    %s112 = sshllo.u32 0, 2
    %113 = vst [vmem:[%s1] sm:%s112] %v111

// kernel: longlrm_forward.7
$region0: #{longlrm_forward.7}
  #allocation0 [shape = 'u32[]', space=smem, size = 0x4, offset = 0x4, fixed_abs, tag = 'smem constant byte address 0x4 - core index']
  #allocation1 [shape = 'u32[144,128]{1,0:T(1,128)}', space=vmem, size = 0x12000, scoped, tag = 'internal scratch']
  %s0 = inlined_call_operand.vmem [shape: bf16[64,32], index: 0, kind: input, shape index: {}]
  %s1 = inlined_call_operand.vmem [shape: f32[1,32], index: 1, kind: input, shape index: {}]
  %s2 = inlined_call_operand.vmem [shape: f32[1,32], index: 2, kind: input, shape index: {}]
  %s3 = inlined_call_operand.vmem [shape: bf16[32,256], index: 3, kind: input, shape index: {}]
  %s4 = inlined_call_operand.vmem [shape: f32[64,48], index: 4, kind: input, shape index: {}]
  %s5 = inlined_call_operand.vmem [shape: f32[64,48], index: 5, kind: input, shape index: {}]
  %s6 = inlined_call_operand.vmem [shape: f32[256,16], index: 6, kind: input, shape index: {}]
  %s7 = inlined_call_operand.vmem [shape: f32[16,48], index: 7, kind: input, shape index: {}]
  %s8 = inlined_call_operand.vmem [shape: f32[48,256], index: 8, kind: input, shape index: {}]
  %s9 = inlined_call_operand.vmem [shape: f32[1,256], index: 9, kind: input, shape index: {}]
  %s10 = inlined_call_operand.vmem [shape: f32[1,256], index: 10, kind: input, shape index: {}]
  %s11 = inlined_call_operand.vmem [shape: f32[1,256], index: 11, kind: input, shape index: {}]
  %s12 = inlined_call_operand.vmem [shape: f32[64,256], index: 12, kind: output, shape index: {}]
  %s13 = sld [smem:[#allocation0]]
  $region81: #{longlrm_forward.7} parent=0
    _
  %s15 = ssub.s32 1, %s13
  %s16 = scalar_select 0, %s15, %s13
  loop: start=0, step=1, limit=4
  $region2: #{longlrm_forward.7} parent=0 // loop_pre_header
    _
  $region3: #{longlrm_forward.7} parent=0 // loop_header
    %s18 = sphi 0, %s22
    %p19 = scmp.ge.s32.totalorder %s18, 4
    %s28 = sphi 0, %s30
    %s31 = sphi 0, %s28
    %s32 = sphi 0, %s31
    %s48 = sphi 0, %s32
    %s52 = sphi 0, %s52
    %s54 = sphi 0, %s52
    %s55 = sphi 0, %s54
    %s69 = sphi 0, %s55
    %s73 = sphi 0, %s73
    %s75 = sphi 0, %s73
    %s76 = sphi 0, %s75
    %s90 = sphi 0, %s76
    %s94 = sphi 0, %s94
    %s96 = sphi 0, %s94
    %s97 = sphi 0, %s96
    %s111 = sphi 0, %s97
    %s117 = sphi 0, %s119
    %s120 = sphi 0, %s117
    %s121 = sphi 0, %s120
    %s137 = sphi 0, %s121
    %s143 = sphi 0, %s145
    %s146 = sphi 0, %s143
    %s147 = sphi 0, %s146
    %s163 = sphi 0, %s147
    %s167 = sphi 0, %s167
    %s169 = sphi 0, %s167
    %s170 = sphi 0, %s169
    %s184 = sphi 0, %s170
    %s188 = sphi 0, %s188
    %s190 = sphi 0, %s188
    %s191 = sphi 0, %s190
    %s205 = sphi 0, %s191
    %s209 = sphi 0, %s209
    %s211 = sphi 0, %s209
    %s212 = sphi 0, %s211
    %s226 = sphi 0, %s212
    %s230 = sphi 0, %s230
    %s232 = sphi 0, %s230
    %s233 = sphi 0, %s232
    %s247 = sphi 0, %s233
    %s251 = sphi 0, %s251
    %s253 = sphi 0, %s251
    %s254 = sphi 0, %s253
    %s268 = sphi 0, %s254
    %s272 = sphi 0, %s272
    %s274 = sphi 0, %s272
    %s275 = sphi 0, %s274
    %s289 = sphi 0, %s275
    %s295 = sphi 0, %s297
    %s298 = sphi 0, %s295
    %s299 = sphi 0, %s298
    %s315 = sphi 0, %s299
  $region4: #{longlrm_forward.7} parent=0 // loop_header_branch
    %21 = sbr.rel (%p19) target = $region8
  $region5: #{longlrm_forward.7} parent=0 // loop_body
    %s23 = ssub.s32 %s18, 1
    %s24 = ssub.s32 %s18, 2
    %s25 = sadd.s32 %s18, 1
    %s26 = ssub.s32 %s18, %s25
    %p27 = scmp.eq.s32.totalorder %s26, 0
    %s29 = sadd.s32 %s28, 1
    %s30 = scalar_select %p27, %s28, %s29
    %p33 = pneg %p27
    %p34 = scmp.eq.s32.totalorder %s18, 1
    %p35 = por %p33, %p34
    %p36 = scmp.ne.s32.totalorder %s28, %s31
    %p37 = scmp.eq.s32.totalorder %s18, 0
    %p38 = por %p36, %p37
    %p39 = scmp.ne.s32.totalorder %s28, %s31
    %p40 = scmp.eq.s32.totalorder %s23, 1
    %p41 = por %p39, %p40
    %p42 = scmp.ne.s32.totalorder %s31, %s32
    %p43 = scmp.eq.s32.totalorder %s23, 0
    %p44 = por %p42, %p43
    %p45 = scmp.ne.s32.totalorder %s31, %s32
    %p46 = scmp.eq.s32.totalorder %s24, 1
    %p47 = por %p45, %p46
    %p49 = scmp.ne.s32.totalorder %s32, %s48
    %p50 = scmp.eq.s32.totalorder %s24, 0
    %p51 = por %p49, %p50
    %s53 = sadd.s32 %s52, 1
    %p56 = scmp.eq.s32.totalorder %s18, 1
    %p57 = scmp.ne.s32.totalorder %s52, %s54
    %p58 = scmp.eq.s32.totalorder %s18, 0
    %p59 = por %p57, %p58
    %p60 = scmp.ne.s32.totalorder %s52, %s54
    %p61 = scmp.eq.s32.totalorder %s23, 1
    %p62 = por %p60, %p61
    %p63 = scmp.ne.s32.totalorder %s54, %s55
    %p64 = scmp.eq.s32.totalorder %s23, 0
    %p65 = por %p63, %p64
    %p66 = scmp.ne.s32.totalorder %s54, %s55
    %p67 = scmp.eq.s32.totalorder %s24, 1
    %p68 = por %p66, %p67
    %p70 = scmp.ne.s32.totalorder %s55, %s69
    %p71 = scmp.eq.s32.totalorder %s24, 0
    %p72 = por %p70, %p71
    %s74 = sadd.s32 %s73, 1
    %p77 = scmp.eq.s32.totalorder %s18, 1
    %p78 = scmp.ne.s32.totalorder %s73, %s75
    %p79 = scmp.eq.s32.totalorder %s18, 0
    %p80 = por %p78, %p79
    %p81 = scmp.ne.s32.totalorder %s73, %s75
    %p82 = scmp.eq.s32.totalorder %s23, 1
    %p83 = por %p81, %p82
    %p84 = scmp.ne.s32.totalorder %s75, %s76
    %p85 = scmp.eq.s32.totalorder %s23, 0
    %p86 = por %p84, %p85
    %p87 = scmp.ne.s32.totalorder %s75, %s76
    %p88 = scmp.eq.s32.totalorder %s24, 1
    %p89 = por %p87, %p88
    %p91 = scmp.ne.s32.totalorder %s76, %s90
    %p92 = scmp.eq.s32.totalorder %s24, 0
    %p93 = por %p91, %p92
    %s95 = sadd.s32 %s94, 1
    %p98 = scmp.eq.s32.totalorder %s18, 1
    %p99 = scmp.ne.s32.totalorder %s94, %s96
    %p100 = scmp.eq.s32.totalorder %s18, 0
    %p101 = por %p99, %p100
    %p102 = scmp.ne.s32.totalorder %s94, %s96
    %p103 = scmp.eq.s32.totalorder %s23, 1
    %p104 = por %p102, %p103
    %p105 = scmp.ne.s32.totalorder %s96, %s97
    %p106 = scmp.eq.s32.totalorder %s23, 0
    %p107 = por %p105, %p106
    %p108 = scmp.ne.s32.totalorder %s96, %s97
    %p109 = scmp.eq.s32.totalorder %s24, 1
    %p110 = por %p108, %p109
    %p112 = scmp.ne.s32.totalorder %s97, %s111
    %p113 = scmp.eq.s32.totalorder %s24, 0
    %p114 = por %p112, %p113
    %s115 = ssub.s32 %s18, %s25
    %p116 = scmp.eq.s32.totalorder %s115, 0
    %s118 = sadd.s32 %s117, 1
    %s119 = scalar_select %p116, %s117, %s118
    %p122 = pneg %p116
    %p123 = scmp.eq.s32.totalorder %s18, 1
    %p124 = por %p122, %p123
    %p125 = scmp.ne.s32.totalorder %s117, %s120
    %p126 = scmp.eq.s32.totalorder %s18, 0
    %p127 = por %p125, %p126
    %p128 = scmp.ne.s32.totalorder %s117, %s120
    %p129 = scmp.eq.s32.totalorder %s23, 1
    %p130 = por %p128, %p129
    %p131 = scmp.ne.s32.totalorder %s120, %s121
    %p132 = scmp.eq.s32.totalorder %s23, 0
    %p133 = por %p131, %p132
    %p134 = scmp.ne.s32.totalorder %s120, %s121
    %p135 = scmp.eq.s32.totalorder %s24, 1
    %p136 = por %p134, %p135
    %p138 = scmp.ne.s32.totalorder %s121, %s137
    %p139 = scmp.eq.s32.totalorder %s24, 0
    %p140 = por %p138, %p139
    %s141 = ssub.s32 %s18, %s25
    %p142 = scmp.eq.s32.totalorder %s141, 0
    %s144 = sadd.s32 %s143, 1
    %s145 = scalar_select %p142, %s143, %s144
    %p148 = pneg %p142
    %p149 = scmp.eq.s32.totalorder %s18, 1
    %p150 = por %p148, %p149
    %p151 = scmp.ne.s32.totalorder %s143, %s146
    %p152 = scmp.eq.s32.totalorder %s18, 0
    %p153 = por %p151, %p152
    %p154 = scmp.ne.s32.totalorder %s143, %s146
    %p155 = scmp.eq.s32.totalorder %s23, 1
    %p156 = por %p154, %p155
    %p157 = scmp.ne.s32.totalorder %s146, %s147
    %p158 = scmp.eq.s32.totalorder %s23, 0
    %p159 = por %p157, %p158
    %p160 = scmp.ne.s32.totalorder %s146, %s147
    %p161 = scmp.eq.s32.totalorder %s24, 1
    %p162 = por %p160, %p161
    %p164 = scmp.ne.s32.totalorder %s147, %s163
    %p165 = scmp.eq.s32.totalorder %s24, 0
    %p166 = por %p164, %p165
    %s168 = sadd.s32 %s167, 1
    %p171 = scmp.eq.s32.totalorder %s18, 1
    %p172 = scmp.ne.s32.totalorder %s167, %s169
    %p173 = scmp.eq.s32.totalorder %s18, 0
    %p174 = por %p172, %p173
    %p175 = scmp.ne.s32.totalorder %s167, %s169
    %p176 = scmp.eq.s32.totalorder %s23, 1
    %p177 = por %p175, %p176
    %p178 = scmp.ne.s32.totalorder %s169, %s170
    %p179 = scmp.eq.s32.totalorder %s23, 0
    %p180 = por %p178, %p179
    %p181 = scmp.ne.s32.totalorder %s169, %s170
    %p182 = scmp.eq.s32.totalorder %s24, 1
    %p183 = por %p181, %p182
    %p185 = scmp.ne.s32.totalorder %s170, %s184
    %p186 = scmp.eq.s32.totalorder %s24, 0
    %p187 = por %p185, %p186
    %s189 = sadd.s32 %s188, 1
    %p192 = scmp.eq.s32.totalorder %s18, 1
    %p193 = scmp.ne.s32.totalorder %s188, %s190
    %p194 = scmp.eq.s32.totalorder %s18, 0
    %p195 = por %p193, %p194
    %p196 = scmp.ne.s32.totalorder %s188, %s190
    %p197 = scmp.eq.s32.totalorder %s23, 1
    %p198 = por %p196, %p197
    %p199 = scmp.ne.s32.totalorder %s190, %s191
    %p200 = scmp.eq.s32.totalorder %s23, 0
    %p201 = por %p199, %p200
    %p202 = scmp.ne.s32.totalorder %s190, %s191
    %p203 = scmp.eq.s32.totalorder %s24, 1
    %p204 = por %p202, %p203
    %p206 = scmp.ne.s32.totalorder %s191, %s205
    %p207 = scmp.eq.s32.totalorder %s24, 0
    %p208 = por %p206, %p207
    %s210 = sadd.s32 %s209, 1
    %p213 = scmp.eq.s32.totalorder %s18, 1
    %p214 = scmp.ne.s32.totalorder %s209, %s211
    %p215 = scmp.eq.s32.totalorder %s18, 0
    %p216 = por %p214, %p215
    %p217 = scmp.ne.s32.totalorder %s209, %s211
    %p218 = scmp.eq.s32.totalorder %s23, 1
    %p219 = por %p217, %p218
    %p220 = scmp.ne.s32.totalorder %s211, %s212
    %p221 = scmp.eq.s32.totalorder %s23, 0
    %p222 = por %p220, %p221
    %p223 = scmp.ne.s32.totalorder %s211, %s212
    %p224 = scmp.eq.s32.totalorder %s24, 1
    %p225 = por %p223, %p224
    %p227 = scmp.ne.s32.totalorder %s212, %s226
    %p228 = scmp.eq.s32.totalorder %s24, 0
    %p229 = por %p227, %p228
    %s231 = sadd.s32 %s230, 1
    %p234 = scmp.eq.s32.totalorder %s18, 1
    %p235 = scmp.ne.s32.totalorder %s230, %s232
    %p236 = scmp.eq.s32.totalorder %s18, 0
    %p237 = por %p235, %p236
    %p238 = scmp.ne.s32.totalorder %s230, %s232
    %p239 = scmp.eq.s32.totalorder %s23, 1
    %p240 = por %p238, %p239
    %p241 = scmp.ne.s32.totalorder %s232, %s233
    %p242 = scmp.eq.s32.totalorder %s23, 0
    %p243 = por %p241, %p242
    %p244 = scmp.ne.s32.totalorder %s232, %s233
    %p245 = scmp.eq.s32.totalorder %s24, 1
    %p246 = por %p244, %p245
    %p248 = scmp.ne.s32.totalorder %s233, %s247
    %p249 = scmp.eq.s32.totalorder %s24, 0
    %p250 = por %p248, %p249
    %s252 = sadd.s32 %s251, 1
    %p255 = scmp.eq.s32.totalorder %s18, 1
    %p256 = scmp.ne.s32.totalorder %s251, %s253
    %p257 = scmp.eq.s32.totalorder %s18, 0
    %p258 = por %p256, %p257
    %p259 = scmp.ne.s32.totalorder %s251, %s253
    %p260 = scmp.eq.s32.totalorder %s23, 1
    %p261 = por %p259, %p260
    %p262 = scmp.ne.s32.totalorder %s253, %s254
    %p263 = scmp.eq.s32.totalorder %s23, 0
    %p264 = por %p262, %p263
    %p265 = scmp.ne.s32.totalorder %s253, %s254
    %p266 = scmp.eq.s32.totalorder %s24, 1
    %p267 = por %p265, %p266
    %p269 = scmp.ne.s32.totalorder %s254, %s268
    %p270 = scmp.eq.s32.totalorder %s24, 0
    %p271 = por %p269, %p270
    %s273 = sadd.s32 %s272, 1
    %p276 = scmp.eq.s32.totalorder %s18, 1
    %p277 = scmp.ne.s32.totalorder %s272, %s274
    %p278 = scmp.eq.s32.totalorder %s18, 0
    %p279 = por %p277, %p278
    %p280 = scmp.ne.s32.totalorder %s272, %s274
    %p281 = scmp.eq.s32.totalorder %s23, 1
    %p282 = por %p280, %p281
    %p283 = scmp.ne.s32.totalorder %s274, %s275
    %p284 = scmp.eq.s32.totalorder %s23, 0
    %p285 = por %p283, %p284
    %p286 = scmp.ne.s32.totalorder %s274, %s275
    %p287 = scmp.eq.s32.totalorder %s24, 1
    %p288 = por %p286, %p287
    %p290 = scmp.ne.s32.totalorder %s275, %s289
    %p291 = scmp.eq.s32.totalorder %s24, 0
    %p292 = por %p290, %p291
    %s293 = ssub.s32 %s18, %s25
    %p294 = scmp.eq.s32.totalorder %s293, 0
    %s296 = sadd.s32 %s295, 1
    %s297 = scalar_select %p294, %s295, %s296
    %p300 = pneg %p294
    %p301 = scmp.eq.s32.totalorder %s18, 1
    %p302 = por %p300, %p301
    %p303 = scmp.ne.s32.totalorder %s295, %s298
    %p304 = scmp.eq.s32.totalorder %s18, 0
    %p305 = por %p303, %p304
    %p306 = scmp.ne.s32.totalorder %s295, %s298
    %p307 = scmp.eq.s32.totalorder %s23, 1
    %p308 = por %p306, %p307
    %p309 = scmp.ne.s32.totalorder %s298, %s299
    %p310 = scmp.eq.s32.totalorder %s23, 0
    %p311 = por %p309, %p310
    %p312 = scmp.ne.s32.totalorder %s298, %s299
    %p313 = scmp.eq.s32.totalorder %s24, 1
    %p314 = por %p312, %p313
    %p316 = scmp.ne.s32.totalorder %s299, %s315
    %p317 = scmp.eq.s32.totalorder %s24, 0
    %p318 = por %p316, %p317
    %p319 = scmp.le.s32.totalorder 1, %s18
    %p320 = scmp.lt.s32.totalorder %s18, 3
    %p321 = pnand %p319, %p320
    %p322 = pneg %p321
    // Predicated region
    $region9: #{longlrm_forward.7} parent=5 // pred_check
      _
    $region10: #{longlrm_forward.7} parent=5 // pred_check_branch
      %324 = sbr.rel (%p321) target = $region12
    $region11: #{longlrm_forward.7} parent=5 // pred_region
      %s325 = ssub.s32 %s18, 1
      // Predicated region
      $region13: #{longlrm_forward.7} parent=11 // pred_check
        %p326 = pneg %p65
      $region14: #{longlrm_forward.7} parent=11 // pred_check_branch
        %328 = sbr.rel (%p326) target = $region16
      $region15: #{longlrm_forward.7} parent=11 // pred_region
        _
      $region16: #{longlrm_forward.7} parent=11 // pred_fallthru
        _
      // Predicated region
      $region17: #{longlrm_forward.7} parent=11 // pred_check
        %p329 = pneg %p86
      $region18: #{longlrm_forward.7} parent=11 // pred_check_branch
        %331 = sbr.rel (%p329) target = $region20
      $region19: #{longlrm_forward.7} parent=11 // pred_region
        _
      $region20: #{longlrm_forward.7} parent=11 // pred_fallthru
        _
      // Predicated region
      $region21: #{longlrm_forward.7} parent=11 // pred_check
        %p332 = pneg %p107
      $region22: #{longlrm_forward.7} parent=11 // pred_check_branch
        %334 = sbr.rel (%p332) target = $region24
      $region23: #{longlrm_forward.7} parent=11 // pred_region
        _
      $region24: #{longlrm_forward.7} parent=11 // pred_fallthru
        _
      // Predicated region
      $region25: #{longlrm_forward.7} parent=11 // pred_check
        %p335 = pneg %p180
      $region26: #{longlrm_forward.7} parent=11 // pred_check_branch
        %337 = sbr.rel (%p335) target = $region28
      $region27: #{longlrm_forward.7} parent=11 // pred_region
        _
      $region28: #{longlrm_forward.7} parent=11 // pred_fallthru
        _
      // Predicated region
      $region29: #{longlrm_forward.7} parent=11 // pred_check
        %p338 = pneg %p201
      $region30: #{longlrm_forward.7} parent=11 // pred_check_branch
        %340 = sbr.rel (%p338) target = $region32
      $region31: #{longlrm_forward.7} parent=11 // pred_region
        _
      $region32: #{longlrm_forward.7} parent=11 // pred_fallthru
        _
      // Predicated region
      $region33: #{longlrm_forward.7} parent=11 // pred_check
        %p341 = pneg %p222
      $region34: #{longlrm_forward.7} parent=11 // pred_check_branch
        %343 = sbr.rel (%p341) target = $region36
      $region35: #{longlrm_forward.7} parent=11 // pred_region
        _
      $region36: #{longlrm_forward.7} parent=11 // pred_fallthru
        _
      // Predicated region
      $region37: #{longlrm_forward.7} parent=11 // pred_check
        %p344 = pneg %p243
      $region38: #{longlrm_forward.7} parent=11 // pred_check_branch
        %346 = sbr.rel (%p344) target = $region40
      $region39: #{longlrm_forward.7} parent=11 // pred_region
        _
      $region40: #{longlrm_forward.7} parent=11 // pred_fallthru
        _
      // Predicated region
      $region41: #{longlrm_forward.7} parent=11 // pred_check
        %p347 = pneg %p264
      $region42: #{longlrm_forward.7} parent=11 // pred_check_branch
        %349 = sbr.rel (%p347) target = $region44
      $region43: #{longlrm_forward.7} parent=11 // pred_region
        _
      $region44: #{longlrm_forward.7} parent=11 // pred_fallthru
        _
      // Predicated region
      $region45: #{longlrm_forward.7} parent=11 // pred_check
        %p350 = pneg %p285
      $region46: #{longlrm_forward.7} parent=11 // pred_check_branch
        %352 = sbr.rel (%p350) target = $region48
      $region47: #{longlrm_forward.7} parent=11 // pred_region
        _
      $region48: #{longlrm_forward.7} parent=11 // pred_fallthru
        _
    $region12: #{longlrm_forward.7} parent=5 // pred_fallthru
      _
    %p353 = scmp.lt.s32.totalorder %s18, 2
    // Predicated region
    $region49: #{longlrm_forward.7} parent=5 // pred_check
      %p354 = pneg %p353
    $region50: #{longlrm_forward.7} parent=5 // pred_check_branch
      %356 = sbr.rel (%p354) target = $region52
    $region51: #{longlrm_forward.7} parent=5 // pred_region
      // Predicated region
      $region53: #{longlrm_forward.7} parent=51 // pred_check
        %p357 = pneg %p38
      $region54: #{longlrm_forward.7} parent=51 // pred_check_branch
        %359 = sbr.rel (%p357) target = $region56
      $region55: #{longlrm_forward.7} parent=51 // pred_region
        %s360 = smul.u32 4, %s18
        %p361 = scmp.lt.s32.totalorder %s360, 7
        %s362 = scalar_select %p361, %s360, 7
        %s363 = smul.addr %s362, 4
        %s364 = scalar_lea.vmem %s0, %s363
        %s365 = smul.u32 4, %s18
      $region56: #{longlrm_forward.7} parent=51 // pred_fallthru
        _
      // Predicated region
      $region57: #{longlrm_forward.7} parent=51 // pred_check
        %p366 = pneg %p127
      $region58: #{longlrm_forward.7} parent=51 // pred_check_branch
        %368 = sbr.rel (%p366) target = $region60
      $region59: #{longlrm_forward.7} parent=51 // pred_region
        %s369 = smul.u32 4, %s18
        %p370 = scmp.lt.s32.totalorder %s369, 7
        %s371 = scalar_select %p370, %s369, 7
        %s372 = smul.addr %s371, 8
        %s373 = scalar_lea.vmem %s4, %s372
        %s374 = smul.u32 4, %s18
      $region60: #{longlrm_forward.7} parent=51 // pred_fallthru
        _
      // Predicated region
      $region61: #{longlrm_forward.7} parent=51 // pred_check
        %p375 = pneg %p153
      $region62: #{longlrm_forward.7} parent=51 // pred_check_branch
        %377 = sbr.rel (%p375) target = $region64
      $region63: #{longlrm_forward.7} parent=51 // pred_region
        %s378 = smul.u32 4, %s18
        %p379 = scmp.lt.s32.totalorder %s378, 7
        %s380 = scalar_select %p379, %s378, 7
        %s381 = smul.addr %s380, 8
        %s382 = scalar_lea.vmem %s5, %s381
        %s383 = smul.u32 4, %s18
      $region64: #{longlrm_forward.7} parent=51 // pred_fallthru
        _
    $region52: #{longlrm_forward.7} parent=5 // pred_fallthru
      _
    %p384 = scmp.le.s32.totalorder 1, %s18
    %p385 = scmp.lt.s32.totalorder %s18, 3
    %p386 = pnand %p384, %p385
    %p387 = pneg %p386
    // Predicated region
    $region65: #{longlrm_forward.7} parent=5 // pred_check
      _
    $region66: #{longlrm_forward.7} parent=5 // pred_check_branch
      %389 = sbr.rel (%p386) target = $region68
    $region67: #{longlrm_forward.7} parent=5 // pred_region
      %s390 = ssub.s32 %s18, 1
      %s391 = smul.u32 4, %s23
      %p392 = scmp.lt.s32.totalorder %s391, 7
      %s393 = scalar_select %p392, %s391, 7
      %s394 = smul.addr %s393, 4
      %s395 = scalar_lea.vmem %s0, %s394
      %p396 = pneg %p44
      %p397 = pneg %p41
      %p398 = pneg %p65
      %p399 = pneg %p62
      %p400 = pneg %p86
      %p401 = pneg %p83
      %p402 = pneg %p107
      %p403 = pneg %p104
      %s404 = smul.u32 4, %s23
      %p405 = scmp.lt.s32.totalorder %s404, 7
      %s406 = scalar_select %p405, %s404, 7
      %s407 = smul.addr %s406, 8
      %s408 = scalar_lea.vmem %s4, %s407
      %p409 = pneg %p133
      %p410 = pneg %p130
      %s411 = smul.u32 4, %s23
      %p412 = scmp.lt.s32.totalorder %s411, 7
      %s413 = scalar_select %p412, %s411, 7
      %s414 = smul.addr %s413, 8
      %s415 = scalar_lea.vmem %s5, %s414
      %p416 = pneg %p159
      %p417 = pneg %p156
      %p418 = pneg %p180
      %p419 = pneg %p177
      %p420 = pneg %p201
      %p421 = pneg %p198
      %p422 = pneg %p222
      %p423 = pneg %p219
      %p424 = pneg %p243
      %p425 = pneg %p240
      %p426 = pneg %p264
      %p427 = pneg %p261
      %p428 = pneg %p285
      %p429 = pneg %p282
      %p430 = pneg %p311
      %p431 = pneg %p308
      %s432 = smul.u32 4, %s23
      %p433 = scmp.lt.s32.totalorder %s432, 7
      %s434 = scalar_select %p433, %s432, 7
      %s435 = smul.addr %s434, 2
      %s436 = smul.addr %s435, 8
      %s437 = scalar_lea.vmem %s12, %s436
      %s438 = smul.u32 4, %s23
      %p439 = scmp.lt.s32.totalorder %s438, 7
      %s440 = scalar_select %p439, %s438, 7
      %s441 = smul.addr %s440, 4
      %s442 = scalar_lea.vmem %s0, %s441
      %s443 = smul.u32 4, %s23
      %s444 = smul.u32 4, %s23
      %p445 = scmp.lt.s32.totalorder %s444, 7
      %s446 = scalar_select %p445, %s444, 7
      %s447 = smul.addr %s446, 8
      %s448 = scalar_lea.vmem %s4, %s447
      %s449 = smul.u32 4, %s23
      %s450 = smul.u32 4, %s23
      %p451 = scmp.lt.s32.totalorder %s450, 7
      %s452 = scalar_select %p451, %s450, 7
      %s453 = smul.addr %s452, 8
      %s454 = scalar_lea.vmem %s5, %s453
      %s455 = smul.u32 4, %s23
      %s456 = smul.u32 4, %s23
      %p457 = scmp.lt.s32.totalorder %s456, 7
      %s458 = scalar_select %p457, %s456, 7
      %s459 = smul.addr %s458, 2
      %s460 = smul.addr %s459, 8
      %s461 = scalar_lea.vmem %s12, %s460
      %s462 = smul.u32 4, %s23
      %v464 = vld [vmem:[%s442] sm:$0xf]
      %v465 = vld [vmem:[%s442 + $0x4] sm:$0xf]
      %v466 = vld [vmem:[%s442 + $0x8] sm:$0xf]
      %v467 = vld [vmem:[%s442 + $0xc] sm:$0xf]
      %v468 = vunpack.c.l.bf16 %v464
      %v469 = vunpack.c.l.bf16 %v465
      %v470 = vunpack.c.l.bf16 %v466
      %v471 = vunpack.c.l.bf16 %v467
      %v472 = vld [vmem:[%s1] sm:$0x1]
      %v473 = vld [vmem:[%s2] sm:$0x1]
      %vm474 = vcmask 261120
      %v475 = vsel %vm474, %v468, 0.0
      %476 = vadd.xlane.f32.xlu0 %v475
      %v477 = vpop.xlane.xlu0 %476
      %v478 = vsel %vm474, %v469, 0.0
      %479 = vadd.xlane.f32.xlu0 %v478
      %v480 = vpop.xlane.xlu0 %479
      %v481 = vsel %vm474, %v470, 0.0
      %482 = vadd.xlane.f32.xlu0 %v481
      %v483 = vpop.xlane.xlu0 %482
      %v484 = vsel %vm474, %v471, 0.0
      %485 = vadd.xlane.f32.xlu0 %v484
      %v486 = vpop.xlane.xlu0 %485
      %v487 = vrcp.pop 32.0
      %v488 = vmul.f32 %v477, %v487
      %v489 = vmul.f32 %v480, %v487
      %v490 = vmul.f32 %v483, %v487
      %v491 = vmul.f32 %v486, %v487
      %v492 = vsub.f32 %v468, %v488
      %v493 = vsub.f32 %v469, %v489
      %v494 = vsub.f32 %v470, %v490
      %v495 = vsub.f32 %v471, %v491
      %v496 = vmul.f32 %v492, %v492
      %v497 = vmul.f32 %v493, %v493
      %v498 = vmul.f32 %v494, %v494
      %v499 = vmul.f32 %v495, %v495
      %v500 = vsel %vm474, %v496, 0.0
      %501 = vadd.xlane.f32.xlu0 %v500
      %v502 = vpop.xlane.xlu0 %501
      %v503 = vsel %vm474, %v497, 0.0
      %504 = vadd.xlane.f32.xlu0 %v503
      %v505 = vpop.xlane.xlu0 %504
      %v506 = vsel %vm474, %v498, 0.0
      %507 = vadd.xlane.f32.xlu0 %v506
      %v508 = vpop.xlane.xlu0 %507
      %v509 = vsel %vm474, %v499, 0.0
      %510 = vadd.xlane.f32.xlu0 %v509
      %v511 = vpop.xlane.xlu0 %510
      %v512 = vmul.f32 %v502, %v487
      %v513 = vmul.f32 %v505, %v487
      %v514 = vmul.f32 %v508, %v487
      %v515 = vmul.f32 %v511, %v487
      %v516 = vadd.f32 %v512, 1e-05
      %v517 = vadd.f32 %v513, 1e-05
      %v518 = vadd.f32 %v514, 1e-05
      %v519 = vadd.f32 %v515, 1e-05
      %v520 = vrsqrt.pop %v516
      %v521 = vrsqrt.pop %v517
      %v522 = vrsqrt.pop %v518
      %v523 = vrsqrt.pop %v519
      %v524 = vmul.f32 %v492, %v520
      %v525 = vmul.f32 %v493, %v521
      %v526 = vmul.f32 %v494, %v522
      %v527 = vmul.f32 %v495, %v523
      %v529 = vlaneseq
      %v530 = vshrl.u32 %v529, 7
      %v531 = vsub.s32 0, %v530
      %v532 = vrot.slane %v472, %v531
      %v534 = vmul.f32 %v524, %v532
      %v535 = vmul.f32 %v525, %v532
      %v536 = vmul.f32 %v526, %v532
      %v537 = vmul.f32 %v527, %v532
      %v539 = vlaneseq
      %v540 = vshrl.u32 %v539, 7
      %v541 = vsub.s32 0, %v540
      %v542 = vrot.slane %v473, %v541
      %v544 = vadd.f32 %v534, %v542
      %v545 = vadd.f32 %v535, %v542
      %v546 = vadd.f32 %v536, %v542
      %v547 = vadd.f32 %v537, %v542
      %v548 = vpack.c.bf16 %v545, %v544
      %v549 = vpack.c.bf16 %v547, %v546
      %v550 = vld [vmem:[%s3] sm:$0xff]
      %v551 = vld [vmem:[%s3 + $0x8] sm:$0xff]
      %v552 = vld [vmem:[%s3 + $0x10] sm:$0xff]
      %v553 = vld [vmem:[%s3 + $0x18] sm:$0xff]
      %v558 = vunpack.c.l.b16 %v550
      %v559 = vunpack.c.h.b16 %v550
      %v560 = vunpack.c.l.b16 %v551
      %v561 = vunpack.c.h.b16 %v551
      %v562 = vunpack.c.l.b16 %v552
      %v563 = vunpack.c.h.b16 %v552
      %v564 = vunpack.c.l.b16 %v553
      %v565 = vunpack.c.h.b16 %v553
      %v566 = vpack.c.b16 %v560, %v558
      %v567 = vpack.c.b16 %v561, %v559
      %v568 = vpack.c.b16 %v564, %v562
      %v569 = vpack.c.b16 %v565, %v563
      %v575 = vsel %vm474, %v548, 0
      %v578 = vsel %vm474, %v549, 0
      %580 = vmatprep.subr.bf16.mxu0 %v567
      %581 = vmatpush1.bf16.msra.mxu0 %v566
      %582 = vmatprep.subr.bf16.mxu0 %v569
      %583 = vmatpush1.bf16.msra.mxu0 %v568
      %584 = vmatprep.subr.bf16.mxu0 0
      %585 = vmatpush1.bf16.msra.mxu0 0
      %586 = vmatprep.subr.bf16.mxu0 0
      %587 = vmatpush1.bf16.msra.mxu0 0
      %588 = vmatprep.subr.bf16.mxu0 0
      %589 = vmatpush1.bf16.msra.mxu0 0
      %590 = vmatprep.subr.bf16.mxu0 0
      %591 = vmatpush1.bf16.msra.mxu0 0
      %592 = vmatprep.subr.bf16.mxu0 0
      %593 = vmatpush1.bf16.msra.mxu0 0
      %594 = vmatprep.subr.bf16.mxu0 0
      %595 = vmatpush1.bf16.msra.mxu0 0
      %596 = vmatprep.subr.bf16.mxu0 0
      %597 = vmatpush1.bf16.msra.mxu0 0
      %598 = vmatprep.subr.bf16.mxu0 0
      %599 = vmatpush1.bf16.msra.mxu0 0
      %600 = vmatprep.subr.bf16.mxu0 0
      %601 = vmatpush1.bf16.msra.mxu0 0
      %602 = vmatprep.subr.bf16.mxu0 0
      %603 = vmatpush1.bf16.msra.mxu0 0
      %604 = vmatprep.subr.bf16.mxu0 0
      %605 = vmatpush1.bf16.msra.mxu0 0
      %606 = vmatprep.subr.bf16.mxu0 0
      %607 = vmatpush1.bf16.msra.mxu0 0
      %608 = vmatprep.subr.bf16.mxu0 0
      %609 = vmatpush1.bf16.msra.mxu0 0
      %610 = vmatprep.subr.bf16.mxu0 0
      %611 = vmatpush1.bf16.msra.mxu0 0
      %612 = vmatprep.mubr.bf16.mxu0 0
      %613 = vmatmul.mubr.bf16.gmra.mrb[0].mxu0 %v575
      %v614 = vpop.f32.mrb[0].mxu0
      %v615 = vadd.f32 0.0, %v614
      %v616 = vpop.f32.mrb[0].mxu0
      %v617 = vadd.f32 0.0, %v616
      %v618 = vpop.f32.mrb[0].mxu0
      %v619 = vadd.f32 0.0, %v618
      %v620 = vpop.f32.mrb[0].mxu0
      %v621 = vadd.f32 0.0, %v620
      %622 = vmatprep.mubr.bf16.mxu0 0
      %623 = vmatmul.mubr.bf16.gmra.mrb[0].mxu0 %v578
      %v624 = vpop.f32.mrb[0].mxu0
      %v625 = vadd.f32 0.0, %v624
      %v626 = vpop.f32.mrb[0].mxu0
      %v627 = vadd.f32 0.0, %v626
      %v628 = vpop.f32.mrb[0].mxu0
      %v629 = vadd.f32 0.0, %v628
      %v630 = vpop.f32.mrb[0].mxu0
      %v631 = vadd.f32 0.0, %v630
      %632 = vdwg.mxu0
      %v633 = vld [vmem:[%s9] sm:$0x3]
      %v635 = vlaneseq
      %v636 = vshrl.u32 %v635, 7
      %v637 = vsub.s32 0, %v636
      %v638 = vrot.slane %v633, %v637
      %v639 = vlaneseq
      %v640 = vshrl.u32 %v639, 7
      %v641 = vsub.s32 1, %v640
      %v642 = vrot.slane %v633, %v641
      %v645 = vadd.f32 %v615, %v638
      %v646 = vadd.f32 %v617, %v642
      %v647 = vadd.f32 %v619, %v638
      %v648 = vadd.f32 %v621, %v642
      %v649 = vadd.f32 %v625, %v638
      %v650 = vadd.f32 %v627, %v642
      %v651 = vadd.f32 %v629, %v638
      %v652 = vadd.f32 %v631, %v642
      %v653 = vld [vmem:[%s10] sm:$0x3]
      %v655 = vlaneseq
      %v656 = vshrl.u32 %v655, 7
      %v657 = vsub.s32 0, %v656
      %v658 = vrot.slane %v653, %v657
      %v659 = vlaneseq
      %v660 = vshrl.u32 %v659, 7
      %v661 = vsub.s32 1, %v660
      %v662 = vrot.slane %v653, %v661
      %v665 = vmin.f32 %v645, %v658
      %v666 = vmin.f32 %v646, %v662
      %v667 = vmin.f32 %v647, %v658
      %v668 = vmin.f32 %v648, %v662
      %v669 = vmin.f32 %v649, %v658
      %v670 = vmin.f32 %v650, %v662
      %v671 = vmin.f32 %v651, %v658
      %v672 = vmin.f32 %v652, %v662
      %v673 = vld [vmem:[%s6] sm:$0xff]
      %v674 = vld [vmem:[%s6 + $0x8] sm:$0xff]
      %v675 = vld [vmem:[%s6 + $0x10] sm:$0xff]
      %v676 = vld [vmem:[%s6 + $0x18] sm:$0xff]
      %v677 = vld [vmem:[%s6 + $0x20] sm:$0xff]
      %v678 = vld [vmem:[%s6 + $0x28] sm:$0xff]
      %v679 = vld [vmem:[%s6 + $0x30] sm:$0xff]
      %v680 = vld [vmem:[%s6 + $0x38] sm:$0xff]
      %v681 = vld [vmem:[%s6 + $0x40] sm:$0xff]
      %v682 = vld [vmem:[%s6 + $0x48] sm:$0xff]
      %v683 = vld [vmem:[%s6 + $0x50] sm:$0xff]
      %v684 = vld [vmem:[%s6 + $0x58] sm:$0xff]
      %v685 = vld [vmem:[%s6 + $0x60] sm:$0xff]
      %v686 = vld [vmem:[%s6 + $0x68] sm:$0xff]
      %v687 = vld [vmem:[%s6 + $0x70] sm:$0xff]
      %v688 = vld [vmem:[%s6 + $0x78] sm:$0xff]
      %v689 = vld [vmem:[%s6 + $0x80] sm:$0xff]
      %v690 = vld [vmem:[%s6 + $0x88] sm:$0xff]
      %v691 = vld [vmem:[%s6 + $0x90] sm:$0xff]
      %v692 = vld [vmem:[%s6 + $0x98] sm:$0xff]
      %v693 = vld [vmem:[%s6 + $0xa0] sm:$0xff]
      %v694 = vld [vmem:[%s6 + $0xa8] sm:$0xff]
      %v695 = vld [vmem:[%s6 + $0xb0] sm:$0xff]
      %v696 = vld [vmem:[%s6 + $0xb8] sm:$0xff]
      %v697 = vld [vmem:[%s6 + $0xc0] sm:$0xff]
      %v698 = vld [vmem:[%s6 + $0xc8] sm:$0xff]
      %v699 = vld [vmem:[%s6 + $0xd0] sm:$0xff]
      %v700 = vld [vmem:[%s6 + $0xd8] sm:$0xff]
      %v701 = vld [vmem:[%s6 + $0xe0] sm:$0xff]
      %v702 = vld [vmem:[%s6 + $0xe8] sm:$0xff]
      %v703 = vld [vmem:[%s6 + $0xf0] sm:$0xff]
      %v704 = vld [vmem:[%s6 + $0xf8] sm:$0xff]
      %705 = vmatprep.subr.mxu0 0.0
      %706 = vmatpush1.msra.mxu0 %v673
      %707 = vmatprep.subr.mxu0 0.0
      %708 = vmatpush1.msra.mxu0 %v674
      %709 = vmatprep.subr.mxu0 0.0
      %710 = vmatpush1.msra.mxu0 %v675
      %711 = vmatprep.subr.mxu0 0.0
      %712 = vmatpush1.msra.mxu0 %v676
      %713 = vmatprep.subr.mxu0 0.0
      %714 = vmatpush1.msra.mxu0 %v677
      %715 = vmatprep.subr.mxu0 0.0
      %716 = vmatpush1.msra.mxu0 %v678
      %717 = vmatprep.subr.mxu0 0.0
      %718 = vmatpush1.msra.mxu0 %v679
      %719 = vmatprep.subr.mxu0 0.0
      %720 = vmatpush1.msra.mxu0 %v680
      %721 = vmatprep.subr.mxu0 0.0
      %722 = vmatpush1.msra.mxu0 %v681
      %723 = vmatprep.subr.mxu0 0.0
      %724 = vmatpush1.msra.mxu0 %v682
      %725 = vmatprep.subr.mxu0 0.0
      %726 = vmatpush1.msra.mxu0 %v683
      %727 = vmatprep.subr.mxu0 0.0
      %728 = vmatpush1.msra.mxu0 %v684
      %729 = vmatprep.subr.mxu0 0.0
      %730 = vmatpush1.msra.mxu0 %v685
      %731 = vmatprep.subr.mxu0 0.0
      %732 = vmatpush1.msra.mxu0 %v686
      %733 = vmatprep.subr.mxu0 0.0
      %734 = vmatpush1.msra.mxu0 %v687
      %735 = vmatprep.subr.mxu0 0.0
      %736 = vmatpush1.msra.mxu0 %v688
      %737 = vmatprep.subr.mxu0 0.0
      %738 = vmatpush1.msra.mxu0 %v689
      %739 = vmatprep.subr.mxu0 0.0
      %740 = vmatpush1.msra.mxu0 %v690
      %741 = vmatprep.subr.mxu0 0.0
      %742 = vmatpush1.msra.mxu0 %v691
      %743 = vmatprep.subr.mxu0 0.0
      %744 = vmatpush1.msra.mxu0 %v692
      %745 = vmatprep.subr.mxu0 0.0
      %746 = vmatpush1.msra.mxu0 %v693
      %747 = vmatprep.subr.mxu0 0.0
      %748 = vmatpush1.msra.mxu0 %v694
      %749 = vmatprep.subr.mxu0 0.0
      %750 = vmatpush1.msra.mxu0 %v695
      %751 = vmatprep.subr.mxu0 0.0
      %752 = vmatpush1.msra.mxu0 %v696
      %753 = vmatprep.subr.mxu0 0.0
      %754 = vmatpush1.msra.mxu0 %v697
      %755 = vmatprep.subr.mxu0 0.0
      %756 = vmatpush1.msra.mxu0 %v698
      %757 = vmatprep.subr.mxu0 0.0
      %758 = vmatpush1.msra.mxu0 %v699
      %759 = vmatprep.subr.mxu0 0.0
      %760 = vmatpush1.msra.mxu0 %v700
      %761 = vmatprep.subr.mxu0 0.0
      %762 = vmatpush1.msra.mxu0 %v701
      %763 = vmatprep.subr.mxu0 0.0
      %764 = vmatpush1.msra.mxu0 %v702
      %765 = vmatprep.subr.mxu0 0.0
      %766 = vmatpush1.msra.mxu0 %v703
      %767 = vmatprep.subr.mxu0 0.0
      %768 = vmatpush1.msra.mxu0 %v704
      %769 = vmatprep.mubr.f32.mxu0 %v617
      %770 = vmatmul.mubr.f32.gmra.mrb[0].mxu0 %v615
      %v771 = vpop.f32.mrb[0].mxu0
      %v772 = vadd.f32 0.0, %v771
      %v773 = vpop.f32.mrb[0].mxu0
      %774 = vmatprep.mubr.f32.mxu0 %v621
      %775 = vmatmul.mubr.f32.gmra.mrb[0].mxu0 %v619
      %v776 = vpop.f32.mrb[0].mxu0
      %v777 = vadd.f32 0.0, %v776
      %v778 = vpop.f32.mrb[0].mxu0
      %779 = vmatprep.mubr.f32.mxu0 %v627
      %780 = vmatmul.mubr.f32.gmra.mrb[0].mxu0 %v625
      %v781 = vpop.f32.mrb[0].mxu0
      %v782 = vadd.f32 0.0, %v781
      %v783 = vpop.f32.mrb[0].mxu0
      %784 = vmatprep.mubr.f32.mxu0 %v631
      %785 = vmatmul.mubr.f32.gmra.mrb[0].mxu0 %v629
      %v786 = vpop.f32.mrb[0].mxu0
      %v787 = vadd.f32 0.0, %v786
      %v788 = vpop.f32.mrb[0].mxu0
      %789 = vdwg.mxu0
      %v790 = vxor.u32 %v772, 2147483648
      %v791 = vxor.u32 %v777, 2147483648
      %v792 = vxor.u32 %v782, 2147483648
      %v793 = vxor.u32 %v787, 2147483648
      %v794 = vmul.f32 %v790, 1.442695
      %v795 = vpow.pop %v794
      %v796 = vmul.f32 %v791, 1.442695
      %v797 = vpow.pop %v796
      %v798 = vmul.f32 %v792, 1.442695
      %v799 = vpow.pop %v798
      %v800 = vmul.f32 %v793, 1.442695
      %v801 = vpow.pop %v800
      %v802 = vadd.f32 %v795, 1.0
      %v803 = vadd.f32 %v797, 1.0
      %v804 = vadd.f32 %v799, 1.0
      %v805 = vadd.f32 %v801, 1.0
      %v806 = vrcp.pop %v802
      %v807 = vmul.f32 1.0, %v806
      %v808 = vrcp.pop %v803
      %v809 = vmul.f32 1.0, %v808
      %v810 = vrcp.pop %v804
      %v811 = vmul.f32 1.0, %v810
      %v812 = vrcp.pop %v805
      %v813 = vmul.f32 1.0, %v812
      %v814 = vmul.f32 %v807, 500.0
      %v815 = vmul.f32 %v809, 500.0
      %v816 = vmul.f32 %v811, 500.0
      %v817 = vmul.f32 %v813, 500.0
      %v818 = vld [vmem:[%s7] sm:$0xff]
      %v819 = vld [vmem:[%s7 + $0x8] sm:$0xff]
      %vm820 = vcmask 130048
      %v822 = vsel %vm820, %v814, 0
      %v825 = vsel %vm820, %v815, 0
      %v828 = vsel %vm820, %v816, 0
      %v831 = vsel %vm820, %v817, 0
      %833 = vmatprep.subr.mxu0 0.0
      %834 = vmatpush1.msra.mxu0 %v818
      %835 = vmatprep.subr.mxu0 0.0
      %836 = vmatpush1.msra.mxu0 %v819
      %837 = vmatprep.subr.mxu0 0.0
      %838 = vmatpush1.msra.mxu0 0.0
      %839 = vmatprep.subr.mxu0 0.0
      %840 = vmatpush1.msra.mxu0 0.0
      %841 = vmatprep.subr.mxu0 0.0
      %842 = vmatpush1.msra.mxu0 0.0
      %843 = vmatprep.subr.mxu0 0.0
      %844 = vmatpush1.msra.mxu0 0.0
      %845 = vmatprep.subr.mxu0 0.0
      %846 = vmatpush1.msra.mxu0 0.0
      %847 = vmatprep.subr.mxu0 0.0
      %848 = vmatpush1.msra.mxu0 0.0
      %849 = vmatprep.subr.mxu0 0.0
      %850 = vmatpush1.msra.mxu0 0.0
      %851 = vmatprep.subr.mxu0 0.0
      %852 = vmatpush1.msra.mxu0 0.0
      %853 = vmatprep.subr.mxu0 0.0
      %854 = vmatpush1.msra.mxu0 0.0
      %855 = vmatprep.subr.mxu0 0.0
      %856 = vmatpush1.msra.mxu0 0.0
      %857 = vmatprep.subr.mxu0 0.0
      %858 = vmatpush1.msra.mxu0 0.0
      %859 = vmatprep.subr.mxu0 0.0
      %860 = vmatpush1.msra.mxu0 0.0
      %861 = vmatprep.subr.mxu0 0.0
      %862 = vmatpush1.msra.mxu0 0.0
      %863 = vmatprep.subr.mxu0 0.0
      %864 = vmatpush1.msra.mxu0 0.0
      %865 = vmatprep.subr.mxu0 0.0
      %866 = vmatpush1.msra.mxu0 0.0
      %867 = vmatprep.subr.mxu0 0.0
      %868 = vmatpush1.msra.mxu0 0.0
      %869 = vmatprep.subr.mxu0 0.0
      %870 = vmatpush1.msra.mxu0 0.0
      %871 = vmatprep.subr.mxu0 0.0
      %872 = vmatpush1.msra.mxu0 0.0
      %873 = vmatprep.subr.mxu0 0.0
      %874 = vmatpush1.msra.mxu0 0.0
      %875 = vmatprep.subr.mxu0 0.0
      %876 = vmatpush1.msra.mxu0 0.0
      %877 = vmatprep.subr.mxu0 0.0
      %878 = vmatpush1.msra.mxu0 0.0
      %879 = vmatprep.subr.mxu0 0.0
      %880 = vmatpush1.msra.mxu0 0.0
      %881 = vmatprep.subr.mxu0 0.0
      %882 = vmatpush1.msra.mxu0 0.0
      %883 = vmatprep.subr.mxu0 0.0
      %884 = vmatpush1.msra.mxu0 0.0
      %885 = vmatprep.subr.mxu0 0.0
      %886 = vmatpush1.msra.mxu0 0.0
      %887 = vmatprep.subr.mxu0 0.0
      %888 = vmatpush1.msra.mxu0 0.0
      %889 = vmatprep.subr.mxu0 0.0
      %890 = vmatpush1.msra.mxu0 0.0
      %891 = vmatprep.subr.mxu0 0.0
      %892 = vmatpush1.msra.mxu0 0.0
      %893 = vmatprep.subr.mxu0 0.0
      %894 = vmatpush1.msra.mxu0 0.0
      %895 = vmatprep.subr.mxu0 0.0
      %896 = vmatpush1.msra.mxu0 0.0
      %897 = vmatprep.mubr.f32.mxu0 0.0
      %898 = vmatmul.mubr.f32.gmra.mrb[0].mxu0 %v822
      %v899 = vpop.f32.mrb[0].mxu0
      %v900 = vadd.f32 0.0, %v899
      %v901 = vpop.f32.mrb[0].mxu0
      %902 = vmatprep.mubr.f32.mxu0 0.0
      %903 = vmatmul.mubr.f32.gmra.mrb[0].mxu0 %v825
      %v904 = vpop.f32.mrb[0].mxu0
      %v905 = vadd.f32 0.0, %v904
      %v906 = vpop.f32.mrb[0].mxu0
      %907 = vmatprep.mubr.f32.mxu0 0.0
      %908 = vmatmul.mubr.f32.gmra.mrb[0].mxu0 %v828
      %v909 = vpop.f32.mrb[0].mxu0
      %v910 = vadd.f32 0.0, %v909
      %v911 = vpop.f32.mrb[0].mxu0
      %912 = vmatprep.mubr.f32.mxu0 0.0
      %913 = vmatmul.mubr.f32.gmra.mrb[0].mxu0 %v831
      %v914 = vpop.f32.mrb[0].mxu0
      %v915 = vadd.f32 0.0, %v914
      %v916 = vpop.f32.mrb[0].mxu0
      %917 = vdwg.mxu0
      %v918 = vld [vmem:[%s448] sm:$0xff]
      %v919 = vld [vmem:[%s448 + $0x8] sm:$0xff]
      %v920 = vld [vmem:[%s448 + $0x10] sm:$0xff]
      %v921 = vld [vmem:[%s448 + $0x18] sm:$0xff]
      %v922 = vmul.f32 %v900, %v918
      %v923 = vmul.f32 %v905, %v919
      %v924 = vmul.f32 %v910, %v920
      %v925 = vmul.f32 %v915, %v921
      %v926 = vld [vmem:[%s454] sm:$0xff]
      %v927 = vld [vmem:[%s454 + $0x8] sm:$0xff]
      %v928 = vld [vmem:[%s454 + $0x10] sm:$0xff]
      %v929 = vld [vmem:[%s454 + $0x18] sm:$0xff]
      %v930 = vadd.f32 %v922, %v926
      %v931 = vadd.f32 %v923, %v927
      %v932 = vadd.f32 %v924, %v928
      %v933 = vadd.f32 %v925, %v929
      %v934 = vld [vmem:[%s8] sm:$0xff]
      %v935 = vld [vmem:[%s8 + $0x8] sm:$0xff]
      %v936 = vld [vmem:[%s8 + $0x10] sm:$0xff]
      %v937 = vld [vmem:[%s8 + $0x18] sm:$0xff]
      %v938 = vld [vmem:[%s8 + $0x20] sm:$0xff]
      %v939 = vld [vmem:[%s8 + $0x28] sm:$0xff]
      %v940 = vld [vmem:[%s8 + $0x30] sm:$0xff]
      %v941 = vld [vmem:[%s8 + $0x38] sm:$0xff]
      %v942 = vld [vmem:[%s8 + $0x40] sm:$0xff]
      %v943 = vld [vmem:[%s8 + $0x48] sm:$0xff]
      %v944 = vld [vmem:[%s8 + $0x50] sm:$0xff]
      %v945 = vld [vmem:[%s8 + $0x58] sm:$0xff]
      %vm946 = vcmask 392192
      %v948 = vsel %vm946, %v930, 0
      %v951 = vsel %vm946, %v931, 0
      %v954 = vsel %vm946, %v932, 0
      %v957 = vsel %vm946, %v933, 0
      %959 = vmatprep.subr.mxu0 %v935
      %960 = vmatpush1.msra.mxu0 %v934
      %961 = vmatprep.subr.mxu0 %v937
      %962 = vmatpush1.msra.mxu0 %v936
      %963 = vmatprep.subr.mxu0 %v939
      %964 = vmatpush1.msra.mxu0 %v938
      %965 = vmatprep.subr.mxu0 %v941
      %966 = vmatpush1.msra.mxu0 %v940
      %967 = vmatprep.subr.mxu0 %v943
      %968 = vmatpush1.msra.mxu0 %v942
      %969 = vmatprep.subr.mxu0 %v945
      %970 = vmatpush1.msra.mxu0 %v944
      %971 = vmatprep.subr.mxu0 0.0
      %972 = vmatpush1.msra.mxu0 0.0
      %973 = vmatprep.subr.mxu0 0.0
      %974 = vmatpush1.msra.mxu0 0.0
      %975 = vmatprep.subr.mxu0 0.0
      %976 = vmatpush1.msra.mxu0 0.0
      %977 = vmatprep.subr.mxu0 0.0
      %978 = vmatpush1.msra.mxu0 0.0
      %979 = vmatprep.subr.mxu0 0.0
      %980 = vmatpush1.msra.mxu0 0.0
      %981 = vmatprep.subr.mxu0 0.0
      %982 = vmatpush1.msra.mxu0 0.0
      %983 = vmatprep.subr.mxu0 0.0
      %984 = vmatpush1.msra.mxu0 0.0
      %985 = vmatprep.subr.mxu0 0.0
      %986 = vmatpush1.msra.mxu0 0.0
      %987 = vmatprep.subr.mxu0 0.0
      %988 = vmatpush1.msra.mxu0 0.0
      %989 = vmatprep.subr.mxu0 0.0
      %990 = vmatpush1.msra.mxu0 0.0
      %991 = vmatprep.subr.mxu0 0.0
      %992 = vmatpush1.msra.mxu0 0.0
      %993 = vmatprep.subr.mxu0 0.0
      %994 = vmatpush1.msra.mxu0 0.0
      %995 = vmatprep.subr.mxu0 0.0
      %996 = vmatpush1.msra.mxu0 0.0
      %997 = vmatprep.subr.mxu0 0.0
      %998 = vmatpush1.msra.mxu0 0.0
      %999 = vmatprep.subr.mxu0 0.0
      %1000 = vmatpush1.msra.mxu0 0.0
      %1001 = vmatprep.subr.mxu0 0.0
      %1002 = vmatpush1.msra.mxu0 0.0
      %1003 = vmatprep.subr.mxu0 0.0
      %1004 = vmatpush1.msra.mxu0 0.0
      %1005 = vmatprep.subr.mxu0 0.0
      %1006 = vmatpush1.msra.mxu0 0.0
      %1007 = vmatprep.subr.mxu0 0.0
      %1008 = vmatpush1.msra.mxu0 0.0
      %1009 = vmatprep.subr.mxu0 0.0
      %1010 = vmatpush1.msra.mxu0 0.0
      %1011 = vmatprep.subr.mxu0 0.0
      %1012 = vmatpush1.msra.mxu0 0.0
      %1013 = vmatprep.subr.mxu0 0.0
      %1014 = vmatpush1.msra.mxu0 0.0
      %1015 = vmatprep.subr.mxu0 0.0
      %1016 = vmatpush1.msra.mxu0 0.0
      %1017 = vmatprep.subr.mxu0 0.0
      %1018 = vmatpush1.msra.mxu0 0.0
      %1019 = vmatprep.subr.mxu0 0.0
      %1020 = vmatpush1.msra.mxu0 0.0
      %1021 = vmatprep.subr.mxu0 0.0
      %1022 = vmatpush1.msra.mxu0 0.0
      %1023 = vmatprep.mubr.f32.mxu0 0.0
      %1024 = vmatmul.mubr.f32.gmra.mrb[0].mxu0 %v948
      %v1025 = vpop.f32.mrb[0].mxu0
      %v1026 = vadd.f32 0.0, %v1025
      %v1027 = vpop.f32.mrb[0].mxu0
      %v1028 = vadd.f32 0.0, %v1027
      %1029 = vmatprep.mubr.f32.mxu0 0.0
      %1030 = vmatmul.mubr.f32.gmra.mrb[0].mxu0 %v951
      %v1031 = vpop.f32.mrb[0].mxu0
      %v1032 = vadd.f32 0.0, %v1031
      %v1033 = vpop.f32.mrb[0].mxu0
      %v1034 = vadd.f32 0.0, %v1033
      %1035 = vmatprep.mubr.f32.mxu0 0.0
      %1036 = vmatmul.mubr.f32.gmra.mrb[0].mxu0 %v954
      %v1037 = vpop.f32.mrb[0].mxu0
      %v1038 = vadd.f32 0.0, %v1037
      %v1039 = vpop.f32.mrb[0].mxu0
      %v1040 = vadd.f32 0.0, %v1039
      %1041 = vmatprep.mubr.f32.mxu0 0.0
      %1042 = vmatmul.mubr.f32.gmra.mrb[0].mxu0 %v957
      %v1043 = vpop.f32.mrb[0].mxu0
      %v1044 = vadd.f32 0.0, %v1043
      %v1045 = vpop.f32.mrb[0].mxu0
      %v1046 = vadd.f32 0.0, %v1045
      %1047 = vdwg.mxu0
      %v1048 = vld [vmem:[%s11] sm:$0x3]
      %v1050 = vlaneseq
      %v1051 = vshrl.u32 %v1050, 7
      %v1052 = vsub.s32 0, %v1051
      %v1053 = vrot.slane %v1048, %v1052
      %v1054 = vlaneseq
      %v1055 = vshrl.u32 %v1054, 7
      %v1056 = vsub.s32 1, %v1055
      %v1057 = vrot.slane %v1048, %v1056
      %v1060 = vmul.f32 %v1053, %v1026
      %v1061 = vmul.f32 %v1057, %v1028
      %v1062 = vmul.f32 %v1053, %v1032
      %v1063 = vmul.f32 %v1057, %v1034
      %v1064 = vmul.f32 %v1053, %v1038
      %v1065 = vmul.f32 %v1057, %v1040
      %v1066 = vmul.f32 %v1053, %v1044
      %v1067 = vmul.f32 %v1057, %v1046
      %v1068 = vsub.f32 1.0, %v1048
      %v1070 = vlaneseq
      %v1071 = vshrl.u32 %v1070, 7
      %v1072 = vsub.s32 0, %v1071
      %v1073 = vrot.slane %v1068, %v1072
      %v1074 = vlaneseq
      %v1075 = vshrl.u32 %v1074, 7
      %v1076 = vsub.s32 1, %v1075
      %v1077 = vrot.slane %v1068, %v1076
      %v1080 = vmul.f32 %v1073, %v665
      %v1081 = vmul.f32 %v1077, %v666
      %v1082 = vmul.f32 %v1073, %v667
      %v1083 = vmul.f32 %v1077, %v668
      %v1084 = vmul.f32 %v1073, %v669
      %v1085 = vmul.f32 %v1077, %v670
      %v1086 = vmul.f32 %v1073, %v671
      %v1087 = vmul.f32 %v1077, %v672
      %v1088 = vadd.f32 %v1060, %v1080
      %v1089 = vadd.f32 %v1061, %v1081
      %v1090 = vadd.f32 %v1062, %v1082
      %v1091 = vadd.f32 %v1063, %v1083
      %v1092 = vadd.f32 %v1064, %v1084
      %v1093 = vadd.f32 %v1065, %v1085
      %v1094 = vadd.f32 %v1066, %v1086
      %v1095 = vadd.f32 %v1067, %v1087
      %1096 = vst [vmem:[%s461] sm:$0xff] %v1088
      %1097 = vst [vmem:[%s461 + $0x8] sm:$0xff] %v1089
      %1098 = vst [vmem:[%s461 + $0x10] sm:$0xff] %v1090
      %1099 = vst [vmem:[%s461 + $0x18] sm:$0xff] %v1091
      %1100 = vst [vmem:[%s461 + $0x20] sm:$0xff] %v1092
      %1101 = vst [vmem:[%s461 + $0x28] sm:$0xff] %v1093
      %1102 = vst [vmem:[%s461 + $0x30] sm:$0xff] %v1094
      %1103 = vst [vmem:[%s461 + $0x38] sm:$0xff] %v1095
      %s1104 = smul.u32 4, %s23
      %p1105 = scmp.lt.s32.totalorder %s1104, 7
      %s1106 = scalar_select %p1105, %s1104, 7
      %s1107 = smul.addr %s1106, 2
      %s1108 = smul.addr %s1107, 8
      %s1109 = scalar_lea.vmem %s12, %s1108
      // Predicated region
      $region69: #{longlrm_forward.7} parent=67 // pred_check
        %p1110 = pneg %p308
      $region70: #{longlrm_forward.7} parent=67 // pred_check_branch
        %1112 = sbr.rel (%p1110) target = $region72
      $region71: #{longlrm_forward.7} parent=67 // pred_region
        %s1113 = smul.u32 4, %s23
      $region72: #{longlrm_forward.7} parent=67 // pred_fallthru
        _
    $region68: #{longlrm_forward.7} parent=5 // pred_fallthru
      _
    %p1114 = scmp.le.s32.totalorder 2, %s18
    // Predicated region
    $region73: #{longlrm_forward.7} parent=5 // pred_check
      %p1115 = pneg %p1114
    $region74: #{longlrm_forward.7} parent=5 // pred_check_branch
      %1117 = sbr.rel (%p1115) target = $region76
    $region75: #{longlrm_forward.7} parent=5 // pred_region
      %s1118 = ssub.s32 %s18, 2
      // Predicated region
      $region77: #{longlrm_forward.7} parent=75 // pred_check
        %p1119 = pneg %p314
      $region78: #{longlrm_forward.7} parent=75 // pred_check_branch
        %1121 = sbr.rel (%p1119) target = $region80
      $region79: #{longlrm_forward.7} parent=75 // pred_region
        %s1122 = smul.u32 4, %s24
        %p1123 = scmp.lt.s32.totalorder %s1122, 7
        %s1124 = scalar_select %p1123, %s1122, 7
        %s1125 = smul.addr %s1124, 2
        %s1126 = smul.addr %s1125, 8
        %s1127 = scalar_lea.vmem %s12, %s1126
      $region80: #{longlrm_forward.7} parent=75 // pred_fallthru
        _
    $region76: #{longlrm_forward.7} parent=5 // pred_fallthru
      _
  $region6: #{longlrm_forward.7} parent=0 // loop_footer
    %s22 = sadd.s32 1, %s18
  $region7: #{longlrm_forward.7} parent=0 // loop_footer_branch
    %17 = sbr.rel target = $region3
  $region8: #{longlrm_forward.7} parent=0 // loop_exit
    _

</llo_original>
